<compile_context>
chip_gen: v7x
topology: tpu7x:2x2x1
jax: 0.10.0
libtpu: 0.0.40
codegen_flags: <defaults>
</compile_context>

<pallas_src>
import numpy as np
import jax
import jax.numpy as jnp
from jax import lax
from jax.experimental import pallas as pl
from jax.experimental.pallas import tpu as pltpu

# Small shapes consistent with the module (model dims kept, batch/seq shrunk).
B = 8          # batch (module: 50)
Z = 128        # z_size
KEY = 256      # key_size
HID = 512      # hidden_size
NCLS = 33      # y_out output dim
T = 8          # sequence length (module max_seq: 100)
MAX_SEQ = T    # memory time extent used here
Y_PAD = 128    # lane-dense padded y head width: lanes [0,33) = y logits, rest zero


def _model_kernel(x_ref, mv0_ref, mv1_ref, mk0_ref, mk1_ref,
                  wihk_ref, wihc_ref, whh_ref, brnn_ref,
                  wg_ref, whead_ref, bhead_ref, wkw_ref, bkw_ref,
                  cg_ref, cb_ref, bg_ref,
                  y_ref, kw_ref,
                  pre_ref, h_ref):
    # ---------- Prologue: input-only memory-read math, vectorized over all T ----------
    x = x_ref[...]                                                # (T, B, Z)
    s0 = jnp.sum(x * mv0_ref[...], axis=-1, keepdims=True)        # (T, B, 1)
    s1 = jnp.sum(x * mv1_ref[...], axis=-1, keepdims=True)        # (T, B, 1)

    # 2-slot softmax == single sigmoid (exact identity): w0 = e0/(e0+e1) = sigmoid(s0-s1)
    w0 = jax.nn.sigmoid(s0 - s1)
    w1 = 1.0 - w0

    # confidence
    cg = cg_ref[0, 0]
    cb = cb_ref[0, 0]
    c0 = jax.nn.sigmoid(s0 * cg + cb)
    c1 = jax.nn.sigmoid(s1 * cg + cb)

    # pre-gated memory read for every t: (cat([M_k, c], 1) * w).sum(slot)
    sk = mk0_ref[...][None, :, :] * w0 + mk1_ref[...][None, :, :] * w1   # (T, B, KEY)
    sc = c0 * w0 + c1 * w1                                               # (T, B, 1)

    # Hoisted W_ih contribution for ALL timesteps in one M=T*B matmul.
    sk_flat = sk.reshape(T * B, KEY)
    sc_flat = sc.reshape(T * B, 1)
    pre_flat = (jnp.dot(sk_flat, wihk_ref[...], preferred_element_type=jnp.float32)
                + sc_flat * wihc_ref[...])                               # (T*B, HID)
    pre_ref[...] = pre_flat.reshape(T, B, HID)

    # ---------- Serial recurrence: exactly one MXU matmul (Whh) per step ----------
    whh = whh_ref[...]        # (HID, HID)  loop-invariant
    brnn = brnn_ref[...]      # (1, HID)
    wg = wg_ref[...]          # (1, HID)
    bg = bg_ref[0, 0]
    # TODO(synk): if the Mosaic dump shows the loop-invariant Whh being re-pushed each
    # unrolled step, drive the MXU explicitly (pltpu.matmul_push_rhs once +
    # matmul_acc_lhs/matmul_pop per step) to keep it staged.

    def step(t, carry):
        h_prev, gp_prev = carry                                           # gp = g_{t-1}*pre[t-1]
        h = jnp.tanh(gp_prev
                     + jnp.dot(h_prev, whh, preferred_element_type=jnp.float32)
                     + brnn)                                              # (B, HID)
        h_ref[t] = h
        # g via VPU multiply + cross-lane reduce (no MXU round trip on the chain)
        g = jax.nn.sigmoid(jnp.sum(h * wg, axis=-1, keepdims=True) + bg)  # (B, 1)
        return h, g * pre_ref[t]

    h0 = jnp.zeros((B, HID), jnp.float32)
    gp0 = jnp.zeros((B, HID), jnp.float32)
    h_fin, _ = lax.fori_loop(0, T, step, (h0, gp0), unroll=True)

    # ---------- Epilogue: batched y head + key_w head ----------
    h_all = h_ref[...].reshape(T * B, HID)
    y_flat = (jnp.dot(h_all, whead_ref[...], preferred_element_type=jnp.float32)
              + bhead_ref[...])                                           # (T*B, Y_PAD)
    y_ref[...] = y_flat.reshape(T, B, Y_PAD)                              # lane-dense store

    kw_ref[...] = jnp.maximum(
        jnp.dot(h_fin, wkw_ref[...], preferred_element_type=jnp.float32) + bkw_ref[...],
        0.0)


def model_forward(x_seq, params, mk_data, mv_data):
    """x_seq: (B, Z, T); mk_data: (B, KEY, 2); mv_data: (B, Z, MAX_SEQ, 2)."""
    x_tm = jnp.transpose(x_seq, (2, 0, 1)).astype(jnp.float32)       # (T, B, Z)
    mv_sel = mv_data[:, :, :T, :]                                    # (B, Z, T, 2)
    mv0 = jnp.transpose(mv_sel[..., 0], (2, 0, 1))                   # (T, B, Z)
    mv1 = jnp.transpose(mv_sel[..., 1], (2, 0, 1))                   # (T, B, Z)
    mk0 = mk_data[:, :, 0]                                           # (B, KEY)
    mk1 = mk_data[:, :, 1]                                           # (B, KEY)

    # Split W_ih into key part (KEY, HID) + confidence row (1, HID): removes KEY+1 raggedness.
    wih_t = params["W_ih"].T                                         # (KEY+1, HID)
    wihk = wih_t[:KEY, :]
    wihc = wih_t[KEY:KEY + 1, :]
    whh_t = params["W_hh"].T                                         # (HID, HID)
    brnn = (params["b_ih"] + params["b_hh"]).reshape(1, HID)

    wg = params["W_g"].reshape(1, HID)
    bg = params["b_g"].reshape(1, 1)

    # Lane-dense y head: columns [0,33) = W_y, rest zero (sliced back in the wrapper).
    whead = jnp.zeros((HID, Y_PAD), jnp.float32).at[:, :NCLS].set(params["W_y"].T)
    bhead = jnp.zeros((1, Y_PAD), jnp.float32).at[0, :NCLS].set(params["b_y"])

    wkw_t = params["W_kw"].T                                         # (HID, KEY)
    bkw = params["b_kw"].reshape(1, KEY)
    cg = params["conf_gain"].reshape(1, 1)
    cb = params["conf_bias"].reshape(1, 1)

    vmem = pl.BlockSpec(memory_space=pltpu.MemorySpace.VMEM)
    smem = pl.BlockSpec(memory_space=pltpu.MemorySpace.SMEM)

    y_pad, key_w = pl.pallas_call(
        _model_kernel,
        out_shape=(jax.ShapeDtypeStruct((T, B, Y_PAD), jnp.float32),
                   jax.ShapeDtypeStruct((B, KEY), jnp.float32)),
        in_specs=[vmem] * 14 + [smem] * 3,
        out_specs=(vmem, vmem),
        scratch_shapes=[
            pltpu.VMEM((T, B, HID), jnp.float32),   # pre[t] = sk[t]@Wihk + sc[t]*Wihc
            pltpu.VMEM((T, B, HID), jnp.float32),   # h_t, consumed by the batched y head
        ],
    )(x_tm, mv0, mv1, mk0, mk1, wihk, wihc, whh_t, brnn,
      wg, whead, bhead, wkw_t, bkw, cg, cb, bg)

    y_hat = jnp.transpose(y_pad[:, :, :NCLS], (1, 2, 0))   # (B, NCLS, T) == torch.stack(y_hat, dim=2)
    return y_hat, key_w


def reference_forward(x_seq, params, mk_data, mv_data):
    """Pure-JAX mirror of the PyTorch forward, used only for validation."""
    Wih, Whh = params["W_ih"], params["W_hh"]
    bih, bhh = params["b_ih"], params["b_hh"]
    Wg, bg = params["W_g"], params["b_g"]
    Wy, by = params["W_y"], params["b_y"]
    Wkw, bkw = params["W_kw"], params["b_kw"]
    gain, bias = params["conf_gain"], params["conf_bias"]

    hidden = jnp.zeros((B, HID), jnp.float32)
    k_read = jnp.zeros((B, KEY + 1), jnp.float32)
    ys = []
    for t in range(T):
        hidden = jnp.tanh(k_read @ Wih.T + bih + hidden @ Whh.T + bhh)
        g = jax.nn.sigmoid(hidden @ Wg.T + bg)                       # (B, 1)
        ys.append(hidden @ Wy.T + by)                                # (B, NCLS)
        z = x_seq[:, :, t][:, :, None]                               # (B, Z, 1)
        s = jnp.sum(z * mv_data[:, :, t, :], axis=1)                 # (B, 2)
        w_k = jax.nn.softmax(s, axis=1)
        c_k = jax.nn.sigmoid(s * gain + bias)
        cat = jnp.concatenate([mk_data, c_k[:, None, :]], axis=1)    # (B, KEY+1, 2)
        k_read = g * jnp.sum(cat * w_k[:, None, :], axis=2)          # (B, KEY+1)
    key_w = jnp.maximum(hidden @ Wkw.T + bkw, 0.0)
    return jnp.stack(ys, axis=2), key_w


def init_params(key):
    ks = jax.random.split(key, 10)

    def unif(k, shape, fan):
        bound = 1.0 / np.sqrt(fan)
        return jax.random.uniform(k, shape, jnp.float32, -bound, bound)

    return {
        "W_ih": unif(ks[0], (HID, KEY + 1), HID),
        "W_hh": unif(ks[1], (HID, HID), HID),
        "b_ih": unif(ks[2], (HID,), HID),
        "b_hh": unif(ks[3], (HID,), HID),
        "W_g": unif(ks[4], (1, HID), HID),
        "b_g": unif(ks[5], (1,), HID),
        "W_y": unif(ks[6], (NCLS, HID), HID),
        "b_y": unif(ks[7], (NCLS,), HID),
        "W_kw": unif(ks[8], (KEY, HID), HID),
        "b_kw": unif(ks[9], (KEY,), HID),
        "conf_gain": jnp.ones((1,), jnp.float32),
        "conf_bias": jnp.zeros((1,), jnp.float32),
    }


if __name__ == "__main__":
    root = jax.random.PRNGKey(0)
    pkey, xkey, mkey, vkey = jax.random.split(root, 4)

    params = init_params(pkey)
    x_seq = jax.random.normal(xkey, (B, Z, T), jnp.float32)
    # Module zero-initializes memory and never writes it during forward; use random
    # contents here as well to exercise the full read path numerically.
    mk_data = 0.1 * jax.random.normal(mkey, (B, KEY, 2), jnp.float32)
    mv_data = 0.1 * jax.random.normal(vkey, (B, Z, MAX_SEQ, 2), jnp.float32)

    y_hat, key_w = model_forward(x_seq, params, mk_data, mv_data)
    y_hat = jax.block_until_ready(y_hat)
    key_w = jax.block_until_ready(key_w)

    y_ref, kw_ref = reference_forward(x_seq, params, mk_data, mv_data)

    assert y_hat.shape == (B, NCLS, T) and key_w.shape == (B, KEY)
    np.testing.assert_allclose(np.asarray(y_hat), np.asarray(y_ref), atol=2e-3, rtol=2e-3)
    np.testing.assert_allclose(np.asarray(key_w), np.asarray(kw_ref), atol=2e-3, rtol=2e-3)

    print("KERNEL_OK")
</pallas_src>

<mosaic_0001>
module attributes {stable_mosaic.version = 11 : i64} {
  func.func @_model_kernel(%arg0: memref<8x8x128xf32, #tpu.memory_space<vmem>>, %arg1: memref<8x8x128xf32, #tpu.memory_space<vmem>>, %arg2: memref<8x8x128xf32, #tpu.memory_space<vmem>>, %arg3: memref<8x256xf32, #tpu.memory_space<vmem>>, %arg4: memref<8x256xf32, #tpu.memory_space<vmem>>, %arg5: memref<256x512xf32, #tpu.memory_space<vmem>>, %arg6: memref<1x512xf32, #tpu.memory_space<vmem>>, %arg7: memref<512x512xf32, #tpu.memory_space<vmem>>, %arg8: memref<1x512xf32, #tpu.memory_space<vmem>>, %arg9: memref<1x512xf32, #tpu.memory_space<vmem>>, %arg10: memref<512x128xf32, #tpu.memory_space<vmem>>, %arg11: memref<1x128xf32, #tpu.memory_space<vmem>>, %arg12: memref<512x256xf32, #tpu.memory_space<vmem>>, %arg13: memref<1x256xf32, #tpu.memory_space<vmem>>, %arg14: memref<1x1xf32, #tpu.memory_space<smem>>, %arg15: memref<1x1xf32, #tpu.memory_space<smem>>, %arg16: memref<1x1xf32, #tpu.memory_space<smem>>, %arg17: memref<8x8x128xf32, #tpu.memory_space<vmem>>, %arg18: memref<8x256xf32, #tpu.memory_space<vmem>>, %arg19: memref<8x8x512xf32, #tpu.memory_space<vmem>>, %arg20: memref<8x8x512xf32, #tpu.memory_space<vmem>>) attributes {dimension_semantics = [], scalar_prefetch = 0 : i64, scratch_operands = 2 : i64, tpu.core_type = #tpu.core_type<tc>} {
    %c0 = arith.constant 0 : index
    %c0_0 = arith.constant 0 : index
    %c0_1 = arith.constant 0 : index
    %0 = vector.load %arg0[%c0, %c0_0, %c0_1] : memref<8x8x128xf32, #tpu.memory_space<vmem>>, vector<8x8x128xf32>
    %c0_2 = arith.constant 0 : index
    %c0_3 = arith.constant 0 : index
    %c0_4 = arith.constant 0 : index
    %1 = vector.load %arg1[%c0_2, %c0_3, %c0_4] : memref<8x8x128xf32, #tpu.memory_space<vmem>>, vector<8x8x128xf32>
    %2 = arith.mulf %0, %1 : vector<8x8x128xf32>
    %cst = arith.constant dense<0.000000e+00> : vector<8x8xf32>
    %3 = vector.multi_reduction <add>, %2, %cst [2] : vector<8x8x128xf32> to vector<8x8xf32>
    %4 = vector.shape_cast %3 : vector<8x8xf32> to vector<8x8x1xf32>
    %c0_5 = arith.constant 0 : index
    %c0_6 = arith.constant 0 : index
    %c0_7 = arith.constant 0 : index
    %5 = vector.load %arg2[%c0_5, %c0_6, %c0_7] : memref<8x8x128xf32, #tpu.memory_space<vmem>>, vector<8x8x128xf32>
    %6 = arith.mulf %0, %5 : vector<8x8x128xf32>
    %cst_8 = arith.constant dense<0.000000e+00> : vector<8x8xf32>
    %7 = vector.multi_reduction <add>, %6, %cst_8 [2] : vector<8x8x128xf32> to vector<8x8xf32>
    %8 = vector.shape_cast %7 : vector<8x8xf32> to vector<8x8x1xf32>
    %9 = arith.subf %4, %8 : vector<8x8x1xf32>
    %10 = arith.negf %9 : vector<8x8x1xf32>
    %11 = math.exp %10 : vector<8x8x1xf32>
    %cst_9 = arith.constant 1.000000e+00 : f32
    %12 = vector.broadcast %cst_9 : f32 to vector<8x8x1xf32>
    %13 = arith.addf %12, %11 : vector<8x8x1xf32>
    %14 = arith.divf %12, %13 : vector<8x8x1xf32>
    %cst_10 = arith.constant 1.000000e+00 : f32
    %15 = vector.broadcast %cst_10 : f32 to vector<8x8x1xf32>
    %16 = arith.subf %15, %14 : vector<8x8x1xf32>
    %c0_11 = arith.constant 0 : index
    %c0_12 = arith.constant 0 : index
    %17 = memref.load %arg14[%c0_11, %c0_12] : memref<1x1xf32, #tpu.memory_space<smem>>
    %c0_13 = arith.constant 0 : index
    %c0_14 = arith.constant 0 : index
    %18 = memref.load %arg15[%c0_13, %c0_14] : memref<1x1xf32, #tpu.memory_space<smem>>
    %19 = vector.broadcast %17 : f32 to vector<8x8x1xf32>
    %20 = arith.mulf %4, %19 : vector<8x8x1xf32>
    %21 = vector.broadcast %18 : f32 to vector<8x8x1xf32>
    %22 = arith.addf %20, %21 : vector<8x8x1xf32>
    %23 = arith.negf %22 : vector<8x8x1xf32>
    %24 = math.exp %23 : vector<8x8x1xf32>
    %cst_15 = arith.constant 1.000000e+00 : f32
    %25 = vector.broadcast %cst_15 : f32 to vector<8x8x1xf32>
    %26 = arith.addf %25, %24 : vector<8x8x1xf32>
    %27 = arith.divf %25, %26 : vector<8x8x1xf32>
    %28 = vector.broadcast %17 : f32 to vector<8x8x1xf32>
    %29 = arith.mulf %8, %28 : vector<8x8x1xf32>
    %30 = vector.broadcast %18 : f32 to vector<8x8x1xf32>
    %31 = arith.addf %29, %30 : vector<8x8x1xf32>
    %32 = arith.negf %31 : vector<8x8x1xf32>
    %33 = math.exp %32 : vector<8x8x1xf32>
    %cst_16 = arith.constant 1.000000e+00 : f32
    %34 = vector.broadcast %cst_16 : f32 to vector<8x8x1xf32>
    %35 = arith.addf %34, %33 : vector<8x8x1xf32>
    %36 = arith.divf %34, %35 : vector<8x8x1xf32>
    %c0_17 = arith.constant 0 : index
    %c0_18 = arith.constant 0 : index
    %37 = vector.load %arg3[%c0_17, %c0_18] : memref<8x256xf32, #tpu.memory_space<vmem>>, vector<8x256xf32>
    %38 = vector.shape_cast %37 : vector<8x256xf32> to vector<1x8x256xf32>
    %39 = vector.broadcast %38 : vector<1x8x256xf32> to vector<8x8x256xf32>
    %40 = vector.broadcast %14 : vector<8x8x1xf32> to vector<8x8x256xf32>
    %41 = arith.mulf %39, %40 : vector<8x8x256xf32>
    %c0_19 = arith.constant 0 : index
    %c0_20 = arith.constant 0 : index
    %42 = vector.load %arg4[%c0_19, %c0_20] : memref<8x256xf32, #tpu.memory_space<vmem>>, vector<8x256xf32>
    %43 = vector.shape_cast %42 : vector<8x256xf32> to vector<1x8x256xf32>
    %44 = vector.broadcast %43 : vector<1x8x256xf32> to vector<8x8x256xf32>
    %45 = vector.broadcast %16 : vector<8x8x1xf32> to vector<8x8x256xf32>
    %46 = arith.mulf %44, %45 : vector<8x8x256xf32>
    %47 = arith.addf %41, %46 : vector<8x8x256xf32>
    %48 = arith.mulf %27, %14 : vector<8x8x1xf32>
    %49 = arith.mulf %36, %16 : vector<8x8x1xf32>
    %50 = arith.addf %48, %49 : vector<8x8x1xf32>
    %51 = vector.shape_cast %47 : vector<8x8x256xf32> to vector<64x256xf32>
    %52 = vector.shape_cast %50 : vector<8x8x1xf32> to vector<64x1xf32>
    %c0_21 = arith.constant 0 : index
    %c0_22 = arith.constant 0 : index
    %53 = vector.load %arg5[%c0_21, %c0_22] : memref<256x512xf32, #tpu.memory_space<vmem>>, vector<256x512xf32>
    %cst_23 = arith.constant dense<0.000000e+00> : vector<64x512xf32>
    %54 = tpu.matmul %51, %53, %cst_23 {dimension_numbers = #tpu.dot_dimension_numbers<[1], [0], [0], [1], [0, 0, 1, 1], [], []>} : vector<64x256xf32>, vector<256x512xf32>, vector<64x512xf32> -> vector<64x512xf32>
    %c0_24 = arith.constant 0 : index
    %c0_25 = arith.constant 0 : index
    %55 = vector.load %arg6[%c0_24, %c0_25] : memref<1x512xf32, #tpu.memory_space<vmem>>, vector<1x512xf32>
    %56 = vector.broadcast %52 : vector<64x1xf32> to vector<64x512xf32>
    %57 = vector.broadcast %55 : vector<1x512xf32> to vector<64x512xf32>
    %58 = arith.mulf %56, %57 : vector<64x512xf32>
    %59 = arith.addf %54, %58 : vector<64x512xf32>
    %60 = vector.shape_cast %59 : vector<64x512xf32> to vector<8x8x512xf32>
    %c0_26 = arith.constant 0 : index
    %c0_27 = arith.constant 0 : index
    %c0_28 = arith.constant 0 : index
    %61 = vector.load %arg19[%c0_26, %c0_27, %c0_28] : memref<8x8x512xf32, #tpu.memory_space<vmem>>, vector<8x8x512xf32>
    tpu.vector_store %arg19[%c0_26, %c0_27, %c0_28], %60 {strides = array<i32>} : memref<8x8x512xf32, #tpu.memory_space<vmem>>, vector<8x8x512xf32>,
    %c0_29 = arith.constant 0 : index
    %c0_30 = arith.constant 0 : index
    %62 = vector.load %arg7[%c0_29, %c0_30] : memref<512x512xf32, #tpu.memory_space<vmem>>, vector<512x512xf32>
    %c0_31 = arith.constant 0 : index
    %c0_32 = arith.constant 0 : index
    %63 = vector.load %arg8[%c0_31, %c0_32] : memref<1x512xf32, #tpu.memory_space<vmem>>, vector<1x512xf32>
    %c0_33 = arith.constant 0 : index
    %c0_34 = arith.constant 0 : index
    %64 = vector.load %arg9[%c0_33, %c0_34] : memref<1x512xf32, #tpu.memory_space<vmem>>, vector<1x512xf32>
    %c0_35 = arith.constant 0 : index
    %c0_36 = arith.constant 0 : index
    %65 = memref.load %arg16[%c0_35, %c0_36] : memref<1x1xf32, #tpu.memory_space<smem>>
    %cst_37 = arith.constant 0.000000e+00 : f32
    %66 = vector.broadcast %cst_37 : f32 to vector<8x512xf32>
    %cst_38 = arith.constant 0.000000e+00 : f32
    %67 = vector.broadcast %cst_38 : f32 to vector<8x512xf32>
    %c0_i32 = arith.constant 0 : i32
    %cst_39 = arith.constant dense<0.000000e+00> : vector<8x512xf32>
    %68 = tpu.matmul %66, %62, %cst_39 {dimension_numbers = #tpu.dot_dimension_numbers<[1], [0], [0], [1], [0, 0, 1, 1], [], []>} : vector<8x512xf32>, vector<512x512xf32>, vector<8x512xf32> -> vector<8x512xf32>
    %69 = arith.addf %67, %68 : vector<8x512xf32>
    %70 = vector.broadcast %63 : vector<1x512xf32> to vector<8x512xf32>
    %71 = arith.addf %69, %70 : vector<8x512xf32>
    %72 = math.tanh %71 : vector<8x512xf32>
    %73 = arith.index_cast %c0_i32 : i32 to index
    %c0_40 = arith.constant 0 : index
    %c0_41 = arith.constant 0 : index
    %74 = vector.load %arg20[%73, %c0_40, %c0_41] : memref<8x8x512xf32, #tpu.memory_space<vmem>>, vector<1x8x512xf32>
    %75 = vector.shape_cast %74 : vector<1x8x512xf32> to vector<8x512xf32>
    %76 = vector.shape_cast %72 : vector<8x512xf32> to vector<1x8x512xf32>
    tpu.vector_store %arg20[%73, %c0_40, %c0_41], %76 {strides = array<i32>} : memref<8x8x512xf32, #tpu.memory_space<vmem>>, vector<1x8x512xf32>,
    %77 = vector.broadcast %64 : vector<1x512xf32> to vector<8x512xf32>
    %78 = arith.mulf %72, %77 : vector<8x512xf32>
    %cst_42 = arith.constant dense<0.000000e+00> : vector<8xf32>
    %79 = vector.multi_reduction <add>, %78, %cst_42 [1] : vector<8x512xf32> to vector<8xf32>
    %80 = vector.shape_cast %79 : vector<8xf32> to vector<8x1xf32>
    %81 = vector.broadcast %65 : f32 to vector<8x1xf32>
    %82 = arith.addf %80, %81 : vector<8x1xf32>
    %83 = arith.negf %82 : vector<8x1xf32>
    %84 = math.exp %83 : vector<8x1xf32>
    %cst_43 = arith.constant 1.000000e+00 : f32
    %85 = vector.broadcast %cst_43 : f32 to vector<8x1xf32>
    %86 = arith.addf %85, %84 : vector<8x1xf32>
    %87 = arith.divf %85, %86 : vector<8x1xf32>
    %88 = arith.index_cast %c0_i32 : i32 to index
    %c0_44 = arith.constant 0 : index
    %c0_45 = arith.constant 0 : index
    %89 = vector.load %arg19[%88, %c0_44, %c0_45] : memref<8x8x512xf32, #tpu.memory_space<vmem>>, vector<1x8x512xf32>
    %90 = vector.shape_cast %89 : vector<1x8x512xf32> to vector<8x512xf32>
    %91 = vector.broadcast %87 : vector<8x1xf32> to vector<8x512xf32>
    %92 = arith.mulf %91, %90 : vector<8x512xf32>
    %c1_i32 = arith.constant 1 : i32
    %cst_46 = arith.constant dense<0.000000e+00> : vector<8x512xf32>
    %93 = tpu.matmul %72, %62, %cst_46 {dimension_numbers = #tpu.dot_dimension_numbers<[1], [0], [0], [1], [0, 0, 1, 1], [], []>} : vector<8x512xf32>, vector<512x512xf32>, vector<8x512xf32> -> vector<8x512xf32>
    %94 = arith.addf %92, %93 : vector<8x512xf32>
    %95 = vector.broadcast %63 : vector<1x512xf32> to vector<8x512xf32>
    %96 = arith.addf %94, %95 : vector<8x512xf32>
    %97 = math.tanh %96 : vector<8x512xf32>
    %98 = arith.index_cast %c1_i32 : i32 to index
    %c0_47 = arith.constant 0 : index
    %c0_48 = arith.constant 0 : index
    %99 = vector.load %arg20[%98, %c0_47, %c0_48] : memref<8x8x512xf32, #tpu.memory_space<vmem>>, vector<1x8x512xf32>
    %100 = vector.shape_cast %99 : vector<1x8x512xf32> to vector<8x512xf32>
    %101 = vector.shape_cast %97 : vector<8x512xf32> to vector<1x8x512xf32>
    tpu.vector_store %arg20[%98, %c0_47, %c0_48], %101 {strides = array<i32>} : memref<8x8x512xf32, #tpu.memory_space<vmem>>, vector<1x8x512xf32>,
    %102 = vector.broadcast %64 : vector<1x512xf32> to vector<8x512xf32>
    %103 = arith.mulf %97, %102 : vector<8x512xf32>
    %cst_49 = arith.constant dense<0.000000e+00> : vector<8xf32>
    %104 = vector.multi_reduction <add>, %103, %cst_49 [1] : vector<8x512xf32> to vector<8xf32>
    %105 = vector.shape_cast %104 : vector<8xf32> to vector<8x1xf32>
    %106 = vector.broadcast %65 : f32 to vector<8x1xf32>
    %107 = arith.addf %105, %106 : vector<8x1xf32>
    %108 = arith.negf %107 : vector<8x1xf32>
    %109 = math.exp %108 : vector<8x1xf32>
    %cst_50 = arith.constant 1.000000e+00 : f32
    %110 = vector.broadcast %cst_50 : f32 to vector<8x1xf32>
    %111 = arith.addf %110, %109 : vector<8x1xf32>
    %112 = arith.divf %110, %111 : vector<8x1xf32>
    %113 = arith.index_cast %c1_i32 : i32 to index
    %c0_51 = arith.constant 0 : index
    %c0_52 = arith.constant 0 : index
    %114 = vector.load %arg19[%113, %c0_51, %c0_52] : memref<8x8x512xf32, #tpu.memory_space<vmem>>, vector<1x8x512xf32>
    %115 = vector.shape_cast %114 : vector<1x8x512xf32> to vector<8x512xf32>
    %116 = vector.broadcast %112 : vector<8x1xf32> to vector<8x512xf32>
    %117 = arith.mulf %116, %115 : vector<8x512xf32>
    %c2_i32 = arith.constant 2 : i32
    %cst_53 = arith.constant dense<0.000000e+00> : vector<8x512xf32>
    %118 = tpu.matmul %97, %62, %cst_53 {dimension_numbers = #tpu.dot_dimension_numbers<[1], [0], [0], [1], [0, 0, 1, 1], [], []>} : vector<8x512xf32>, vector<512x512xf32>, vector<8x512xf32> -> vector<8x512xf32>
    %119 = arith.addf %117, %118 : vector<8x512xf32>
    %120 = vector.broadcast %63 : vector<1x512xf32> to vector<8x512xf32>
    %121 = arith.addf %119, %120 : vector<8x512xf32>
    %122 = math.tanh %121 : vector<8x512xf32>
    %123 = arith.index_cast %c2_i32 : i32 to index
    %c0_54 = arith.constant 0 : index
    %c0_55 = arith.constant 0 : index
    %124 = vector.load %arg20[%123, %c0_54, %c0_55] : memref<8x8x512xf32, #tpu.memory_space<vmem>>, vector<1x8x512xf32>
    %125 = vector.shape_cast %124 : vector<1x8x512xf32> to vector<8x512xf32>
    %126 = vector.shape_cast %122 : vector<8x512xf32> to vector<1x8x512xf32>
    tpu.vector_store %arg20[%123, %c0_54, %c0_55], %126 {strides = array<i32>} : memref<8x8x512xf32, #tpu.memory_space<vmem>>, vector<1x8x512xf32>,
    %127 = vector.broadcast %64 : vector<1x512xf32> to vector<8x512xf32>
    %128 = arith.mulf %122, %127 : vector<8x512xf32>
    %cst_56 = arith.constant dense<0.000000e+00> : vector<8xf32>
    %129 = vector.multi_reduction <add>, %128, %cst_56 [1] : vector<8x512xf32> to vector<8xf32>
    %130 = vector.shape_cast %129 : vector<8xf32> to vector<8x1xf32>
    %131 = vector.broadcast %65 : f32 to vector<8x1xf32>
    %132 = arith.addf %130, %131 : vector<8x1xf32>
    %133 = arith.negf %132 : vector<8x1xf32>
    %134 = math.exp %133 : vector<8x1xf32>
    %cst_57 = arith.constant 1.000000e+00 : f32
    %135 = vector.broadcast %cst_57 : f32 to vector<8x1xf32>
    %136 = arith.addf %135, %134 : vector<8x1xf32>
    %137 = arith.divf %135, %136 : vector<8x1xf32>
    %138 = arith.index_cast %c2_i32 : i32 to index
    %c0_58 = arith.constant 0 : index
    %c0_59 = arith.constant 0 : index
    %139 = vector.load %arg19[%138, %c0_58, %c0_59] : memref<8x8x512xf32, #tpu.memory_space<vmem>>, vector<1x8x512xf32>
    %140 = vector.shape_cast %139 : vector<1x8x512xf32> to vector<8x512xf32>
    %141 = vector.broadcast %137 : vector<8x1xf32> to vector<8x512xf32>
    %142 = arith.mulf %141, %140 : vector<8x512xf32>
    %c3_i32 = arith.constant 3 : i32
    %cst_60 = arith.constant dense<0.000000e+00> : vector<8x512xf32>
    %143 = tpu.matmul %122, %62, %cst_60 {dimension_numbers = #tpu.dot_dimension_numbers<[1], [0], [0], [1], [0, 0, 1, 1], [], []>} : vector<8x512xf32>, vector<512x512xf32>, vector<8x512xf32> -> vector<8x512xf32>
    %144 = arith.addf %142, %143 : vector<8x512xf32>
    %145 = vector.broadcast %63 : vector<1x512xf32> to vector<8x512xf32>
    %146 = arith.addf %144, %145 : vector<8x512xf32>
    %147 = math.tanh %146 : vector<8x512xf32>
    %148 = arith.index_cast %c3_i32 : i32 to index
    %c0_61 = arith.constant 0 : index
    %c0_62 = arith.constant 0 : index
    %149 = vector.load %arg20[%148, %c0_61, %c0_62] : memref<8x8x512xf32, #tpu.memory_space<vmem>>, vector<1x8x512xf32>
    %150 = vector.shape_cast %149 : vector<1x8x512xf32> to vector<8x512xf32>
    %151 = vector.shape_cast %147 : vector<8x512xf32> to vector<1x8x512xf32>
    tpu.vector_store %arg20[%148, %c0_61, %c0_62], %151 {strides = array<i32>} : memref<8x8x512xf32, #tpu.memory_space<vmem>>, vector<1x8x512xf32>,
    %152 = vector.broadcast %64 : vector<1x512xf32> to vector<8x512xf32>
    %153 = arith.mulf %147, %152 : vector<8x512xf32>
    %cst_63 = arith.constant dense<0.000000e+00> : vector<8xf32>
    %154 = vector.multi_reduction <add>, %153, %cst_63 [1] : vector<8x512xf32> to vector<8xf32>
    %155 = vector.shape_cast %154 : vector<8xf32> to vector<8x1xf32>
    %156 = vector.broadcast %65 : f32 to vector<8x1xf32>
    %157 = arith.addf %155, %156 : vector<8x1xf32>
    %158 = arith.negf %157 : vector<8x1xf32>
    %159 = math.exp %158 : vector<8x1xf32>
    %cst_64 = arith.constant 1.000000e+00 : f32
    %160 = vector.broadcast %cst_64 : f32 to vector<8x1xf32>
    %161 = arith.addf %160, %159 : vector<8x1xf32>
    %162 = arith.divf %160, %161 : vector<8x1xf32>
    %163 = arith.index_cast %c3_i32 : i32 to index
    %c0_65 = arith.constant 0 : index
    %c0_66 = arith.constant 0 : index
    %164 = vector.load %arg19[%163, %c0_65, %c0_66] : memref<8x8x512xf32, #tpu.memory_space<vmem>>, vector<1x8x512xf32>
    %165 = vector.shape_cast %164 : vector<1x8x512xf32> to vector<8x512xf32>
    %166 = vector.broadcast %162 : vector<8x1xf32> to vector<8x512xf32>
    %167 = arith.mulf %166, %165 : vector<8x512xf32>
    %c4_i32 = arith.constant 4 : i32
    %cst_67 = arith.constant dense<0.000000e+00> : vector<8x512xf32>
    %168 = tpu.matmul %147, %62, %cst_67 {dimension_numbers = #tpu.dot_dimension_numbers<[1], [0], [0], [1], [0, 0, 1, 1], [], []>} : vector<8x512xf32>, vector<512x512xf32>, vector<8x512xf32> -> vector<8x512xf32>
    %169 = arith.addf %167, %168 : vector<8x512xf32>
    %170 = vector.broadcast %63 : vector<1x512xf32> to vector<8x512xf32>
    %171 = arith.addf %169, %170 : vector<8x512xf32>
    %172 = math.tanh %171 : vector<8x512xf32>
    %173 = arith.index_cast %c4_i32 : i32 to index
    %c0_68 = arith.constant 0 : index
    %c0_69 = arith.constant 0 : index
    %174 = vector.load %arg20[%173, %c0_68, %c0_69] : memref<8x8x512xf32, #tpu.memory_space<vmem>>, vector<1x8x512xf32>
    %175 = vector.shape_cast %174 : vector<1x8x512xf32> to vector<8x512xf32>
    %176 = vector.shape_cast %172 : vector<8x512xf32> to vector<1x8x512xf32>
    tpu.vector_store %arg20[%173, %c0_68, %c0_69], %176 {strides = array<i32>} : memref<8x8x512xf32, #tpu.memory_space<vmem>>, vector<1x8x512xf32>,
    %177 = vector.broadcast %64 : vector<1x512xf32> to vector<8x512xf32>
    %178 = arith.mulf %172, %177 : vector<8x512xf32>
    %cst_70 = arith.constant dense<0.000000e+00> : vector<8xf32>
    %179 = vector.multi_reduction <add>, %178, %cst_70 [1] : vector<8x512xf32> to vector<8xf32>
    %180 = vector.shape_cast %179 : vector<8xf32> to vector<8x1xf32>
    %181 = vector.broadcast %65 : f32 to vector<8x1xf32>
    %182 = arith.addf %180, %181 : vector<8x1xf32>
    %183 = arith.negf %182 : vector<8x1xf32>
    %184 = math.exp %183 : vector<8x1xf32>
    %cst_71 = arith.constant 1.000000e+00 : f32
    %185 = vector.broadcast %cst_71 : f32 to vector<8x1xf32>
    %186 = arith.addf %185, %184 : vector<8x1xf32>
    %187 = arith.divf %185, %186 : vector<8x1xf32>
    %188 = arith.index_cast %c4_i32 : i32 to index
    %c0_72 = arith.constant 0 : index
    %c0_73 = arith.constant 0 : index
    %189 = vector.load %arg19[%188, %c0_72, %c0_73] : memref<8x8x512xf32, #tpu.memory_space<vmem>>, vector<1x8x512xf32>
    %190 = vector.shape_cast %189 : vector<1x8x512xf32> to vector<8x512xf32>
    %191 = vector.broadcast %187 : vector<8x1xf32> to vector<8x512xf32>
    %192 = arith.mulf %191, %190 : vector<8x512xf32>
    %c5_i32 = arith.constant 5 : i32
    %cst_74 = arith.constant dense<0.000000e+00> : vector<8x512xf32>
    %193 = tpu.matmul %172, %62, %cst_74 {dimension_numbers = #tpu.dot_dimension_numbers<[1], [0], [0], [1], [0, 0, 1, 1], [], []>} : vector<8x512xf32>, vector<512x512xf32>, vector<8x512xf32> -> vector<8x512xf32>
    %194 = arith.addf %192, %193 : vector<8x512xf32>
    %195 = vector.broadcast %63 : vector<1x512xf32> to vector<8x512xf32>
    %196 = arith.addf %194, %195 : vector<8x512xf32>
    %197 = math.tanh %196 : vector<8x512xf32>
    %198 = arith.index_cast %c5_i32 : i32 to index
    %c0_75 = arith.constant 0 : index
    %c0_76 = arith.constant 0 : index
    %199 = vector.load %arg20[%198, %c0_75, %c0_76] : memref<8x8x512xf32, #tpu.memory_space<vmem>>, vector<1x8x512xf32>
    %200 = vector.shape_cast %199 : vector<1x8x512xf32> to vector<8x512xf32>
    %201 = vector.shape_cast %197 : vector<8x512xf32> to vector<1x8x512xf32>
    tpu.vector_store %arg20[%198, %c0_75, %c0_76], %201 {strides = array<i32>} : memref<8x8x512xf32, #tpu.memory_space<vmem>>, vector<1x8x512xf32>,
    %202 = vector.broadcast %64 : vector<1x512xf32> to vector<8x512xf32>
    %203 = arith.mulf %197, %202 : vector<8x512xf32>
    %cst_77 = arith.constant dense<0.000000e+00> : vector<8xf32>
    %204 = vector.multi_reduction <add>, %203, %cst_77 [1] : vector<8x512xf32> to vector<8xf32>
    %205 = vector.shape_cast %204 : vector<8xf32> to vector<8x1xf32>
    %206 = vector.broadcast %65 : f32 to vector<8x1xf32>
    %207 = arith.addf %205, %206 : vector<8x1xf32>
    %208 = arith.negf %207 : vector<8x1xf32>
    %209 = math.exp %208 : vector<8x1xf32>
    %cst_78 = arith.constant 1.000000e+00 : f32
    %210 = vector.broadcast %cst_78 : f32 to vector<8x1xf32>
    %211 = arith.addf %210, %209 : vector<8x1xf32>
    %212 = arith.divf %210, %211 : vector<8x1xf32>
    %213 = arith.index_cast %c5_i32 : i32 to index
    %c0_79 = arith.constant 0 : index
    %c0_80 = arith.constant 0 : index
    %214 = vector.load %arg19[%213, %c0_79, %c0_80] : memref<8x8x512xf32, #tpu.memory_space<vmem>>, vector<1x8x512xf32>
    %215 = vector.shape_cast %214 : vector<1x8x512xf32> to vector<8x512xf32>
    %216 = vector.broadcast %212 : vector<8x1xf32> to vector<8x512xf32>
    %217 = arith.mulf %216, %215 : vector<8x512xf32>
    %c6_i32 = arith.constant 6 : i32
    %cst_81 = arith.constant dense<0.000000e+00> : vector<8x512xf32>
    %218 = tpu.matmul %197, %62, %cst_81 {dimension_numbers = #tpu.dot_dimension_numbers<[1], [0], [0], [1], [0, 0, 1, 1], [], []>} : vector<8x512xf32>, vector<512x512xf32>, vector<8x512xf32> -> vector<8x512xf32>
    %219 = arith.addf %217, %218 : vector<8x512xf32>
    %220 = vector.broadcast %63 : vector<1x512xf32> to vector<8x512xf32>
    %221 = arith.addf %219, %220 : vector<8x512xf32>
    %222 = math.tanh %221 : vector<8x512xf32>
    %223 = arith.index_cast %c6_i32 : i32 to index
    %c0_82 = arith.constant 0 : index
    %c0_83 = arith.constant 0 : index
    %224 = vector.load %arg20[%223, %c0_82, %c0_83] : memref<8x8x512xf32, #tpu.memory_space<vmem>>, vector<1x8x512xf32>
    %225 = vector.shape_cast %224 : vector<1x8x512xf32> to vector<8x512xf32>
    %226 = vector.shape_cast %222 : vector<8x512xf32> to vector<1x8x512xf32>
    tpu.vector_store %arg20[%223, %c0_82, %c0_83], %226 {strides = array<i32>} : memref<8x8x512xf32, #tpu.memory_space<vmem>>, vector<1x8x512xf32>,
    %227 = vector.broadcast %64 : vector<1x512xf32> to vector<8x512xf32>
    %228 = arith.mulf %222, %227 : vector<8x512xf32>
    %cst_84 = arith.constant dense<0.000000e+00> : vector<8xf32>
    %229 = vector.multi_reduction <add>, %228, %cst_84 [1] : vector<8x512xf32> to vector<8xf32>
    %230 = vector.shape_cast %229 : vector<8xf32> to vector<8x1xf32>
    %231 = vector.broadcast %65 : f32 to vector<8x1xf32>
    %232 = arith.addf %230, %231 : vector<8x1xf32>
    %233 = arith.negf %232 : vector<8x1xf32>
    %234 = math.exp %233 : vector<8x1xf32>
    %cst_85 = arith.constant 1.000000e+00 : f32
    %235 = vector.broadcast %cst_85 : f32 to vector<8x1xf32>
    %236 = arith.addf %235, %234 : vector<8x1xf32>
    %237 = arith.divf %235, %236 : vector<8x1xf32>
    %238 = arith.index_cast %c6_i32 : i32 to index
    %c0_86 = arith.constant 0 : index
    %c0_87 = arith.constant 0 : index
    %239 = vector.load %arg19[%238, %c0_86, %c0_87] : memref<8x8x512xf32, #tpu.memory_space<vmem>>, vector<1x8x512xf32>
    %240 = vector.shape_cast %239 : vector<1x8x512xf32> to vector<8x512xf32>
    %241 = vector.broadcast %237 : vector<8x1xf32> to vector<8x512xf32>
    %242 = arith.mulf %241, %240 : vector<8x512xf32>
    %c7_i32 = arith.constant 7 : i32
    %cst_88 = arith.constant dense<0.000000e+00> : vector<8x512xf32>
    %243 = tpu.matmul %222, %62, %cst_88 {dimension_numbers = #tpu.dot_dimension_numbers<[1], [0], [0], [1], [0, 0, 1, 1], [], []>} : vector<8x512xf32>, vector<512x512xf32>, vector<8x512xf32> -> vector<8x512xf32>
    %244 = arith.addf %242, %243 : vector<8x512xf32>
    %245 = vector.broadcast %63 : vector<1x512xf32> to vector<8x512xf32>
    %246 = arith.addf %244, %245 : vector<8x512xf32>
    %247 = math.tanh %246 : vector<8x512xf32>
    %248 = arith.index_cast %c7_i32 : i32 to index
    %c0_89 = arith.constant 0 : index
    %c0_90 = arith.constant 0 : index
    %249 = vector.load %arg20[%248, %c0_89, %c0_90] : memref<8x8x512xf32, #tpu.memory_space<vmem>>, vector<1x8x512xf32>
    %250 = vector.shape_cast %249 : vector<1x8x512xf32> to vector<8x512xf32>
    %251 = vector.shape_cast %247 : vector<8x512xf32> to vector<1x8x512xf32>
    tpu.vector_store %arg20[%248, %c0_89, %c0_90], %251 {strides = array<i32>} : memref<8x8x512xf32, #tpu.memory_space<vmem>>, vector<1x8x512xf32>,
    %252 = vector.broadcast %64 : vector<1x512xf32> to vector<8x512xf32>
    %253 = arith.mulf %247, %252 : vector<8x512xf32>
    %cst_91 = arith.constant dense<0.000000e+00> : vector<8xf32>
    %254 = vector.multi_reduction <add>, %253, %cst_91 [1] : vector<8x512xf32> to vector<8xf32>
    %255 = vector.shape_cast %254 : vector<8xf32> to vector<8x1xf32>
    %256 = vector.broadcast %65 : f32 to vector<8x1xf32>
    %257 = arith.addf %255, %256 : vector<8x1xf32>
    %258 = arith.negf %257 : vector<8x1xf32>
    %259 = math.exp %258 : vector<8x1xf32>
    %cst_92 = arith.constant 1.000000e+00 : f32
    %260 = vector.broadcast %cst_92 : f32 to vector<8x1xf32>
    %261 = arith.addf %260, %259 : vector<8x1xf32>
    %262 = arith.divf %260, %261 : vector<8x1xf32>
    %263 = arith.index_cast %c7_i32 : i32 to index
    %c0_93 = arith.constant 0 : index
    %c0_94 = arith.constant 0 : index
    %264 = vector.load %arg19[%263, %c0_93, %c0_94] : memref<8x8x512xf32, #tpu.memory_space<vmem>>, vector<1x8x512xf32>
    %265 = vector.shape_cast %264 : vector<1x8x512xf32> to vector<8x512xf32>
    %266 = vector.broadcast %262 : vector<8x1xf32> to vector<8x512xf32>
    %267 = arith.mulf %266, %265 : vector<8x512xf32>
    %c8_i32 = arith.constant 8 : i32
    %c0_95 = arith.constant 0 : index
    %c0_96 = arith.constant 0 : index
    %c0_97 = arith.constant 0 : index
    %268 = vector.load %arg20[%c0_95, %c0_96, %c0_97] : memref<8x8x512xf32, #tpu.memory_space<vmem>>, vector<8x8x512xf32>
    %269 = vector.shape_cast %268 : vector<8x8x512xf32> to vector<64x512xf32>
    %c0_98 = arith.constant 0 : index
    %c0_99 = arith.constant 0 : index
    %270 = vector.load %arg10[%c0_98, %c0_99] : memref<512x128xf32, #tpu.memory_space<vmem>>, vector<512x128xf32>
    %cst_100 = arith.constant dense<0.000000e+00> : vector<64x128xf32>
    %271 = tpu.matmul %269, %270, %cst_100 {dimension_numbers = #tpu.dot_dimension_numbers<[1], [0], [0], [1], [0, 0, 1, 1], [], []>} : vector<64x512xf32>, vector<512x128xf32>, vector<64x128xf32> -> vector<64x128xf32>
    %c0_101 = arith.constant 0 : index
    %c0_102 = arith.constant 0 : index
    %272 = vector.load %arg11[%c0_101, %c0_102] : memref<1x128xf32, #tpu.memory_space<vmem>>, vector<1x128xf32>
    %273 = vector.broadcast %272 : vector<1x128xf32> to vector<64x128xf32>
    %274 = arith.addf %271, %273 : vector<64x128xf32>
    %275 = vector.shape_cast %274 : vector<64x128xf32> to vector<8x8x128xf32>
    %c0_103 = arith.constant 0 : index
    %c0_104 = arith.constant 0 : index
    %c0_105 = arith.constant 0 : index
    %276 = vector.load %arg17[%c0_103, %c0_104, %c0_105] : memref<8x8x128xf32, #tpu.memory_space<vmem>>, vector<8x8x128xf32>
    tpu.vector_store %arg17[%c0_103, %c0_104, %c0_105], %275 {strides = array<i32>} : memref<8x8x128xf32, #tpu.memory_space<vmem>>, vector<8x8x128xf32>,
    %c0_106 = arith.constant 0 : index
    %c0_107 = arith.constant 0 : index
    %277 = vector.load %arg12[%c0_106, %c0_107] : memref<512x256xf32, #tpu.memory_space<vmem>>, vector<512x256xf32>
    %cst_108 = arith.constant dense<0.000000e+00> : vector<8x256xf32>
    %278 = tpu.matmul %247, %277, %cst_108 {dimension_numbers = #tpu.dot_dimension_numbers<[1], [0], [0], [1], [0, 0, 1, 1], [], []>} : vector<8x512xf32>, vector<512x256xf32>, vector<8x256xf32> -> vector<8x256xf32>
    %c0_109 = arith.constant 0 : index
    %c0_110 = arith.constant 0 : index
    %279 = vector.load %arg13[%c0_109, %c0_110] : memref<1x256xf32, #tpu.memory_space<vmem>>, vector<1x256xf32>
    %280 = vector.broadcast %279 : vector<1x256xf32> to vector<8x256xf32>
    %281 = arith.addf %278, %280 : vector<8x256xf32>
    %cst_111 = arith.constant 0.000000e+00 : f32
    %282 = vector.broadcast %cst_111 : f32 to vector<8x256xf32>
    %283 = arith.maximumf %281, %282 : vector<8x256xf32>
    %c0_112 = arith.constant 0 : index
    %c0_113 = arith.constant 0 : index
    %284 = vector.load %arg18[%c0_112, %c0_113] : memref<8x256xf32, #tpu.memory_space<vmem>>, vector<8x256xf32>
    tpu.vector_store %arg18[%c0_112, %c0_113], %283 {strides = array<i32>} : memref<8x256xf32, #tpu.memory_space<vmem>>, vector<8x256xf32>,
    return
  }
}

</mosaic_0001>

<llo_original>
// kernel: tpu_custom_call.1
$region0: #{tpu_custom_call.1}
  #allocation0 [shape = 'u32[]', space=smem, size = 0x4, offset = 0x4, fixed_abs, tag = 'smem constant byte address 0x4 - core index']
  #allocation1 [shape = 'u32[144,128]{1,0:T(1,128)}', space=vmem, size = 0x12000, scoped, tag = 'internal scratch']
  #allocation2 [shape = 'f32[8,8,512]{2,1,0:T(8,128)}', space=vmem, size = 0x20000, scoped, tag = 'scratch operand']
  #allocation3 [shape = 'f32[8,8,512]{2,1,0:T(8,128)}', space=vmem, size = 0x20000, scoped, tag = 'scratch operand']
  #allocation4 [shape = 'f32[1,1]{1,0:T(1,128)S(6)}', space=smem, size = 0x200, scoped, tag = 'scoped memory for tpu_custom_call.1']
  #allocation5 [shape = 'f32[1,1]{1,0:T(1,128)S(6)}', space=smem, size = 0x200, scoped, tag = 'scoped memory for tpu_custom_call.1']
  #allocation6 [shape = 'f32[1,1]{1,0:T(1,128)S(6)}', space=smem, size = 0x200, scoped, tag = 'scoped memory for tpu_custom_call.1']
  %s0 = inlined_call_operand.hbm [shape: f32[8,8,128], index: 0, kind: input, shape index: {}]
  %s1 = inlined_call_operand.hbm [shape: f32[8,8,128], index: 1, kind: input, shape index: {}]
  %s2 = inlined_call_operand.hbm [shape: f32[8,8,128], index: 2, kind: input, shape index: {}]
  %s3 = inlined_call_operand.vmem [shape: f32[8,256], index: 3, kind: input, shape index: {}]
  %s4 = inlined_call_operand.hbm [shape: f32[8,256], index: 4, kind: input, shape index: {}]
  %s5 = inlined_call_operand.hbm [shape: f32[256,512], index: 5, kind: input, shape index: {}]
  %s6 = inlined_call_operand.vmem [shape: f32[1,512], index: 6, kind: input, shape index: {}]
  %s7 = inlined_call_operand.hbm [shape: f32[512,512], index: 7, kind: input, shape index: {}]
  %s8 = inlined_call_operand.vmem [shape: f32[1,512], index: 8, kind: input, shape index: {}]
  %s9 = inlined_call_operand.vmem [shape: f32[1,512], index: 9, kind: input, shape index: {}]
  %s10 = inlined_call_operand.hbm [shape: f32[512,128], index: 10, kind: input, shape index: {}]
  %s11 = inlined_call_operand.vmem [shape: f32[1,128], index: 11, kind: input, shape index: {}]
  %s12 = inlined_call_operand.hbm [shape: f32[512,256], index: 12, kind: input, shape index: {}]
  %s13 = inlined_call_operand.vmem [shape: f32[1,256], index: 13, kind: input, shape index: {}]
  %s14 = inlined_call_operand.<no memory space> [shape: f32[1,1], index: 14, kind: input, shape index: {}]
  %s15 = inlined_call_operand.<no memory space> [shape: f32[1,1], index: 15, kind: input, shape index: {}]
  %s16 = inlined_call_operand.<no memory space> [shape: f32[1,1], index: 16, kind: input, shape index: {}]
  %s17 = inlined_call_operand.hbm [shape: f32[8,8,128], index: 17, kind: output, shape index: {0}]
  %s18 = inlined_call_operand.hbm [shape: f32[8,256], index: 18, kind: output, shape index: {1}]
  %19 = xla_tuple %s17, %s18
  %s20 = sld [smem:[#allocation0]]
  $region118: #{tpu_custom_call.1} parent=0
    _
  %s22 = ssub.s32 1, %s20
  %s23 = scalar_select 0, %s22, %s20
  %24 = sst [smem:[#allocation4]] %s14
  %25 = sst [smem:[#allocation5]] %s15
  %26 = sst [smem:[#allocation6]] %s16
  $region1: #{tpu_custom_call.1} parent=0
    #allocation7 [shape = 'u8[32768]{0}', space=vmem, size = 0x8000, scoped, tag = 'input window, operand 0, single buffered']
    #allocation8 [shape = 's32[1]{0}', space=sflag, size = 0x4, scoped, tag = 'scoped memory for tpu_custom_call.1']
    #allocation9 [shape = 's32[1]{0}', space=sflag, size = 0x4, scoped, tag = 'scoped memory for tpu_custom_call.1']
    #allocation10 [shape = 'u8[32768]{0}', space=vmem, size = 0x8000, scoped, tag = 'input window, operand 1, single buffered']
    #allocation11 [shape = 's32[1]{0}', space=sflag, size = 0x4, scoped, tag = 'scoped memory for tpu_custom_call.1']
    #allocation12 [shape = 'u8[32768]{0}', space=vmem, size = 0x8000, scoped, tag = 'input window, operand 2, single buffered']
    #allocation13 [shape = 'u8[8192]{0}', space=vmem, size = 0x2000, scoped, tag = 'input window, operand 4, single buffered']
    #allocation14 [shape = 's32[1]{0}', space=sflag, size = 0x4, scoped, tag = 'scoped memory for tpu_custom_call.1']
    #allocation15 [shape = 'u8[524288]{0}', space=vmem, size = 0x80000, scoped, tag = 'input window, operand 5, single buffered']
    #allocation16 [shape = 'u8[1048576]{0}', space=vmem, size = 0x100000, scoped, tag = 'input window, operand 7, single buffered']
    #allocation17 [shape = 's32[1]{0}', space=sflag, size = 0x4, scoped, tag = 'scoped memory for tpu_custom_call.1']
    #allocation18 [shape = 'u8[262144]{0}', space=vmem, size = 0x40000, scoped, tag = 'input window, operand 10, single buffered']
    #allocation19 [shape = 'u8[524288]{0}', space=vmem, size = 0x80000, scoped, tag = 'input window, operand 12, single buffered']
    #allocation20 [shape = 's32[1]{0}', space=sflag, size = 0x4, scoped, tag = 'scoped memory for tpu_custom_call.1']
    #allocation21 [shape = 'u8[32768]{0}', space=vmem, size = 0x8000, scoped, tag = 'output window, operand 0, single buffered']
    #allocation22 [shape = 'u8[8192]{0}', space=vmem, size = 0x2000, scoped, tag = 'output window, operand 1, single buffered']
    #allocation23 [shape = 's32[1]{0}', space=sflag, size = 0x4, scoped, tag = 'scoped memory for tpu_custom_call.1']
    %27 = vsyncpa [#allocation8], 0
    %28 = vsyncpa [#allocation11], 0
    %29 = vsyncpa [#allocation14], 0
    %30 = vsyncpa [#allocation17], 0
    %31 = vsyncpa [#allocation20], 0
    %32 = vsyncpa [#allocation9], 0
    %33 = vsyncpa [#allocation23], 0
    // Predicated region
    $region2: #{tpu_custom_call.1} parent=1 // pred_check
      _
    $region3: #{tpu_custom_call.1} parent=1 // pred_check_branch
      %35 = sbr.rel (0) target = $region5
    $region4: #{tpu_custom_call.1} parent=1 // pred_region
      %s37 = ssub.s32 1024, 1024
      %38 = vsyncadd [#allocation8], %s37
      %s39 = sshll.u32 [#allocation7], 4
      %s40 = int_to_ptr.vmem [resolvable:$true] %s39
      %45 = dma.hbm_to_vmem [thread:$0]  %s0, 1024, %s40, [#allocation8], 128, 128, 8
    $region5: #{tpu_custom_call.1} parent=1 // pred_fallthru
      _
    // Predicated region
    $region6: #{tpu_custom_call.1} parent=1 // pred_check
      _
    $region7: #{tpu_custom_call.1} parent=1 // pred_check_branch
      %47 = sbr.rel (0) target = $region9
    $region8: #{tpu_custom_call.1} parent=1 // pred_region
      %s49 = ssub.s32 1024, 1024
      %50 = vsyncadd [#allocation11], %s49
      %s51 = sshll.u32 [#allocation10], 4
      %s52 = int_to_ptr.vmem [resolvable:$true] %s51
      %57 = dma.hbm_to_vmem [thread:$0]  %s1, 1024, %s52, [#allocation11], 128, 128, 8
    $region9: #{tpu_custom_call.1} parent=1 // pred_fallthru
      _
    // Predicated region
    $region10: #{tpu_custom_call.1} parent=1 // pred_check
      _
    $region11: #{tpu_custom_call.1} parent=1 // pred_check_branch
      %59 = sbr.rel (0) target = $region13
    $region12: #{tpu_custom_call.1} parent=1 // pred_region
      %s61 = ssub.s32 1024, 1024
      %62 = vsyncadd [#allocation11], %s61
      %s63 = sshll.u32 [#allocation12], 4
      %s64 = int_to_ptr.vmem [resolvable:$true] %s63
      %69 = dma.hbm_to_vmem [thread:$0]  %s2, 1024, %s64, [#allocation11], 128, 128, 8
    $region13: #{tpu_custom_call.1} parent=1 // pred_fallthru
      _
    // Predicated region
    $region14: #{tpu_custom_call.1} parent=1 // pred_check
      _
    $region15: #{tpu_custom_call.1} parent=1 // pred_check_branch
      %71 = sbr.rel (0) target = $region17
    $region16: #{tpu_custom_call.1} parent=1 // pred_region
      _
    $region17: #{tpu_custom_call.1} parent=1 // pred_fallthru
      _
    // Predicated region
    $region18: #{tpu_custom_call.1} parent=1 // pred_check
      _
    $region19: #{tpu_custom_call.1} parent=1 // pred_check_branch
      %73 = sbr.rel (0) target = $region21
    $region20: #{tpu_custom_call.1} parent=1 // pred_region
      %s75 = ssub.s32 256, 256
      %76 = vsyncadd [#allocation14], %s75
      %s78 = sshll.u32 [#allocation13], 4
      %s79 = int_to_ptr.vmem [resolvable:$true] %s78
      %81 = dma.hbm_to_vmem [thread:$0]  %s4, 256, %s79, [#allocation14]
    $region21: #{tpu_custom_call.1} parent=1 // pred_fallthru
      _
    // Predicated region
    $region22: #{tpu_custom_call.1} parent=1 // pred_check
      _
    $region23: #{tpu_custom_call.1} parent=1 // pred_check_branch
      %83 = sbr.rel (0) target = $region25
    $region24: #{tpu_custom_call.1} parent=1 // pred_region
      %s85 = ssub.s32 16384, 16384
      %86 = vsyncadd [#allocation14], %s85
      %s87 = sshll.u32 [#allocation15], 4
      %s88 = int_to_ptr.vmem [resolvable:$true] %s87
      %93 = dma.hbm_to_vmem [thread:$0]  %s5, 16384, %s88, [#allocation14], 512, 512, 32
    $region25: #{tpu_custom_call.1} parent=1 // pred_fallthru
      _
    // Predicated region
    $region26: #{tpu_custom_call.1} parent=1 // pred_check
      _
    $region27: #{tpu_custom_call.1} parent=1 // pred_check_branch
      %95 = sbr.rel (0) target = $region29
    $region28: #{tpu_custom_call.1} parent=1 // pred_region
      _
    $region29: #{tpu_custom_call.1} parent=1 // pred_fallthru
      _
    // Predicated region
    $region30: #{tpu_custom_call.1} parent=1 // pred_check
      _
    $region31: #{tpu_custom_call.1} parent=1 // pred_check_branch
      %97 = sbr.rel (0) target = $region33
    $region32: #{tpu_custom_call.1} parent=1 // pred_region
      %s99 = ssub.s32 32768, 32768
      %100 = vsyncadd [#allocation17], %s99
      %s101 = sshll.u32 [#allocation16], 4
      %s102 = int_to_ptr.vmem [resolvable:$true] %s101
      %107 = dma.hbm_to_vmem [thread:$0]  %s7, 32768, %s102, [#allocation17], 512, 512, 32
    $region33: #{tpu_custom_call.1} parent=1 // pred_fallthru
      _
    // Predicated region
    $region34: #{tpu_custom_call.1} parent=1 // pred_check
      _
    $region35: #{tpu_custom_call.1} parent=1 // pred_check_branch
      %109 = sbr.rel (0) target = $region37
    $region36: #{tpu_custom_call.1} parent=1 // pred_region
      _
    $region37: #{tpu_custom_call.1} parent=1 // pred_fallthru
      _
    // Predicated region
    $region38: #{tpu_custom_call.1} parent=1 // pred_check
      _
    $region39: #{tpu_custom_call.1} parent=1 // pred_check_branch
      %111 = sbr.rel (0) target = $region41
    $region40: #{tpu_custom_call.1} parent=1 // pred_region
      _
    $region41: #{tpu_custom_call.1} parent=1 // pred_fallthru
      _
    // Predicated region
    $region42: #{tpu_custom_call.1} parent=1 // pred_check
      _
    $region43: #{tpu_custom_call.1} parent=1 // pred_check_branch
      %113 = sbr.rel (0) target = $region45
    $region44: #{tpu_custom_call.1} parent=1 // pred_region
      %s115 = ssub.s32 8192, 8192
      %116 = vsyncadd [#allocation17], %s115
      %s117 = sshll.u32 [#allocation18], 4
      %s118 = int_to_ptr.vmem [resolvable:$true] %s117
      %123 = dma.hbm_to_vmem [thread:$0]  %s10, 8192, %s118, [#allocation17], 128, 128, 8
    $region45: #{tpu_custom_call.1} parent=1 // pred_fallthru
      _
    // Predicated region
    $region46: #{tpu_custom_call.1} parent=1 // pred_check
      _
    $region47: #{tpu_custom_call.1} parent=1 // pred_check_branch
      %125 = sbr.rel (0) target = $region49
    $region48: #{tpu_custom_call.1} parent=1 // pred_region
      _
    $region49: #{tpu_custom_call.1} parent=1 // pred_fallthru
      _
    // Predicated region
    $region50: #{tpu_custom_call.1} parent=1 // pred_check
      _
    $region51: #{tpu_custom_call.1} parent=1 // pred_check_branch
      %127 = sbr.rel (0) target = $region53
    $region52: #{tpu_custom_call.1} parent=1 // pred_region
      %s129 = ssub.s32 16384, 16384
      %130 = vsyncadd [#allocation20], %s129
      %s131 = sshll.u32 [#allocation19], 4
      %s132 = int_to_ptr.vmem [resolvable:$true] %s131
      %137 = dma.hbm_to_vmem [thread:$0]  %s12, 16384, %s132, [#allocation20], 256, 256, 16
    $region53: #{tpu_custom_call.1} parent=1 // pred_fallthru
      _
    // Predicated region
    $region54: #{tpu_custom_call.1} parent=1 // pred_check
      _
    $region55: #{tpu_custom_call.1} parent=1 // pred_check_branch
      %139 = sbr.rel (0) target = $region57
    $region56: #{tpu_custom_call.1} parent=1 // pred_region
      _
    $region57: #{tpu_custom_call.1} parent=1 // pred_fallthru
      _
    // Predicated region
    $region58: #{tpu_custom_call.1} parent=1 // pred_check
      _
    $region59: #{tpu_custom_call.1} parent=1 // pred_check_branch
      %141 = sbr.rel (0) target = $region61
    $region60: #{tpu_custom_call.1} parent=1 // pred_region
      _
    $region61: #{tpu_custom_call.1} parent=1 // pred_fallthru
      _
    // Predicated region
    $region62: #{tpu_custom_call.1} parent=1 // pred_check
      _
    $region63: #{tpu_custom_call.1} parent=1 // pred_check_branch
      %143 = sbr.rel (0) target = $region65
    $region64: #{tpu_custom_call.1} parent=1 // pred_region
      _
    $region65: #{tpu_custom_call.1} parent=1 // pred_fallthru
      _
    // Predicated region
    $region66: #{tpu_custom_call.1} parent=1 // pred_check
      _
    $region67: #{tpu_custom_call.1} parent=1 // pred_check_branch
      %145 = sbr.rel (0) target = $region69
    $region68: #{tpu_custom_call.1} parent=1 // pred_region
      _
    $region69: #{tpu_custom_call.1} parent=1 // pred_fallthru
      _
    // Predicated region
    $region70: #{tpu_custom_call.1} parent=1 // pred_check
      _
    $region71: #{tpu_custom_call.1} parent=1 // pred_check_branch
      %147 = sbr.rel (0) target = $region73
    $region72: #{tpu_custom_call.1} parent=1 // pred_region
      %148 = dma.done [#allocation8], 1024
    $region73: #{tpu_custom_call.1} parent=1 // pred_fallthru
      _
    // Predicated region
    $region74: #{tpu_custom_call.1} parent=1 // pred_check
      _
    $region75: #{tpu_custom_call.1} parent=1 // pred_check_branch
      %150 = sbr.rel (0) target = $region77
    $region76: #{tpu_custom_call.1} parent=1 // pred_region
      %151 = dma.done [#allocation11], 1024
    $region77: #{tpu_custom_call.1} parent=1 // pred_fallthru
      _
    // Predicated region
    $region78: #{tpu_custom_call.1} parent=1 // pred_check
      _
    $region79: #{tpu_custom_call.1} parent=1 // pred_check_branch
      %153 = sbr.rel (0) target = $region81
    $region80: #{tpu_custom_call.1} parent=1 // pred_region
      %154 = dma.done [#allocation11], 1024
    $region81: #{tpu_custom_call.1} parent=1 // pred_fallthru
      _
    // Predicated region
    $region82: #{tpu_custom_call.1} parent=1 // pred_check
      _
    $region83: #{tpu_custom_call.1} parent=1 // pred_check_branch
      %156 = sbr.rel (0) target = $region85
    $region84: #{tpu_custom_call.1} parent=1 // pred_region
      %157 = dma.done [#allocation14], 256
    $region85: #{tpu_custom_call.1} parent=1 // pred_fallthru
      _
    // Predicated region
    $region86: #{tpu_custom_call.1} parent=1 // pred_check
      _
    $region87: #{tpu_custom_call.1} parent=1 // pred_check_branch
      %159 = sbr.rel (0) target = $region89
    $region88: #{tpu_custom_call.1} parent=1 // pred_region
      %160 = dma.done [#allocation14], 16384
    $region89: #{tpu_custom_call.1} parent=1 // pred_fallthru
      _
    // Predicated region
    $region90: #{tpu_custom_call.1} parent=1 // pred_check
      _
    $region91: #{tpu_custom_call.1} parent=1 // pred_check_branch
      %162 = sbr.rel (0) target = $region93
    $region92: #{tpu_custom_call.1} parent=1 // pred_region
      %163 = dma.done [#allocation17], 32768
    $region93: #{tpu_custom_call.1} parent=1 // pred_fallthru
      _
    // Predicated region
    $region94: #{tpu_custom_call.1} parent=1 // pred_check
      _
    $region95: #{tpu_custom_call.1} parent=1 // pred_check_branch
      %165 = sbr.rel (0) target = $region97
    $region96: #{tpu_custom_call.1} parent=1 // pred_region
      %166 = dma.done [#allocation17], 8192
    $region97: #{tpu_custom_call.1} parent=1 // pred_fallthru
      _
    // Predicated region
    $region98: #{tpu_custom_call.1} parent=1 // pred_check
      _
    $region99: #{tpu_custom_call.1} parent=1 // pred_check_branch
      %168 = sbr.rel (0) target = $region101
    $region100: #{tpu_custom_call.1} parent=1 // pred_region
      %169 = dma.done [#allocation20], 16384
    $region101: #{tpu_custom_call.1} parent=1 // pred_fallthru
      _
    %v170 = vld [vmem:[#allocation7] sm:$0xff]
    %v171 = vld [vmem:[#allocation7 + $0x8] sm:$0xff]
    %v172 = vld [vmem:[#allocation7 + $0x10] sm:$0xff]
    %v173 = vld [vmem:[#allocation7 + $0x18] sm:$0xff]
    %v174 = vld [vmem:[#allocation7 + $0x20] sm:$0xff]
    %v175 = vld [vmem:[#allocation7 + $0x28] sm:$0xff]
    %v176 = vld [vmem:[#allocation7 + $0x30] sm:$0xff]
    %v177 = vld [vmem:[#allocation7 + $0x38] sm:$0xff]
    %v178 = vld [vmem:[#allocation10] sm:$0xff]
    %v179 = vld [vmem:[#allocation10 + $0x8] sm:$0xff]
    %v180 = vld [vmem:[#allocation10 + $0x10] sm:$0xff]
    %v181 = vld [vmem:[#allocation10 + $0x18] sm:$0xff]
    %v182 = vld [vmem:[#allocation10 + $0x20] sm:$0xff]
    %v183 = vld [vmem:[#allocation10 + $0x28] sm:$0xff]
    %v184 = vld [vmem:[#allocation10 + $0x30] sm:$0xff]
    %v185 = vld [vmem:[#allocation10 + $0x38] sm:$0xff]
    %v186 = vmul.f32 %v170, %v178
    %v187 = vmul.f32 %v171, %v179
    %v188 = vmul.f32 %v172, %v180
    %v189 = vmul.f32 %v173, %v181
    %v190 = vmul.f32 %v174, %v182
    %v191 = vmul.f32 %v175, %v183
    %v192 = vmul.f32 %v176, %v184
    %v193 = vmul.f32 %v177, %v185
    %194 = vadd.xlane.f32.xlu0 %v186
    %v195 = vpop.xlane.xlu0 %194
    %196 = vadd.xlane.f32.xlu0 %v187
    %v197 = vpop.xlane.xlu0 %196
    %198 = vadd.xlane.f32.xlu0 %v188
    %v199 = vpop.xlane.xlu0 %198
    %200 = vadd.xlane.f32.xlu0 %v189
    %v201 = vpop.xlane.xlu0 %200
    %202 = vadd.xlane.f32.xlu0 %v190
    %v203 = vpop.xlane.xlu0 %202
    %204 = vadd.xlane.f32.xlu0 %v191
    %v205 = vpop.xlane.xlu0 %204
    %206 = vadd.xlane.f32.xlu0 %v192
    %v207 = vpop.xlane.xlu0 %206
    %208 = vadd.xlane.f32.xlu0 %v193
    %v209 = vpop.xlane.xlu0 %208
    %v210 = vld [vmem:[#allocation12] sm:$0xff]
    %v211 = vld [vmem:[#allocation12 + $0x8] sm:$0xff]
    %v212 = vld [vmem:[#allocation12 + $0x10] sm:$0xff]
    %v213 = vld [vmem:[#allocation12 + $0x18] sm:$0xff]
    %v214 = vld [vmem:[#allocation12 + $0x20] sm:$0xff]
    %v215 = vld [vmem:[#allocation12 + $0x28] sm:$0xff]
    %v216 = vld [vmem:[#allocation12 + $0x30] sm:$0xff]
    %v217 = vld [vmem:[#allocation12 + $0x38] sm:$0xff]
    %v218 = vmul.f32 %v170, %v210
    %v219 = vmul.f32 %v171, %v211
    %v220 = vmul.f32 %v172, %v212
    %v221 = vmul.f32 %v173, %v213
    %v222 = vmul.f32 %v174, %v214
    %v223 = vmul.f32 %v175, %v215
    %v224 = vmul.f32 %v176, %v216
    %v225 = vmul.f32 %v177, %v217
    %226 = vadd.xlane.f32.xlu0 %v218
    %v227 = vpop.xlane.xlu0 %226
    %228 = vadd.xlane.f32.xlu0 %v219
    %v229 = vpop.xlane.xlu0 %228
    %230 = vadd.xlane.f32.xlu0 %v220
    %v231 = vpop.xlane.xlu0 %230
    %232 = vadd.xlane.f32.xlu0 %v221
    %v233 = vpop.xlane.xlu0 %232
    %234 = vadd.xlane.f32.xlu0 %v222
    %v235 = vpop.xlane.xlu0 %234
    %236 = vadd.xlane.f32.xlu0 %v223
    %v237 = vpop.xlane.xlu0 %236
    %238 = vadd.xlane.f32.xlu0 %v224
    %v239 = vpop.xlane.xlu0 %238
    %240 = vadd.xlane.f32.xlu0 %v225
    %v241 = vpop.xlane.xlu0 %240
    %v242 = vsub.f32 %v195, %v227
    %v243 = vsub.f32 %v197, %v229
    %v244 = vsub.f32 %v199, %v231
    %v245 = vsub.f32 %v201, %v233
    %v246 = vsub.f32 %v203, %v235
    %v247 = vsub.f32 %v205, %v237
    %v248 = vsub.f32 %v207, %v239
    %v249 = vsub.f32 %v209, %v241
    %v250 = vxor.u32 %v242, 2147483648
    %v251 = vxor.u32 %v243, 2147483648
    %v252 = vxor.u32 %v244, 2147483648
    %v253 = vxor.u32 %v245, 2147483648
    %v254 = vxor.u32 %v246, 2147483648
    %v255 = vxor.u32 %v247, 2147483648
    %v256 = vxor.u32 %v248, 2147483648
    %v257 = vxor.u32 %v249, 2147483648
    %v258 = vmul.f32 %v250, 1.442695
    %v259 = vpow.pop %v258
    %v260 = vmul.f32 %v251, 1.442695
    %v261 = vpow.pop %v260
    %v262 = vmul.f32 %v252, 1.442695
    %v263 = vpow.pop %v262
    %v264 = vmul.f32 %v253, 1.442695
    %v265 = vpow.pop %v264
    %v266 = vmul.f32 %v254, 1.442695
    %v267 = vpow.pop %v266
    %v268 = vmul.f32 %v255, 1.442695
    %v269 = vpow.pop %v268
    %v270 = vmul.f32 %v256, 1.442695
    %v271 = vpow.pop %v270
    %v272 = vmul.f32 %v257, 1.442695
    %v273 = vpow.pop %v272
    %v274 = vadd.f32 %v259, 1.0
    %v275 = vadd.f32 %v261, 1.0
    %v276 = vadd.f32 %v263, 1.0
    %v277 = vadd.f32 %v265, 1.0
    %v278 = vadd.f32 %v267, 1.0
    %v279 = vadd.f32 %v269, 1.0
    %v280 = vadd.f32 %v271, 1.0
    %v281 = vadd.f32 %v273, 1.0
    %v282 = vrcp.pop %v274
    %v283 = vmul.f32 1.0, %v282
    %v284 = vrcp.pop %v275
    %v285 = vmul.f32 1.0, %v284
    %v286 = vrcp.pop %v276
    %v287 = vmul.f32 1.0, %v286
    %v288 = vrcp.pop %v277
    %v289 = vmul.f32 1.0, %v288
    %v290 = vrcp.pop %v278
    %v291 = vmul.f32 1.0, %v290
    %v292 = vrcp.pop %v279
    %v293 = vmul.f32 1.0, %v292
    %v294 = vrcp.pop %v280
    %v295 = vmul.f32 1.0, %v294
    %v296 = vrcp.pop %v281
    %v297 = vmul.f32 1.0, %v296
    %v298 = vsub.f32 1.0, %v283
    %v299 = vsub.f32 1.0, %v285
    %v300 = vsub.f32 1.0, %v287
    %v301 = vsub.f32 1.0, %v289
    %v302 = vsub.f32 1.0, %v291
    %v303 = vsub.f32 1.0, %v293
    %v304 = vsub.f32 1.0, %v295
    %v305 = vsub.f32 1.0, %v297
    %s306 = sld [smem:[#allocation4]]
    %s307 = sld [smem:[#allocation5]]
    %v308 = vstv %s306
    %v309 = vmul.f32 %v195, %v308
    %v310 = vmul.f32 %v197, %v308
    %v311 = vmul.f32 %v199, %v308
    %v312 = vmul.f32 %v201, %v308
    %v313 = vmul.f32 %v203, %v308
    %v314 = vmul.f32 %v205, %v308
    %v315 = vmul.f32 %v207, %v308
    %v316 = vmul.f32 %v209, %v308
    %v317 = vstv %s307
    %v318 = vadd.f32 %v309, %v317
    %v319 = vadd.f32 %v310, %v317
    %v320 = vadd.f32 %v311, %v317
    %v321 = vadd.f32 %v312, %v317
    %v322 = vadd.f32 %v313, %v317
    %v323 = vadd.f32 %v314, %v317
    %v324 = vadd.f32 %v315, %v317
    %v325 = vadd.f32 %v316, %v317
    %v326 = vxor.u32 %v318, 2147483648
    %v327 = vxor.u32 %v319, 2147483648
    %v328 = vxor.u32 %v320, 2147483648
    %v329 = vxor.u32 %v321, 2147483648
    %v330 = vxor.u32 %v322, 2147483648
    %v331 = vxor.u32 %v323, 2147483648
    %v332 = vxor.u32 %v324, 2147483648
    %v333 = vxor.u32 %v325, 2147483648
    %v334 = vmul.f32 %v326, 1.442695
    %v335 = vpow.pop %v334
    %v336 = vmul.f32 %v327, 1.442695
    %v337 = vpow.pop %v336
    %v338 = vmul.f32 %v328, 1.442695
    %v339 = vpow.pop %v338
    %v340 = vmul.f32 %v329, 1.442695
    %v341 = vpow.pop %v340
    %v342 = vmul.f32 %v330, 1.442695
    %v343 = vpow.pop %v342
    %v344 = vmul.f32 %v331, 1.442695
    %v345 = vpow.pop %v344
    %v346 = vmul.f32 %v332, 1.442695
    %v347 = vpow.pop %v346
    %v348 = vmul.f32 %v333, 1.442695
    %v349 = vpow.pop %v348
    %v350 = vadd.f32 %v335, 1.0
    %v351 = vadd.f32 %v337, 1.0
    %v352 = vadd.f32 %v339, 1.0
    %v353 = vadd.f32 %v341, 1.0
    %v354 = vadd.f32 %v343, 1.0
    %v355 = vadd.f32 %v345, 1.0
    %v356 = vadd.f32 %v347, 1.0
    %v357 = vadd.f32 %v349, 1.0
    %v358 = vrcp.pop %v350
    %v359 = vmul.f32 1.0, %v358
    %v360 = vrcp.pop %v351
    %v361 = vmul.f32 1.0, %v360
    %v362 = vrcp.pop %v352
    %v363 = vmul.f32 1.0, %v362
    %v364 = vrcp.pop %v353
    %v365 = vmul.f32 1.0, %v364
    %v366 = vrcp.pop %v354
    %v367 = vmul.f32 1.0, %v366
    %v368 = vrcp.pop %v355
    %v369 = vmul.f32 1.0, %v368
    %v370 = vrcp.pop %v356
    %v371 = vmul.f32 1.0, %v370
    %v372 = vrcp.pop %v357
    %v373 = vmul.f32 1.0, %v372
    %v374 = vmul.f32 %v227, %v308
    %v375 = vmul.f32 %v229, %v308
    %v376 = vmul.f32 %v231, %v308
    %v377 = vmul.f32 %v233, %v308
    %v378 = vmul.f32 %v235, %v308
    %v379 = vmul.f32 %v237, %v308
    %v380 = vmul.f32 %v239, %v308
    %v381 = vmul.f32 %v241, %v308
    %v382 = vadd.f32 %v374, %v317
    %v383 = vadd.f32 %v375, %v317
    %v384 = vadd.f32 %v376, %v317
    %v385 = vadd.f32 %v377, %v317
    %v386 = vadd.f32 %v378, %v317
    %v387 = vadd.f32 %v379, %v317
    %v388 = vadd.f32 %v380, %v317
    %v389 = vadd.f32 %v381, %v317
    %v390 = vxor.u32 %v382, 2147483648
    %v391 = vxor.u32 %v383, 2147483648
    %v392 = vxor.u32 %v384, 2147483648
    %v393 = vxor.u32 %v385, 2147483648
    %v394 = vxor.u32 %v386, 2147483648
    %v395 = vxor.u32 %v387, 2147483648
    %v396 = vxor.u32 %v388, 2147483648
    %v397 = vxor.u32 %v389, 2147483648
    %v398 = vmul.f32 %v390, 1.442695
    %v399 = vpow.pop %v398
    %v400 = vmul.f32 %v391, 1.442695
    %v401 = vpow.pop %v400
    %v402 = vmul.f32 %v392, 1.442695
    %v403 = vpow.pop %v402
    %v404 = vmul.f32 %v393, 1.442695
    %v405 = vpow.pop %v404
    %v406 = vmul.f32 %v394, 1.442695
    %v407 = vpow.pop %v406
    %v408 = vmul.f32 %v395, 1.442695
    %v409 = vpow.pop %v408
    %v410 = vmul.f32 %v396, 1.442695
    %v411 = vpow.pop %v410
    %v412 = vmul.f32 %v397, 1.442695
    %v413 = vpow.pop %v412
    %v414 = vadd.f32 %v399, 1.0
    %v415 = vadd.f32 %v401, 1.0
    %v416 = vadd.f32 %v403, 1.0
    %v417 = vadd.f32 %v405, 1.0
    %v418 = vadd.f32 %v407, 1.0
    %v419 = vadd.f32 %v409, 1.0
    %v420 = vadd.f32 %v411, 1.0
    %v421 = vadd.f32 %v413, 1.0
    %v422 = vrcp.pop %v414
    %v423 = vmul.f32 1.0, %v422
    %v424 = vrcp.pop %v415
    %v425 = vmul.f32 1.0, %v424
    %v426 = vrcp.pop %v416
    %v427 = vmul.f32 1.0, %v426
    %v428 = vrcp.pop %v417
    %v429 = vmul.f32 1.0, %v428
    %v430 = vrcp.pop %v418
    %v431 = vmul.f32 1.0, %v430
    %v432 = vrcp.pop %v419
    %v433 = vmul.f32 1.0, %v432
    %v434 = vrcp.pop %v420
    %v435 = vmul.f32 1.0, %v434
    %v436 = vrcp.pop %v421
    %v437 = vmul.f32 1.0, %v436
    %v438 = vld [vmem:[%s3] sm:$0xff]
    %v439 = vld [vmem:[%s3 + $0x8] sm:$0xff]
    %v440 = vmul.f32 %v438, %v283
    %v441 = vmul.f32 %v439, %v283
    %v442 = vmul.f32 %v438, %v285
    %v443 = vmul.f32 %v439, %v285
    %v444 = vmul.f32 %v438, %v287
    %v445 = vmul.f32 %v439, %v287
    %v446 = vmul.f32 %v438, %v289
    %v447 = vmul.f32 %v439, %v289
    %v448 = vmul.f32 %v438, %v291
    %v449 = vmul.f32 %v439, %v291
    %v450 = vmul.f32 %v438, %v293
    %v451 = vmul.f32 %v439, %v293
    %v452 = vmul.f32 %v438, %v295
    %v453 = vmul.f32 %v439, %v295
    %v454 = vmul.f32 %v438, %v297
    %v455 = vmul.f32 %v439, %v297
    %v456 = vld [vmem:[#allocation13] sm:$0xff]
    %v457 = vld [vmem:[#allocation13 + $0x8] sm:$0xff]
    %v458 = vmul.f32 %v456, %v298
    %v459 = vmul.f32 %v457, %v298
    %v460 = vmul.f32 %v456, %v299
    %v461 = vmul.f32 %v457, %v299
    %v462 = vmul.f32 %v456, %v300
    %v463 = vmul.f32 %v457, %v300
    %v464 = vmul.f32 %v456, %v301
    %v465 = vmul.f32 %v457, %v301
    %v466 = vmul.f32 %v456, %v302
    %v467 = vmul.f32 %v457, %v302
    %v468 = vmul.f32 %v456, %v303
    %v469 = vmul.f32 %v457, %v303
    %v470 = vmul.f32 %v456, %v304
    %v471 = vmul.f32 %v457, %v304
    %v472 = vmul.f32 %v456, %v305
    %v473 = vmul.f32 %v457, %v305
    %v474 = vadd.f32 %v440, %v458
    %v475 = vadd.f32 %v441, %v459
    %v476 = vadd.f32 %v442, %v460
    %v477 = vadd.f32 %v443, %v461
    %v478 = vadd.f32 %v444, %v462
    %v479 = vadd.f32 %v445, %v463
    %v480 = vadd.f32 %v446, %v464
    %v481 = vadd.f32 %v447, %v465
    %v482 = vadd.f32 %v448, %v466
    %v483 = vadd.f32 %v449, %v467
    %v484 = vadd.f32 %v450, %v468
    %v485 = vadd.f32 %v451, %v469
    %v486 = vadd.f32 %v452, %v470
    %v487 = vadd.f32 %v453, %v471
    %v488 = vadd.f32 %v454, %v472
    %v489 = vadd.f32 %v455, %v473
    %v490 = vmul.f32 %v359, %v283
    %v491 = vmul.f32 %v361, %v285
    %v492 = vmul.f32 %v363, %v287
    %v493 = vmul.f32 %v365, %v289
    %v494 = vmul.f32 %v367, %v291
    %v495 = vmul.f32 %v369, %v293
    %v496 = vmul.f32 %v371, %v295
    %v497 = vmul.f32 %v373, %v297
    %v498 = vmul.f32 %v423, %v298
    %v499 = vmul.f32 %v425, %v299
    %v500 = vmul.f32 %v427, %v300
    %v501 = vmul.f32 %v429, %v301
    %v502 = vmul.f32 %v431, %v302
    %v503 = vmul.f32 %v433, %v303
    %v504 = vmul.f32 %v435, %v304
    %v505 = vmul.f32 %v437, %v305
    %v506 = vadd.f32 %v490, %v498
    %v507 = vadd.f32 %v491, %v499
    %v508 = vadd.f32 %v492, %v500
    %v509 = vadd.f32 %v493, %v501
    %v510 = vadd.f32 %v494, %v502
    %v511 = vadd.f32 %v495, %v503
    %v512 = vadd.f32 %v496, %v504
    %v513 = vadd.f32 %v497, %v505
    %v514 = vld [vmem:[#allocation15] sm:$0xff]
    %v515 = vld [vmem:[#allocation15 + $0x8] sm:$0xff]
    %v516 = vld [vmem:[#allocation15 + $0x10] sm:$0xff]
    %v517 = vld [vmem:[#allocation15 + $0x18] sm:$0xff]
    %v518 = vld [vmem:[#allocation15 + $0x20] sm:$0xff]
    %v519 = vld [vmem:[#allocation15 + $0x28] sm:$0xff]
    %v520 = vld [vmem:[#allocation15 + $0x30] sm:$0xff]
    %v521 = vld [vmem:[#allocation15 + $0x38] sm:$0xff]
    %v522 = vld [vmem:[#allocation15 + $0x40] sm:$0xff]
    %v523 = vld [vmem:[#allocation15 + $0x48] sm:$0xff]
    %v524 = vld [vmem:[#allocation15 + $0x50] sm:$0xff]
    %v525 = vld [vmem:[#allocation15 + $0x58] sm:$0xff]
    %v526 = vld [vmem:[#allocation15 + $0x60] sm:$0xff]
    %v527 = vld [vmem:[#allocation15 + $0x68] sm:$0xff]
    %v528 = vld [vmem:[#allocation15 + $0x70] sm:$0xff]
    %v529 = vld [vmem:[#allocation15 + $0x78] sm:$0xff]
    %v530 = vld [vmem:[#allocation15 + $0x80] sm:$0xff]
    %v531 = vld [vmem:[#allocation15 + $0x88] sm:$0xff]
    %v532 = vld [vmem:[#allocation15 + $0x90] sm:$0xff]
    %v533 = vld [vmem:[#allocation15 + $0x98] sm:$0xff]
    %v534 = vld [vmem:[#allocation15 + $0xa0] sm:$0xff]
    %v535 = vld [vmem:[#allocation15 + $0xa8] sm:$0xff]
    %v536 = vld [vmem:[#allocation15 + $0xb0] sm:$0xff]
    %v537 = vld [vmem:[#allocation15 + $0xb8] sm:$0xff]
    %v538 = vld [vmem:[#allocation15 + $0xc0] sm:$0xff]
    %v539 = vld [vmem:[#allocation15 + $0xc8] sm:$0xff]
    %v540 = vld [vmem:[#allocation15 + $0xd0] sm:$0xff]
    %v541 = vld [vmem:[#allocation15 + $0xd8] sm:$0xff]
    %v542 = vld [vmem:[#allocation15 + $0xe0] sm:$0xff]
    %v543 = vld [vmem:[#allocation15 + $0xe8] sm:$0xff]
    %v544 = vld [vmem:[#allocation15 + $0xf0] sm:$0xff]
    %v545 = vld [vmem:[#allocation15 + $0xf8] sm:$0xff]
    %v546 = vld [vmem:[#allocation15 + $0x100] sm:$0xff]
    %v547 = vld [vmem:[#allocation15 + $0x108] sm:$0xff]
    %v548 = vld [vmem:[#allocation15 + $0x110] sm:$0xff]
    %v549 = vld [vmem:[#allocation15 + $0x118] sm:$0xff]
    %v550 = vld [vmem:[#allocation15 + $0x120] sm:$0xff]
    %v551 = vld [vmem:[#allocation15 + $0x128] sm:$0xff]
    %v552 = vld [vmem:[#allocation15 + $0x130] sm:$0xff]
    %v553 = vld [vmem:[#allocation15 + $0x138] sm:$0xff]
    %v554 = vld [vmem:[#allocation15 + $0x140] sm:$0xff]
    %v555 = vld [vmem:[#allocation15 + $0x148] sm:$0xff]
    %v556 = vld [vmem:[#allocation15 + $0x150] sm:$0xff]
    %v557 = vld [vmem:[#allocation15 + $0x158] sm:$0xff]
    %v558 = vld [vmem:[#allocation15 + $0x160] sm:$0xff]
    %v559 = vld [vmem:[#allocation15 + $0x168] sm:$0xff]
    %v560 = vld [vmem:[#allocation15 + $0x170] sm:$0xff]
    %v561 = vld [vmem:[#allocation15 + $0x178] sm:$0xff]
    %v562 = vld [vmem:[#allocation15 + $0x180] sm:$0xff]
    %v563 = vld [vmem:[#allocation15 + $0x188] sm:$0xff]
    %v564 = vld [vmem:[#allocation15 + $0x190] sm:$0xff]
    %v565 = vld [vmem:[#allocation15 + $0x198] sm:$0xff]
    %v566 = vld [vmem:[#allocation15 + $0x1a0] sm:$0xff]
    %v567 = vld [vmem:[#allocation15 + $0x1a8] sm:$0xff]
    %v568 = vld [vmem:[#allocation15 + $0x1b0] sm:$0xff]
    %v569 = vld [vmem:[#allocation15 + $0x1b8] sm:$0xff]
    %v570 = vld [vmem:[#allocation15 + $0x1c0] sm:$0xff]
    %v571 = vld [vmem:[#allocation15 + $0x1c8] sm:$0xff]
    %v572 = vld [vmem:[#allocation15 + $0x1d0] sm:$0xff]
    %v573 = vld [vmem:[#allocation15 + $0x1d8] sm:$0xff]
    %v574 = vld [vmem:[#allocation15 + $0x1e0] sm:$0xff]
    %v575 = vld [vmem:[#allocation15 + $0x1e8] sm:$0xff]
    %v576 = vld [vmem:[#allocation15 + $0x1f0] sm:$0xff]
    %v577 = vld [vmem:[#allocation15 + $0x1f8] sm:$0xff]
    %v578 = vld [vmem:[#allocation15 + $0x200] sm:$0xff]
    %v579 = vld [vmem:[#allocation15 + $0x208] sm:$0xff]
    %v580 = vld [vmem:[#allocation15 + $0x210] sm:$0xff]
    %v581 = vld [vmem:[#allocation15 + $0x218] sm:$0xff]
    %v582 = vld [vmem:[#allocation15 + $0x220] sm:$0xff]
    %v583 = vld [vmem:[#allocation15 + $0x228] sm:$0xff]
    %v584 = vld [vmem:[#allocation15 + $0x230] sm:$0xff]
    %v585 = vld [vmem:[#allocation15 + $0x238] sm:$0xff]
    %v586 = vld [vmem:[#allocation15 + $0x240] sm:$0xff]
    %v587 = vld [vmem:[#allocation15 + $0x248] sm:$0xff]
    %v588 = vld [vmem:[#allocation15 + $0x250] sm:$0xff]
    %v589 = vld [vmem:[#allocation15 + $0x258] sm:$0xff]
    %v590 = vld [vmem:[#allocation15 + $0x260] sm:$0xff]
    %v591 = vld [vmem:[#allocation15 + $0x268] sm:$0xff]
    %v592 = vld [vmem:[#allocation15 + $0x270] sm:$0xff]
    %v593 = vld [vmem:[#allocation15 + $0x278] sm:$0xff]
    %v594 = vld [vmem:[#allocation15 + $0x280] sm:$0xff]
    %v595 = vld [vmem:[#allocation15 + $0x288] sm:$0xff]
    %v596 = vld [vmem:[#allocation15 + $0x290] sm:$0xff]
    %v597 = vld [vmem:[#allocation15 + $0x298] sm:$0xff]
    %v598 = vld [vmem:[#allocation15 + $0x2a0] sm:$0xff]
    %v599 = vld [vmem:[#allocation15 + $0x2a8] sm:$0xff]
    %v600 = vld [vmem:[#allocation15 + $0x2b0] sm:$0xff]
    %v601 = vld [vmem:[#allocation15 + $0x2b8] sm:$0xff]
    %v602 = vld [vmem:[#allocation15 + $0x2c0] sm:$0xff]
    %v603 = vld [vmem:[#allocation15 + $0x2c8] sm:$0xff]
    %v604 = vld [vmem:[#allocation15 + $0x2d0] sm:$0xff]
    %v605 = vld [vmem:[#allocation15 + $0x2d8] sm:$0xff]
    %v606 = vld [vmem:[#allocation15 + $0x2e0] sm:$0xff]
    %v607 = vld [vmem:[#allocation15 + $0x2e8] sm:$0xff]
    %v608 = vld [vmem:[#allocation15 + $0x2f0] sm:$0xff]
    %v609 = vld [vmem:[#allocation15 + $0x2f8] sm:$0xff]
    %v610 = vld [vmem:[#allocation15 + $0x300] sm:$0xff]
    %v611 = vld [vmem:[#allocation15 + $0x308] sm:$0xff]
    %v612 = vld [vmem:[#allocation15 + $0x310] sm:$0xff]
    %v613 = vld [vmem:[#allocation15 + $0x318] sm:$0xff]
    %v614 = vld [vmem:[#allocation15 + $0x320] sm:$0xff]
    %v615 = vld [vmem:[#allocation15 + $0x328] sm:$0xff]
    %v616 = vld [vmem:[#allocation15 + $0x330] sm:$0xff]
    %v617 = vld [vmem:[#allocation15 + $0x338] sm:$0xff]
    %v618 = vld [vmem:[#allocation15 + $0x340] sm:$0xff]
    %v619 = vld [vmem:[#allocation15 + $0x348] sm:$0xff]
    %v620 = vld [vmem:[#allocation15 + $0x350] sm:$0xff]
    %v621 = vld [vmem:[#allocation15 + $0x358] sm:$0xff]
    %v622 = vld [vmem:[#allocation15 + $0x360] sm:$0xff]
    %v623 = vld [vmem:[#allocation15 + $0x368] sm:$0xff]
    %v624 = vld [vmem:[#allocation15 + $0x370] sm:$0xff]
    %v625 = vld [vmem:[#allocation15 + $0x378] sm:$0xff]
    %v626 = vld [vmem:[#allocation15 + $0x380] sm:$0xff]
    %v627 = vld [vmem:[#allocation15 + $0x388] sm:$0xff]
    %v628 = vld [vmem:[#allocation15 + $0x390] sm:$0xff]
    %v629 = vld [vmem:[#allocation15 + $0x398] sm:$0xff]
    %v630 = vld [vmem:[#allocation15 + $0x3a0] sm:$0xff]
    %v631 = vld [vmem:[#allocation15 + $0x3a8] sm:$0xff]
    %v632 = vld [vmem:[#allocation15 + $0x3b0] sm:$0xff]
    %v633 = vld [vmem:[#allocation15 + $0x3b8] sm:$0xff]
    %v634 = vld [vmem:[#allocation15 + $0x3c0] sm:$0xff]
    %v635 = vld [vmem:[#allocation15 + $0x3c8] sm:$0xff]
    %v636 = vld [vmem:[#allocation15 + $0x3d0] sm:$0xff]
    %v637 = vld [vmem:[#allocation15 + $0x3d8] sm:$0xff]
    %v638 = vld [vmem:[#allocation15 + $0x3e0] sm:$0xff]
    %v639 = vld [vmem:[#allocation15 + $0x3e8] sm:$0xff]
    %v640 = vld [vmem:[#allocation15 + $0x3f0] sm:$0xff]
    %v641 = vld [vmem:[#allocation15 + $0x3f8] sm:$0xff]
    %v642 = vld [vmem:[%s6] sm:$0xf]
    %v644 = vlaneseq
    %v645 = vshrl.u32 %v644, 7
    %v646 = vsub.s32 0, %v645
    %v647 = vrot.slane %v642, %v646
    %v648 = vlaneseq
    %v649 = vshrl.u32 %v648, 7
    %v650 = vsub.s32 1, %v649
    %v651 = vrot.slane %v642, %v650
    %v652 = vlaneseq
    %v653 = vshrl.u32 %v652, 7
    %v654 = vsub.s32 2, %v653
    %v655 = vrot.slane %v642, %v654
    %v656 = vlaneseq
    %v657 = vshrl.u32 %v656, 7
    %v658 = vsub.s32 3, %v657
    %v659 = vrot.slane %v642, %v658
    %v664 = vmul.f32 %v506, %v647
    %v665 = vmul.f32 %v506, %v651
    %v666 = vmul.f32 %v506, %v655
    %v667 = vmul.f32 %v506, %v659
    %v668 = vmul.f32 %v507, %v647
    %v669 = vmul.f32 %v507, %v651
    %v670 = vmul.f32 %v507, %v655
    %v671 = vmul.f32 %v507, %v659
    %v672 = vmul.f32 %v508, %v647
    %v673 = vmul.f32 %v508, %v651
    %v674 = vmul.f32 %v508, %v655
    %v675 = vmul.f32 %v508, %v659
    %v676 = vmul.f32 %v509, %v647
    %v677 = vmul.f32 %v509, %v651
    %v678 = vmul.f32 %v509, %v655
    %v679 = vmul.f32 %v509, %v659
    %v680 = vmul.f32 %v510, %v647
    %v681 = vmul.f32 %v510, %v651
    %v682 = vmul.f32 %v510, %v655
    %v683 = vmul.f32 %v510, %v659
    %v684 = vmul.f32 %v511, %v647
    %v685 = vmul.f32 %v511, %v651
    %v686 = vmul.f32 %v511, %v655
    %v687 = vmul.f32 %v511, %v659
    %v688 = vmul.f32 %v512, %v647
    %v689 = vmul.f32 %v512, %v651
    %v690 = vmul.f32 %v512, %v655
    %v691 = vmul.f32 %v512, %v659
    %v692 = vmul.f32 %v513, %v647
    %v693 = vmul.f32 %v513, %v651
    %v694 = vmul.f32 %v513, %v655
    %v695 = vmul.f32 %v513, %v659
    %696 = vmatprep.subr.mxu0 %v515
    %697 = vmatpush1.msra.mxu0 %v514
    %698 = vmatprep.subr.mxu0 %v519
    %699 = vmatpush1.msra.mxu0 %v518
    %700 = vmatprep.subr.mxu0 %v523
    %701 = vmatpush1.msra.mxu0 %v522
    %702 = vmatprep.subr.mxu0 %v527
    %703 = vmatpush1.msra.mxu0 %v526
    %704 = vmatprep.subr.mxu0 %v531
    %705 = vmatpush1.msra.mxu0 %v530
    %706 = vmatprep.subr.mxu0 %v535
    %707 = vmatpush1.msra.mxu0 %v534
    %708 = vmatprep.subr.mxu0 %v539
    %709 = vmatpush1.msra.mxu0 %v538
    %710 = vmatprep.subr.mxu0 %v543
    %711 = vmatpush1.msra.mxu0 %v542
    %712 = vmatprep.subr.mxu0 %v547
    %713 = vmatpush1.msra.mxu0 %v546
    %714 = vmatprep.subr.mxu0 %v551
    %715 = vmatpush1.msra.mxu0 %v550
    %716 = vmatprep.subr.mxu0 %v555
    %717 = vmatpush1.msra.mxu0 %v554
    %718 = vmatprep.subr.mxu0 %v559
    %719 = vmatpush1.msra.mxu0 %v558
    %720 = vmatprep.subr.mxu0 %v563
    %721 = vmatpush1.msra.mxu0 %v562
    %722 = vmatprep.subr.mxu0 %v567
    %723 = vmatpush1.msra.mxu0 %v566
    %724 = vmatprep.subr.mxu0 %v571
    %725 = vmatpush1.msra.mxu0 %v570
    %726 = vmatprep.subr.mxu0 %v575
    %727 = vmatpush1.msra.mxu0 %v574
    %728 = vmatprep.subr.mxu0 %v579
    %729 = vmatpush1.msra.mxu0 %v578
    %730 = vmatprep.subr.mxu0 %v583
    %731 = vmatpush1.msra.mxu0 %v582
    %732 = vmatprep.subr.mxu0 %v587
    %733 = vmatpush1.msra.mxu0 %v586
    %734 = vmatprep.subr.mxu0 %v591
    %735 = vmatpush1.msra.mxu0 %v590
    %736 = vmatprep.subr.mxu0 %v595
    %737 = vmatpush1.msra.mxu0 %v594
    %738 = vmatprep.subr.mxu0 %v599
    %739 = vmatpush1.msra.mxu0 %v598
    %740 = vmatprep.subr.mxu0 %v603
    %741 = vmatpush1.msra.mxu0 %v602
    %742 = vmatprep.subr.mxu0 %v607
    %743 = vmatpush1.msra.mxu0 %v606
    %744 = vmatprep.subr.mxu0 %v611
    %745 = vmatpush1.msra.mxu0 %v610
    %746 = vmatprep.subr.mxu0 %v615
    %747 = vmatpush1.msra.mxu0 %v614
    %748 = vmatprep.subr.mxu0 %v619
    %749 = vmatpush1.msra.mxu0 %v618
    %750 = vmatprep.subr.mxu0 %v623
    %751 = vmatpush1.msra.mxu0 %v622
    %752 = vmatprep.subr.mxu0 %v627
    %753 = vmatpush1.msra.mxu0 %v626
    %754 = vmatprep.subr.mxu0 %v631
    %755 = vmatpush1.msra.mxu0 %v630
    %756 = vmatprep.subr.mxu0 %v635
    %757 = vmatpush1.msra.mxu0 %v634
    %758 = vmatprep.subr.mxu0 %v639
    %759 = vmatpush1.msra.mxu0 %v638
    %760 = vmatprep.mubr.f32.mxu0 %v475
    %761 = vmatmul.mubr.f32.gmra.mrb[0].mxu0 %v474
    %v762 = vpop.f32.mrb[0].mxu0
    %v763 = vadd.f32 %v664, %v762
    %v764 = vpop.f32.mrb[0].mxu0
    %v765 = vadd.f32 %v665, %v764
    %766 = vmatprep.mubr.f32.mxu0 %v477
    %767 = vmatmul.mubr.f32.gmra.mrb[0].mxu0 %v476
    %v768 = vpop.f32.mrb[0].mxu0
    %v769 = vadd.f32 %v668, %v768
    %v770 = vpop.f32.mrb[0].mxu0
    %v771 = vadd.f32 %v669, %v770
    %772 = vmatprep.mubr.f32.mxu0 %v479
    %773 = vmatmul.mubr.f32.gmra.mrb[0].mxu0 %v478
    %v774 = vpop.f32.mrb[0].mxu0
    %v775 = vadd.f32 %v672, %v774
    %v776 = vpop.f32.mrb[0].mxu0
    %v777 = vadd.f32 %v673, %v776
    %778 = vmatprep.mubr.f32.mxu0 %v481
    %779 = vmatmul.mubr.f32.gmra.mrb[0].mxu0 %v480
    %v780 = vpop.f32.mrb[0].mxu0
    %v781 = vadd.f32 %v676, %v780
    %v782 = vpop.f32.mrb[0].mxu0
    %v783 = vadd.f32 %v677, %v782
    %784 = vmatprep.mubr.f32.mxu0 %v483
    %785 = vmatmul.mubr.f32.gmra.mrb[0].mxu0 %v482
    %v786 = vpop.f32.mrb[0].mxu0
    %v787 = vadd.f32 %v680, %v786
    %v788 = vpop.f32.mrb[0].mxu0
    %v789 = vadd.f32 %v681, %v788
    %790 = vmatprep.mubr.f32.mxu0 %v485
    %791 = vmatmul.mubr.f32.gmra.mrb[0].mxu0 %v484
    %v792 = vpop.f32.mrb[0].mxu0
    %v793 = vadd.f32 %v684, %v792
    %v794 = vpop.f32.mrb[0].mxu0
    %v795 = vadd.f32 %v685, %v794
    %796 = vmatprep.mubr.f32.mxu0 %v487
    %797 = vmatmul.mubr.f32.gmra.mrb[0].mxu0 %v486
    %v798 = vpop.f32.mrb[0].mxu0
    %v799 = vadd.f32 %v688, %v798
    %v800 = vpop.f32.mrb[0].mxu0
    %v801 = vadd.f32 %v689, %v800
    %802 = vmatprep.mubr.f32.mxu0 %v489
    %803 = vmatmul.mubr.f32.gmra.mrb[0].mxu0 %v488
    %v804 = vpop.f32.mrb[0].mxu0
    %v805 = vadd.f32 %v692, %v804
    %v806 = vpop.f32.mrb[0].mxu0
    %v807 = vadd.f32 %v693, %v806
    %808 = vdwg.mxu0
    %809 = vmatprep.subr.mxu0 %v517
    %810 = vmatpush1.msra.mxu0 %v516
    %811 = vmatprep.subr.mxu0 %v521
    %812 = vmatpush1.msra.mxu0 %v520
    %813 = vmatprep.subr.mxu0 %v525
    %814 = vmatpush1.msra.mxu0 %v524
    %815 = vmatprep.subr.mxu0 %v529
    %816 = vmatpush1.msra.mxu0 %v528
    %817 = vmatprep.subr.mxu0 %v533
    %818 = vmatpush1.msra.mxu0 %v532
    %819 = vmatprep.subr.mxu0 %v537
    %820 = vmatpush1.msra.mxu0 %v536
    %821 = vmatprep.subr.mxu0 %v541
    %822 = vmatpush1.msra.mxu0 %v540
    %823 = vmatprep.subr.mxu0 %v545
    %824 = vmatpush1.msra.mxu0 %v544
    %825 = vmatprep.subr.mxu0 %v549
    %826 = vmatpush1.msra.mxu0 %v548
    %827 = vmatprep.subr.mxu0 %v553
    %828 = vmatpush1.msra.mxu0 %v552
    %829 = vmatprep.subr.mxu0 %v557
    %830 = vmatpush1.msra.mxu0 %v556
    %831 = vmatprep.subr.mxu0 %v561
    %832 = vmatpush1.msra.mxu0 %v560
    %833 = vmatprep.subr.mxu0 %v565
    %834 = vmatpush1.msra.mxu0 %v564
    %835 = vmatprep.subr.mxu0 %v569
    %836 = vmatpush1.msra.mxu0 %v568
    %837 = vmatprep.subr.mxu0 %v573
    %838 = vmatpush1.msra.mxu0 %v572
    %839 = vmatprep.subr.mxu0 %v577
    %840 = vmatpush1.msra.mxu0 %v576
    %841 = vmatprep.subr.mxu0 %v581
    %842 = vmatpush1.msra.mxu0 %v580
    %843 = vmatprep.subr.mxu0 %v585
    %844 = vmatpush1.msra.mxu0 %v584
    %845 = vmatprep.subr.mxu0 %v589
    %846 = vmatpush1.msra.mxu0 %v588
    %847 = vmatprep.subr.mxu0 %v593
    %848 = vmatpush1.msra.mxu0 %v592
    %849 = vmatprep.subr.mxu0 %v597
    %850 = vmatpush1.msra.mxu0 %v596
    %851 = vmatprep.subr.mxu0 %v601
    %852 = vmatpush1.msra.mxu0 %v600
    %853 = vmatprep.subr.mxu0 %v605
    %854 = vmatpush1.msra.mxu0 %v604
    %855 = vmatprep.subr.mxu0 %v609
    %856 = vmatpush1.msra.mxu0 %v608
    %857 = vmatprep.subr.mxu0 %v613
    %858 = vmatpush1.msra.mxu0 %v612
    %859 = vmatprep.subr.mxu0 %v617
    %860 = vmatpush1.msra.mxu0 %v616
    %861 = vmatprep.subr.mxu0 %v621
    %862 = vmatpush1.msra.mxu0 %v620
    %863 = vmatprep.subr.mxu0 %v625
    %864 = vmatpush1.msra.mxu0 %v624
    %865 = vmatprep.subr.mxu0 %v629
    %866 = vmatpush1.msra.mxu0 %v628
    %867 = vmatprep.subr.mxu0 %v633
    %868 = vmatpush1.msra.mxu0 %v632
    %869 = vmatprep.subr.mxu0 %v637
    %870 = vmatpush1.msra.mxu0 %v636
    %871 = vmatprep.subr.mxu0 %v641
    %872 = vmatpush1.msra.mxu0 %v640
    %873 = vmatprep.mubr.f32.mxu0 %v475
    %874 = vmatmul.mubr.f32.gmra.mrb[0].mxu0 %v474
    %v875 = vpop.f32.mrb[0].mxu0
    %v876 = vadd.f32 %v666, %v875
    %v877 = vpop.f32.mrb[0].mxu0
    %v878 = vadd.f32 %v667, %v877
    %879 = vmatprep.mubr.f32.mxu0 %v477
    %880 = vmatmul.mubr.f32.gmra.mrb[0].mxu0 %v476
    %v881 = vpop.f32.mrb[0].mxu0
    %v882 = vadd.f32 %v670, %v881
    %v883 = vpop.f32.mrb[0].mxu0
    %v884 = vadd.f32 %v671, %v883
    %885 = vmatprep.mubr.f32.mxu0 %v479
    %886 = vmatmul.mubr.f32.gmra.mrb[0].mxu0 %v478
    %v887 = vpop.f32.mrb[0].mxu0
    %v888 = vadd.f32 %v674, %v887
    %v889 = vpop.f32.mrb[0].mxu0
    %v890 = vadd.f32 %v675, %v889
    %891 = vmatprep.mubr.f32.mxu0 %v481
    %892 = vmatmul.mubr.f32.gmra.mrb[0].mxu0 %v480
    %v893 = vpop.f32.mrb[0].mxu0
    %v894 = vadd.f32 %v678, %v893
    %v895 = vpop.f32.mrb[0].mxu0
    %v896 = vadd.f32 %v679, %v895
    %897 = vmatprep.mubr.f32.mxu0 %v483
    %898 = vmatmul.mubr.f32.gmra.mrb[0].mxu0 %v482
    %v899 = vpop.f32.mrb[0].mxu0
    %v900 = vadd.f32 %v682, %v899
    %v901 = vpop.f32.mrb[0].mxu0
    %v902 = vadd.f32 %v683, %v901
    %903 = vmatprep.mubr.f32.mxu0 %v485
    %904 = vmatmul.mubr.f32.gmra.mrb[0].mxu0 %v484
    %v905 = vpop.f32.mrb[0].mxu0
    %v906 = vadd.f32 %v686, %v905
    %v907 = vpop.f32.mrb[0].mxu0
    %v908 = vadd.f32 %v687, %v907
    %909 = vmatprep.mubr.f32.mxu0 %v487
    %910 = vmatmul.mubr.f32.gmra.mrb[0].mxu0 %v486
    %v911 = vpop.f32.mrb[0].mxu0
    %v912 = vadd.f32 %v690, %v911
    %v913 = vpop.f32.mrb[0].mxu0
    %v914 = vadd.f32 %v691, %v913
    %915 = vmatprep.mubr.f32.mxu0 %v489
    %916 = vmatmul.mubr.f32.gmra.mrb[0].mxu0 %v488
    %v917 = vpop.f32.mrb[0].mxu0
    %v918 = vadd.f32 %v694, %v917
    %v919 = vpop.f32.mrb[0].mxu0
    %v920 = vadd.f32 %v695, %v919
    %921 = vdwg.mxu0
    %922 = vst [vmem:[#allocation2] sm:$0xff] %v763
    %923 = vst [vmem:[#allocation2 + $0x8] sm:$0xff] %v765
    %924 = vst [vmem:[#allocation2 + $0x10] sm:$0xff] %v876
    %925 = vst [vmem:[#allocation2 + $0x18] sm:$0xff] %v878
    %926 = vst [vmem:[#allocation2 + $0x20] sm:$0xff] %v769
    %927 = vst [vmem:[#allocation2 + $0x28] sm:$0xff] %v771
    %928 = vst [vmem:[#allocation2 + $0x30] sm:$0xff] %v882
    %929 = vst [vmem:[#allocation2 + $0x38] sm:$0xff] %v884
    %930 = vst [vmem:[#allocation2 + $0x40] sm:$0xff] %v775
    %931 = vst [vmem:[#allocation2 + $0x48] sm:$0xff] %v777
    %932 = vst [vmem:[#allocation2 + $0x50] sm:$0xff] %v888
    %933 = vst [vmem:[#allocation2 + $0x58] sm:$0xff] %v890
    %934 = vst [vmem:[#allocation2 + $0x60] sm:$0xff] %v781
    %935 = vst [vmem:[#allocation2 + $0x68] sm:$0xff] %v783
    %936 = vst [vmem:[#allocation2 + $0x70] sm:$0xff] %v894
    %937 = vst [vmem:[#allocation2 + $0x78] sm:$0xff] %v896
    %938 = vst [vmem:[#allocation2 + $0x80] sm:$0xff] %v787
    %939 = vst [vmem:[#allocation2 + $0x88] sm:$0xff] %v789
    %940 = vst [vmem:[#allocation2 + $0x90] sm:$0xff] %v900
    %941 = vst [vmem:[#allocation2 + $0x98] sm:$0xff] %v902
    %942 = vst [vmem:[#allocation2 + $0xa0] sm:$0xff] %v793
    %943 = vst [vmem:[#allocation2 + $0xa8] sm:$0xff] %v795
    %944 = vst [vmem:[#allocation2 + $0xb0] sm:$0xff] %v906
    %945 = vst [vmem:[#allocation2 + $0xb8] sm:$0xff] %v908
    %946 = vst [vmem:[#allocation2 + $0xc0] sm:$0xff] %v799
    %947 = vst [vmem:[#allocation2 + $0xc8] sm:$0xff] %v801
    %948 = vst [vmem:[#allocation2 + $0xd0] sm:$0xff] %v912
    %949 = vst [vmem:[#allocation2 + $0xd8] sm:$0xff] %v914
    %950 = vst [vmem:[#allocation2 + $0xe0] sm:$0xff] %v805
    %951 = vst [vmem:[#allocation2 + $0xe8] sm:$0xff] %v807
    %952 = vst [vmem:[#allocation2 + $0xf0] sm:$0xff] %v918
    %953 = vst [vmem:[#allocation2 + $0xf8] sm:$0xff] %v920
    %v954 = vld [vmem:[#allocation16] sm:$0xff]
    %v955 = vld [vmem:[#allocation16 + $0x8] sm:$0xff]
    %v956 = vld [vmem:[#allocation16 + $0x10] sm:$0xff]
    %v957 = vld [vmem:[#allocation16 + $0x18] sm:$0xff]
    %v958 = vld [vmem:[#allocation16 + $0x20] sm:$0xff]
    %v959 = vld [vmem:[#allocation16 + $0x28] sm:$0xff]
    %v960 = vld [vmem:[#allocation16 + $0x30] sm:$0xff]
    %v961 = vld [vmem:[#allocation16 + $0x38] sm:$0xff]
    %v962 = vld [vmem:[#allocation16 + $0x40] sm:$0xff]
    %v963 = vld [vmem:[#allocation16 + $0x48] sm:$0xff]
    %v964 = vld [vmem:[#allocation16 + $0x50] sm:$0xff]
    %v965 = vld [vmem:[#allocation16 + $0x58] sm:$0xff]
    %v966 = vld [vmem:[#allocation16 + $0x60] sm:$0xff]
    %v967 = vld [vmem:[#allocation16 + $0x68] sm:$0xff]
    %v968 = vld [vmem:[#allocation16 + $0x70] sm:$0xff]
    %v969 = vld [vmem:[#allocation16 + $0x78] sm:$0xff]
    %v970 = vld [vmem:[#allocation16 + $0x80] sm:$0xff]
    %v971 = vld [vmem:[#allocation16 + $0x88] sm:$0xff]
    %v972 = vld [vmem:[#allocation16 + $0x90] sm:$0xff]
    %v973 = vld [vmem:[#allocation16 + $0x98] sm:$0xff]
    %v974 = vld [vmem:[#allocation16 + $0xa0] sm:$0xff]
    %v975 = vld [vmem:[#allocation16 + $0xa8] sm:$0xff]
    %v976 = vld [vmem:[#allocation16 + $0xb0] sm:$0xff]
    %v977 = vld [vmem:[#allocation16 + $0xb8] sm:$0xff]
    %v978 = vld [vmem:[#allocation16 + $0xc0] sm:$0xff]
    %v979 = vld [vmem:[#allocation16 + $0xc8] sm:$0xff]
    %v980 = vld [vmem:[#allocation16 + $0xd0] sm:$0xff]
    %v981 = vld [vmem:[#allocation16 + $0xd8] sm:$0xff]
    %v982 = vld [vmem:[#allocation16 + $0xe0] sm:$0xff]
    %v983 = vld [vmem:[#allocation16 + $0xe8] sm:$0xff]
    %v984 = vld [vmem:[#allocation16 + $0xf0] sm:$0xff]
    %v985 = vld [vmem:[#allocation16 + $0xf8] sm:$0xff]
    %v986 = vld [vmem:[#allocation16 + $0x100] sm:$0xff]
    %v987 = vld [vmem:[#allocation16 + $0x108] sm:$0xff]
    %v988 = vld [vmem:[#allocation16 + $0x110] sm:$0xff]
    %v989 = vld [vmem:[#allocation16 + $0x118] sm:$0xff]
    %v990 = vld [vmem:[#allocation16 + $0x120] sm:$0xff]
    %v991 = vld [vmem:[#allocation16 + $0x128] sm:$0xff]
    %v992 = vld [vmem:[#allocation16 + $0x130] sm:$0xff]
    %v993 = vld [vmem:[#allocation16 + $0x138] sm:$0xff]
    %v994 = vld [vmem:[#allocation16 + $0x140] sm:$0xff]
    %v995 = vld [vmem:[#allocation16 + $0x148] sm:$0xff]
    %v996 = vld [vmem:[#allocation16 + $0x150] sm:$0xff]
    %v997 = vld [vmem:[#allocation16 + $0x158] sm:$0xff]
    %v998 = vld [vmem:[#allocation16 + $0x160] sm:$0xff]
    %v999 = vld [vmem:[#allocation16 + $0x168] sm:$0xff]
    %v1000 = vld [vmem:[#allocation16 + $0x170] sm:$0xff]
    %v1001 = vld [vmem:[#allocation16 + $0x178] sm:$0xff]
    %v1002 = vld [vmem:[#allocation16 + $0x180] sm:$0xff]
    %v1003 = vld [vmem:[#allocation16 + $0x188] sm:$0xff]
    %v1004 = vld [vmem:[#allocation16 + $0x190] sm:$0xff]
    %v1005 = vld [vmem:[#allocation16 + $0x198] sm:$0xff]
    %v1006 = vld [vmem:[#allocation16 + $0x1a0] sm:$0xff]
    %v1007 = vld [vmem:[#allocation16 + $0x1a8] sm:$0xff]
    %v1008 = vld [vmem:[#allocation16 + $0x1b0] sm:$0xff]
    %v1009 = vld [vmem:[#allocation16 + $0x1b8] sm:$0xff]
    %v1010 = vld [vmem:[#allocation16 + $0x1c0] sm:$0xff]
    %v1011 = vld [vmem:[#allocation16 + $0x1c8] sm:$0xff]
    %v1012 = vld [vmem:[#allocation16 + $0x1d0] sm:$0xff]
    %v1013 = vld [vmem:[#allocation16 + $0x1d8] sm:$0xff]
    %v1014 = vld [vmem:[#allocation16 + $0x1e0] sm:$0xff]
    %v1015 = vld [vmem:[#allocation16 + $0x1e8] sm:$0xff]
    %v1016 = vld [vmem:[#allocation16 + $0x1f0] sm:$0xff]
    %v1017 = vld [vmem:[#allocation16 + $0x1f8] sm:$0xff]
    %v1018 = vld [vmem:[#allocation16 + $0x200] sm:$0xff]
    %v1019 = vld [vmem:[#allocation16 + $0x208] sm:$0xff]
    %v1020 = vld [vmem:[#allocation16 + $0x210] sm:$0xff]
    %v1021 = vld [vmem:[#allocation16 + $0x218] sm:$0xff]
    %v1022 = vld [vmem:[#allocation16 + $0x220] sm:$0xff]
    %v1023 = vld [vmem:[#allocation16 + $0x228] sm:$0xff]
    %v1024 = vld [vmem:[#allocation16 + $0x230] sm:$0xff]
    %v1025 = vld [vmem:[#allocation16 + $0x238] sm:$0xff]
    %v1026 = vld [vmem:[#allocation16 + $0x240] sm:$0xff]
    %v1027 = vld [vmem:[#allocation16 + $0x248] sm:$0xff]
    %v1028 = vld [vmem:[#allocation16 + $0x250] sm:$0xff]
    %v1029 = vld [vmem:[#allocation16 + $0x258] sm:$0xff]
    %v1030 = vld [vmem:[#allocation16 + $0x260] sm:$0xff]
    %v1031 = vld [vmem:[#allocation16 + $0x268] sm:$0xff]
    %v1032 = vld [vmem:[#allocation16 + $0x270] sm:$0xff]
    %v1033 = vld [vmem:[#allocation16 + $0x278] sm:$0xff]
    %v1034 = vld [vmem:[#allocation16 + $0x280] sm:$0xff]
    %v1035 = vld [vmem:[#allocation16 + $0x288] sm:$0xff]
    %v1036 = vld [vmem:[#allocation16 + $0x290] sm:$0xff]
    %v1037 = vld [vmem:[#allocation16 + $0x298] sm:$0xff]
    %v1038 = vld [vmem:[#allocation16 + $0x2a0] sm:$0xff]
    %v1039 = vld [vmem:[#allocation16 + $0x2a8] sm:$0xff]
    %v1040 = vld [vmem:[#allocation16 + $0x2b0] sm:$0xff]
    %v1041 = vld [vmem:[#allocation16 + $0x2b8] sm:$0xff]
    %v1042 = vld [vmem:[#allocation16 + $0x2c0] sm:$0xff]
    %v1043 = vld [vmem:[#allocation16 + $0x2c8] sm:$0xff]
    %v1044 = vld [vmem:[#allocation16 + $0x2d0] sm:$0xff]
    %v1045 = vld [vmem:[#allocation16 + $0x2d8] sm:$0xff]
    %v1046 = vld [vmem:[#allocation16 + $0x2e0] sm:$0xff]
    %v1047 = vld [vmem:[#allocation16 + $0x2e8] sm:$0xff]
    %v1048 = vld [vmem:[#allocation16 + $0x2f0] sm:$0xff]
    %v1049 = vld [vmem:[#allocation16 + $0x2f8] sm:$0xff]
    %v1050 = vld [vmem:[#allocation16 + $0x300] sm:$0xff]
    %v1051 = vld [vmem:[#allocation16 + $0x308] sm:$0xff]
    %v1052 = vld [vmem:[#allocation16 + $0x310] sm:$0xff]
    %v1053 = vld [vmem:[#allocation16 + $0x318] sm:$0xff]
    %v1054 = vld [vmem:[#allocation16 + $0x320] sm:$0xff]
    %v1055 = vld [vmem:[#allocation16 + $0x328] sm:$0xff]
    %v1056 = vld [vmem:[#allocation16 + $0x330] sm:$0xff]
    %v1057 = vld [vmem:[#allocation16 + $0x338] sm:$0xff]
    %v1058 = vld [vmem:[#allocation16 + $0x340] sm:$0xff]
    %v1059 = vld [vmem:[#allocation16 + $0x348] sm:$0xff]
    %v1060 = vld [vmem:[#allocation16 + $0x350] sm:$0xff]
    %v1061 = vld [vmem:[#allocation16 + $0x358] sm:$0xff]
    %v1062 = vld [vmem:[#allocation16 + $0x360] sm:$0xff]
    %v1063 = vld [vmem:[#allocation16 + $0x368] sm:$0xff]
    %v1064 = vld [vmem:[#allocation16 + $0x370] sm:$0xff]
    %v1065 = vld [vmem:[#allocation16 + $0x378] sm:$0xff]
    %v1066 = vld [vmem:[#allocation16 + $0x380] sm:$0xff]
    %v1067 = vld [vmem:[#allocation16 + $0x388] sm:$0xff]
    %v1068 = vld [vmem:[#allocation16 + $0x390] sm:$0xff]
    %v1069 = vld [vmem:[#allocation16 + $0x398] sm:$0xff]
    %v1070 = vld [vmem:[#allocation16 + $0x3a0] sm:$0xff]
    %v1071 = vld [vmem:[#allocation16 + $0x3a8] sm:$0xff]
    %v1072 = vld [vmem:[#allocation16 + $0x3b0] sm:$0xff]
    %v1073 = vld [vmem:[#allocation16 + $0x3b8] sm:$0xff]
    %v1074 = vld [vmem:[#allocation16 + $0x3c0] sm:$0xff]
    %v1075 = vld [vmem:[#allocation16 + $0x3c8] sm:$0xff]
    %v1076 = vld [vmem:[#allocation16 + $0x3d0] sm:$0xff]
    %v1077 = vld [vmem:[#allocation16 + $0x3d8] sm:$0xff]
    %v1078 = vld [vmem:[#allocation16 + $0x3e0] sm:$0xff]
    %v1079 = vld [vmem:[#allocation16 + $0x3e8] sm:$0xff]
    %v1080 = vld [vmem:[#allocation16 + $0x3f0] sm:$0xff]
    %v1081 = vld [vmem:[#allocation16 + $0x3f8] sm:$0xff]
    %v1082 = vld [vmem:[#allocation16 + $0x400] sm:$0xff]
    %v1083 = vld [vmem:[#allocation16 + $0x408] sm:$0xff]
    %v1084 = vld [vmem:[#allocation16 + $0x410] sm:$0xff]
    %v1085 = vld [vmem:[#allocation16 + $0x418] sm:$0xff]
    %v1086 = vld [vmem:[#allocation16 + $0x420] sm:$0xff]
    %v1087 = vld [vmem:[#allocation16 + $0x428] sm:$0xff]
    %v1088 = vld [vmem:[#allocation16 + $0x430] sm:$0xff]
    %v1089 = vld [vmem:[#allocation16 + $0x438] sm:$0xff]
    %v1090 = vld [vmem:[#allocation16 + $0x440] sm:$0xff]
    %v1091 = vld [vmem:[#allocation16 + $0x448] sm:$0xff]
    %v1092 = vld [vmem:[#allocation16 + $0x450] sm:$0xff]
    %v1093 = vld [vmem:[#allocation16 + $0x458] sm:$0xff]
    %v1094 = vld [vmem:[#allocation16 + $0x460] sm:$0xff]
    %v1095 = vld [vmem:[#allocation16 + $0x468] sm:$0xff]
    %v1096 = vld [vmem:[#allocation16 + $0x470] sm:$0xff]
    %v1097 = vld [vmem:[#allocation16 + $0x478] sm:$0xff]
    %v1098 = vld [vmem:[#allocation16 + $0x480] sm:$0xff]
    %v1099 = vld [vmem:[#allocation16 + $0x488] sm:$0xff]
    %v1100 = vld [vmem:[#allocation16 + $0x490] sm:$0xff]
    %v1101 = vld [vmem:[#allocation16 + $0x498] sm:$0xff]
    %v1102 = vld [vmem:[#allocation16 + $0x4a0] sm:$0xff]
    %v1103 = vld [vmem:[#allocation16 + $0x4a8] sm:$0xff]
    %v1104 = vld [vmem:[#allocation16 + $0x4b0] sm:$0xff]
    %v1105 = vld [vmem:[#allocation16 + $0x4b8] sm:$0xff]
    %v1106 = vld [vmem:[#allocation16 + $0x4c0] sm:$0xff]
    %v1107 = vld [vmem:[#allocation16 + $0x4c8] sm:$0xff]
    %v1108 = vld [vmem:[#allocation16 + $0x4d0] sm:$0xff]
    %v1109 = vld [vmem:[#allocation16 + $0x4d8] sm:$0xff]
    %v1110 = vld [vmem:[#allocation16 + $0x4e0] sm:$0xff]
    %v1111 = vld [vmem:[#allocation16 + $0x4e8] sm:$0xff]
    %v1112 = vld [vmem:[#allocation16 + $0x4f0] sm:$0xff]
    %v1113 = vld [vmem:[#allocation16 + $0x4f8] sm:$0xff]
    %v1114 = vld [vmem:[#allocation16 + $0x500] sm:$0xff]
    %v1115 = vld [vmem:[#allocation16 + $0x508] sm:$0xff]
    %v1116 = vld [vmem:[#allocation16 + $0x510] sm:$0xff]
    %v1117 = vld [vmem:[#allocation16 + $0x518] sm:$0xff]
    %v1118 = vld [vmem:[#allocation16 + $0x520] sm:$0xff]
    %v1119 = vld [vmem:[#allocation16 + $0x528] sm:$0xff]
    %v1120 = vld [vmem:[#allocation16 + $0x530] sm:$0xff]
    %v1121 = vld [vmem:[#allocation16 + $0x538] sm:$0xff]
    %v1122 = vld [vmem:[#allocation16 + $0x540] sm:$0xff]
    %v1123 = vld [vmem:[#allocation16 + $0x548] sm:$0xff]
    %v1124 = vld [vmem:[#allocation16 + $0x550] sm:$0xff]
    %v1125 = vld [vmem:[#allocation16 + $0x558] sm:$0xff]
    %v1126 = vld [vmem:[#allocation16 + $0x560] sm:$0xff]
    %v1127 = vld [vmem:[#allocation16 + $0x568] sm:$0xff]
    %v1128 = vld [vmem:[#allocation16 + $0x570] sm:$0xff]
    %v1129 = vld [vmem:[#allocation16 + $0x578] sm:$0xff]
    %v1130 = vld [vmem:[#allocation16 + $0x580] sm:$0xff]
    %v1131 = vld [vmem:[#allocation16 + $0x588] sm:$0xff]
    %v1132 = vld [vmem:[#allocation16 + $0x590] sm:$0xff]
    %v1133 = vld [vmem:[#allocation16 + $0x598] sm:$0xff]
    %v1134 = vld [vmem:[#allocation16 + $0x5a0] sm:$0xff]
    %v1135 = vld [vmem:[#allocation16 + $0x5a8] sm:$0xff]
    %v1136 = vld [vmem:[#allocation16 + $0x5b0] sm:$0xff]
    %v1137 = vld [vmem:[#allocation16 + $0x5b8] sm:$0xff]
    %v1138 = vld [vmem:[#allocation16 + $0x5c0] sm:$0xff]
    %v1139 = vld [vmem:[#allocation16 + $0x5c8] sm:$0xff]
    %v1140 = vld [vmem:[#allocation16 + $0x5d0] sm:$0xff]
    %v1141 = vld [vmem:[#allocation16 + $0x5d8] sm:$0xff]
    %v1142 = vld [vmem:[#allocation16 + $0x5e0] sm:$0xff]
    %v1143 = vld [vmem:[#allocation16 + $0x5e8] sm:$0xff]
    %v1144 = vld [vmem:[#allocation16 + $0x5f0] sm:$0xff]
    %v1145 = vld [vmem:[#allocation16 + $0x5f8] sm:$0xff]
    %v1146 = vld [vmem:[#allocation16 + $0x600] sm:$0xff]
    %v1147 = vld [vmem:[#allocation16 + $0x608] sm:$0xff]
    %v1148 = vld [vmem:[#allocation16 + $0x610] sm:$0xff]
    %v1149 = vld [vmem:[#allocation16 + $0x618] sm:$0xff]
    %v1150 = vld [vmem:[#allocation16 + $0x620] sm:$0xff]
    %v1151 = vld [vmem:[#allocation16 + $0x628] sm:$0xff]
    %v1152 = vld [vmem:[#allocation16 + $0x630] sm:$0xff]
    %v1153 = vld [vmem:[#allocation16 + $0x638] sm:$0xff]
    %v1154 = vld [vmem:[#allocation16 + $0x640] sm:$0xff]
    %v1155 = vld [vmem:[#allocation16 + $0x648] sm:$0xff]
    %v1156 = vld [vmem:[#allocation16 + $0x650] sm:$0xff]
    %v1157 = vld [vmem:[#allocation16 + $0x658] sm:$0xff]
    %v1158 = vld [vmem:[#allocation16 + $0x660] sm:$0xff]
    %v1159 = vld [vmem:[#allocation16 + $0x668] sm:$0xff]
    %v1160 = vld [vmem:[#allocation16 + $0x670] sm:$0xff]
    %v1161 = vld [vmem:[#allocation16 + $0x678] sm:$0xff]
    %v1162 = vld [vmem:[#allocation16 + $0x680] sm:$0xff]
    %v1163 = vld [vmem:[#allocation16 + $0x688] sm:$0xff]
    %v1164 = vld [vmem:[#allocation16 + $0x690] sm:$0xff]
    %v1165 = vld [vmem:[#allocation16 + $0x698] sm:$0xff]
    %v1166 = vld [vmem:[#allocation16 + $0x6a0] sm:$0xff]
    %v1167 = vld [vmem:[#allocation16 + $0x6a8] sm:$0xff]
    %v1168 = vld [vmem:[#allocation16 + $0x6b0] sm:$0xff]
    %v1169 = vld [vmem:[#allocation16 + $0x6b8] sm:$0xff]
    %v1170 = vld [vmem:[#allocation16 + $0x6c0] sm:$0xff]
    %v1171 = vld [vmem:[#allocation16 + $0x6c8] sm:$0xff]
    %v1172 = vld [vmem:[#allocation16 + $0x6d0] sm:$0xff]
    %v1173 = vld [vmem:[#allocation16 + $0x6d8] sm:$0xff]
    %v1174 = vld [vmem:[#allocation16 + $0x6e0] sm:$0xff]
    %v1175 = vld [vmem:[#allocation16 + $0x6e8] sm:$0xff]
    %v1176 = vld [vmem:[#allocation16 + $0x6f0] sm:$0xff]
    %v1177 = vld [vmem:[#allocation16 + $0x6f8] sm:$0xff]
    %v1178 = vld [vmem:[#allocation16 + $0x700] sm:$0xff]
    %v1179 = vld [vmem:[#allocation16 + $0x708] sm:$0xff]
    %v1180 = vld [vmem:[#allocation16 + $0x710] sm:$0xff]
    %v1181 = vld [vmem:[#allocation16 + $0x718] sm:$0xff]
    %v1182 = vld [vmem:[#allocation16 + $0x720] sm:$0xff]
    %v1183 = vld [vmem:[#allocation16 + $0x728] sm:$0xff]
    %v1184 = vld [vmem:[#allocation16 + $0x730] sm:$0xff]
    %v1185 = vld [vmem:[#allocation16 + $0x738] sm:$0xff]
    %v1186 = vld [vmem:[#allocation16 + $0x740] sm:$0xff]
    %v1187 = vld [vmem:[#allocation16 + $0x748] sm:$0xff]
    %v1188 = vld [vmem:[#allocation16 + $0x750] sm:$0xff]
    %v1189 = vld [vmem:[#allocation16 + $0x758] sm:$0xff]
    %v1190 = vld [vmem:[#allocation16 + $0x760] sm:$0xff]
    %v1191 = vld [vmem:[#allocation16 + $0x768] sm:$0xff]
    %v1192 = vld [vmem:[#allocation16 + $0x770] sm:$0xff]
    %v1193 = vld [vmem:[#allocation16 + $0x778] sm:$0xff]
    %v1194 = vld [vmem:[#allocation16 + $0x780] sm:$0xff]
    %v1195 = vld [vmem:[#allocation16 + $0x788] sm:$0xff]
    %v1196 = vld [vmem:[#allocation16 + $0x790] sm:$0xff]
    %v1197 = vld [vmem:[#allocation16 + $0x798] sm:$0xff]
    %v1198 = vld [vmem:[#allocation16 + $0x7a0] sm:$0xff]
    %v1199 = vld [vmem:[#allocation16 + $0x7a8] sm:$0xff]
    %v1200 = vld [vmem:[#allocation16 + $0x7b0] sm:$0xff]
    %v1201 = vld [vmem:[#allocation16 + $0x7b8] sm:$0xff]
    %v1202 = vld [vmem:[#allocation16 + $0x7c0] sm:$0xff]
    %v1203 = vld [vmem:[#allocation16 + $0x7c8] sm:$0xff]
    %v1204 = vld [vmem:[#allocation16 + $0x7d0] sm:$0xff]
    %v1205 = vld [vmem:[#allocation16 + $0x7d8] sm:$0xff]
    %v1206 = vld [vmem:[#allocation16 + $0x7e0] sm:$0xff]
    %v1207 = vld [vmem:[#allocation16 + $0x7e8] sm:$0xff]
    %v1208 = vld [vmem:[#allocation16 + $0x7f0] sm:$0xff]
    %v1209 = vld [vmem:[#allocation16 + $0x7f8] sm:$0xff]
    %v1210 = vld [vmem:[%s8] sm:$0xf]
    %v1211 = vld [vmem:[%s9] sm:$0xf]
    %s1212 = sld [smem:[#allocation6]]
    %v1214 = vlaneseq
    %v1215 = vshrl.u32 %v1214, 7
    %v1216 = vsub.s32 0, %v1215
    %v1217 = vrot.slane %v1210, %v1216
    %v1218 = vlaneseq
    %v1219 = vshrl.u32 %v1218, 7
    %v1220 = vsub.s32 1, %v1219
    %v1221 = vrot.slane %v1210, %v1220
    %v1222 = vlaneseq
    %v1223 = vshrl.u32 %v1222, 7
    %v1224 = vsub.s32 2, %v1223
    %v1225 = vrot.slane %v1210, %v1224
    %v1226 = vlaneseq
    %v1227 = vshrl.u32 %v1226, 7
    %v1228 = vsub.s32 3, %v1227
    %v1229 = vrot.slane %v1210, %v1228
    %1234 = vmatprep.subr.mxu0 %v955
    %1235 = vmatpush1.msra.mxu0 %v954
    %1236 = vmatprep.subr.mxu0 %v959
    %1237 = vmatpush1.msra.mxu0 %v958
    %1238 = vmatprep.subr.mxu0 %v963
    %1239 = vmatpush1.msra.mxu0 %v962
    %1240 = vmatprep.subr.mxu0 %v967
    %1241 = vmatpush1.msra.mxu0 %v966
    %1242 = vmatprep.subr.mxu0 %v971
    %1243 = vmatpush1.msra.mxu0 %v970
    %1244 = vmatprep.subr.mxu0 %v975
    %1245 = vmatpush1.msra.mxu0 %v974
    %1246 = vmatprep.subr.mxu0 %v979
    %1247 = vmatpush1.msra.mxu0 %v978
    %1248 = vmatprep.subr.mxu0 %v983
    %1249 = vmatpush1.msra.mxu0 %v982
    %1250 = vmatprep.subr.mxu0 %v987
    %1251 = vmatpush1.msra.mxu0 %v986
    %1252 = vmatprep.subr.mxu0 %v991
    %1253 = vmatpush1.msra.mxu0 %v990
    %1254 = vmatprep.subr.mxu0 %v995
    %1255 = vmatpush1.msra.mxu0 %v994
    %1256 = vmatprep.subr.mxu0 %v999
    %1257 = vmatpush1.msra.mxu0 %v998
    %1258 = vmatprep.subr.mxu0 %v1003
    %1259 = vmatpush1.msra.mxu0 %v1002
    %1260 = vmatprep.subr.mxu0 %v1007
    %1261 = vmatpush1.msra.mxu0 %v1006
    %1262 = vmatprep.subr.mxu0 %v1011
    %1263 = vmatpush1.msra.mxu0 %v1010
    %1264 = vmatprep.subr.mxu0 %v1015
    %1265 = vmatpush1.msra.mxu0 %v1014
    %1266 = vmatprep.subr.mxu0 %v1019
    %1267 = vmatpush1.msra.mxu0 %v1018
    %1268 = vmatprep.subr.mxu0 %v1023
    %1269 = vmatpush1.msra.mxu0 %v1022
    %1270 = vmatprep.subr.mxu0 %v1027
    %1271 = vmatpush1.msra.mxu0 %v1026
    %1272 = vmatprep.subr.mxu0 %v1031
    %1273 = vmatpush1.msra.mxu0 %v1030
    %1274 = vmatprep.subr.mxu0 %v1035
    %1275 = vmatpush1.msra.mxu0 %v1034
    %1276 = vmatprep.subr.mxu0 %v1039
    %1277 = vmatpush1.msra.mxu0 %v1038
    %1278 = vmatprep.subr.mxu0 %v1043
    %1279 = vmatpush1.msra.mxu0 %v1042
    %1280 = vmatprep.subr.mxu0 %v1047
    %1281 = vmatpush1.msra.mxu0 %v1046
    %1282 = vmatprep.subr.mxu0 %v1051
    %1283 = vmatpush1.msra.mxu0 %v1050
    %1284 = vmatprep.subr.mxu0 %v1055
    %1285 = vmatpush1.msra.mxu0 %v1054
    %1286 = vmatprep.subr.mxu0 %v1059
    %1287 = vmatpush1.msra.mxu0 %v1058
    %1288 = vmatprep.subr.mxu0 %v1063
    %1289 = vmatpush1.msra.mxu0 %v1062
    %1290 = vmatprep.subr.mxu0 %v1067
    %1291 = vmatpush1.msra.mxu0 %v1066
    %1292 = vmatprep.subr.mxu0 %v1071
    %1293 = vmatpush1.msra.mxu0 %v1070
    %1294 = vmatprep.subr.mxu0 %v1075
    %1295 = vmatpush1.msra.mxu0 %v1074
    %1296 = vmatprep.subr.mxu0 %v1079
    %1297 = vmatpush1.msra.mxu0 %v1078
    %1298 = vmatprep.mubr.f32.mxu0 0.0
    %1299 = vmatmul.mubr.f32.gmra.mrb[0].mxu0 0.0
    %v1300 = vpop.f32.mrb[0].mxu0
    %v1301 = vadd.f32 %v1217, %v1300
    %v1302 = vpop.f32.mrb[0].mxu0
    %v1303 = vadd.f32 %v1221, %v1302
    %1304 = vdwg.mxu0
    %1305 = vmatprep.subr.mxu0 %v1083
    %1306 = vmatpush1.msra.mxu0 %v1082
    %1307 = vmatprep.subr.mxu0 %v1087
    %1308 = vmatpush1.msra.mxu0 %v1086
    %1309 = vmatprep.subr.mxu0 %v1091
    %1310 = vmatpush1.msra.mxu0 %v1090
    %1311 = vmatprep.subr.mxu0 %v1095
    %1312 = vmatpush1.msra.mxu0 %v1094
    %1313 = vmatprep.subr.mxu0 %v1099
    %1314 = vmatpush1.msra.mxu0 %v1098
    %1315 = vmatprep.subr.mxu0 %v1103
    %1316 = vmatpush1.msra.mxu0 %v1102
    %1317 = vmatprep.subr.mxu0 %v1107
    %1318 = vmatpush1.msra.mxu0 %v1106
    %1319 = vmatprep.subr.mxu0 %v1111
    %1320 = vmatpush1.msra.mxu0 %v1110
    %1321 = vmatprep.subr.mxu0 %v1115
    %1322 = vmatpush1.msra.mxu0 %v1114
    %1323 = vmatprep.subr.mxu0 %v1119
    %1324 = vmatpush1.msra.mxu0 %v1118
    %1325 = vmatprep.subr.mxu0 %v1123
    %1326 = vmatpush1.msra.mxu0 %v1122
    %1327 = vmatprep.subr.mxu0 %v1127
    %1328 = vmatpush1.msra.mxu0 %v1126
    %1329 = vmatprep.subr.mxu0 %v1131
    %1330 = vmatpush1.msra.mxu0 %v1130
    %1331 = vmatprep.subr.mxu0 %v1135
    %1332 = vmatpush1.msra.mxu0 %v1134
    %1333 = vmatprep.subr.mxu0 %v1139
    %1334 = vmatpush1.msra.mxu0 %v1138
    %1335 = vmatprep.subr.mxu0 %v1143
    %1336 = vmatpush1.msra.mxu0 %v1142
    %1337 = vmatprep.subr.mxu0 %v1147
    %1338 = vmatpush1.msra.mxu0 %v1146
    %1339 = vmatprep.subr.mxu0 %v1151
    %1340 = vmatpush1.msra.mxu0 %v1150
    %1341 = vmatprep.subr.mxu0 %v1155
    %1342 = vmatpush1.msra.mxu0 %v1154
    %1343 = vmatprep.subr.mxu0 %v1159
    %1344 = vmatpush1.msra.mxu0 %v1158
    %1345 = vmatprep.subr.mxu0 %v1163
    %1346 = vmatpush1.msra.mxu0 %v1162
    %1347 = vmatprep.subr.mxu0 %v1167
    %1348 = vmatpush1.msra.mxu0 %v1166
    %1349 = vmatprep.subr.mxu0 %v1171
    %1350 = vmatpush1.msra.mxu0 %v1170
    %1351 = vmatprep.subr.mxu0 %v1175
    %1352 = vmatpush1.msra.mxu0 %v1174
    %1353 = vmatprep.subr.mxu0 %v1179
    %1354 = vmatpush1.msra.mxu0 %v1178
    %1355 = vmatprep.subr.mxu0 %v1183
    %1356 = vmatpush1.msra.mxu0 %v1182
    %1357 = vmatprep.subr.mxu0 %v1187
    %1358 = vmatpush1.msra.mxu0 %v1186
    %1359 = vmatprep.subr.mxu0 %v1191
    %1360 = vmatpush1.msra.mxu0 %v1190
    %1361 = vmatprep.subr.mxu0 %v1195
    %1362 = vmatpush1.msra.mxu0 %v1194
    %1363 = vmatprep.subr.mxu0 %v1199
    %1364 = vmatpush1.msra.mxu0 %v1198
    %1365 = vmatprep.subr.mxu0 %v1203
    %1366 = vmatpush1.msra.mxu0 %v1202
    %1367 = vmatprep.subr.mxu0 %v1207
    %1368 = vmatpush1.msra.mxu0 %v1206
    %1369 = vmatprep.mubr.f32.mxu0 0.0
    %1370 = vmatmul.mubr.f32.gmra.mrb[0].mxu0 0.0
    %v1371 = vpop.f32.mrb[0].mxu0
    %v1372 = vadd.f32 %v1301, %v1371
    %v1373 = vpop.f32.mrb[0].mxu0
    %v1374 = vadd.f32 %v1303, %v1373
    %1375 = vdwg.mxu0
    %1376 = vmatprep.subr.mxu0 %v957
    %1377 = vmatpush1.msra.mxu0 %v956
    %1378 = vmatprep.subr.mxu0 %v961
    %1379 = vmatpush1.msra.mxu0 %v960
    %1380 = vmatprep.subr.mxu0 %v965
    %1381 = vmatpush1.msra.mxu0 %v964
    %1382 = vmatprep.subr.mxu0 %v969
    %1383 = vmatpush1.msra.mxu0 %v968
    %1384 = vmatprep.subr.mxu0 %v973
    %1385 = vmatpush1.msra.mxu0 %v972
    %1386 = vmatprep.subr.mxu0 %v977
    %1387 = vmatpush1.msra.mxu0 %v976
    %1388 = vmatprep.subr.mxu0 %v981
    %1389 = vmatpush1.msra.mxu0 %v980
    %1390 = vmatprep.subr.mxu0 %v985
    %1391 = vmatpush1.msra.mxu0 %v984
    %1392 = vmatprep.subr.mxu0 %v989
    %1393 = vmatpush1.msra.mxu0 %v988
    %1394 = vmatprep.subr.mxu0 %v993
    %1395 = vmatpush1.msra.mxu0 %v992
    %1396 = vmatprep.subr.mxu0 %v997
    %1397 = vmatpush1.msra.mxu0 %v996
    %1398 = vmatprep.subr.mxu0 %v1001
    %1399 = vmatpush1.msra.mxu0 %v1000
    %1400 = vmatprep.subr.mxu0 %v1005
    %1401 = vmatpush1.msra.mxu0 %v1004
    %1402 = vmatprep.subr.mxu0 %v1009
    %1403 = vmatpush1.msra.mxu0 %v1008
    %1404 = vmatprep.subr.mxu0 %v1013
    %1405 = vmatpush1.msra.mxu0 %v1012
    %1406 = vmatprep.subr.mxu0 %v1017
    %1407 = vmatpush1.msra.mxu0 %v1016
    %1408 = vmatprep.subr.mxu0 %v1021
    %1409 = vmatpush1.msra.mxu0 %v1020
    %1410 = vmatprep.subr.mxu0 %v1025
    %1411 = vmatpush1.msra.mxu0 %v1024
    %1412 = vmatprep.subr.mxu0 %v1029
    %1413 = vmatpush1.msra.mxu0 %v1028
    %1414 = vmatprep.subr.mxu0 %v1033
    %1415 = vmatpush1.msra.mxu0 %v1032
    %1416 = vmatprep.subr.mxu0 %v1037
    %1417 = vmatpush1.msra.mxu0 %v1036
    %1418 = vmatprep.subr.mxu0 %v1041
    %1419 = vmatpush1.msra.mxu0 %v1040
    %1420 = vmatprep.subr.mxu0 %v1045
    %1421 = vmatpush1.msra.mxu0 %v1044
    %1422 = vmatprep.subr.mxu0 %v1049
    %1423 = vmatpush1.msra.mxu0 %v1048
    %1424 = vmatprep.subr.mxu0 %v1053
    %1425 = vmatpush1.msra.mxu0 %v1052
    %1426 = vmatprep.subr.mxu0 %v1057
    %1427 = vmatpush1.msra.mxu0 %v1056
    %1428 = vmatprep.subr.mxu0 %v1061
    %1429 = vmatpush1.msra.mxu0 %v1060
    %1430 = vmatprep.subr.mxu0 %v1065
    %1431 = vmatpush1.msra.mxu0 %v1064
    %1432 = vmatprep.subr.mxu0 %v1069
    %1433 = vmatpush1.msra.mxu0 %v1068
    %1434 = vmatprep.subr.mxu0 %v1073
    %1435 = vmatpush1.msra.mxu0 %v1072
    %1436 = vmatprep.subr.mxu0 %v1077
    %1437 = vmatpush1.msra.mxu0 %v1076
    %1438 = vmatprep.subr.mxu0 %v1081
    %1439 = vmatpush1.msra.mxu0 %v1080
    %1440 = vmatprep.mubr.f32.mxu0 0.0
    %1441 = vmatmul.mubr.f32.gmra.mrb[0].mxu0 0.0
    %v1442 = vpop.f32.mrb[0].mxu0
    %v1443 = vadd.f32 %v1225, %v1442
    %v1444 = vpop.f32.mrb[0].mxu0
    %v1445 = vadd.f32 %v1229, %v1444
    %1446 = vdwg.mxu0
    %1447 = vmatprep.subr.mxu0 %v1085
    %1448 = vmatpush1.msra.mxu0 %v1084
    %1449 = vmatprep.subr.mxu0 %v1089
    %1450 = vmatpush1.msra.mxu0 %v1088
    %1451 = vmatprep.subr.mxu0 %v1093
    %1452 = vmatpush1.msra.mxu0 %v1092
    %1453 = vmatprep.subr.mxu0 %v1097
    %1454 = vmatpush1.msra.mxu0 %v1096
    %1455 = vmatprep.subr.mxu0 %v1101
    %1456 = vmatpush1.msra.mxu0 %v1100
    %1457 = vmatprep.subr.mxu0 %v1105
    %1458 = vmatpush1.msra.mxu0 %v1104
    %1459 = vmatprep.subr.mxu0 %v1109
    %1460 = vmatpush1.msra.mxu0 %v1108
    %1461 = vmatprep.subr.mxu0 %v1113
    %1462 = vmatpush1.msra.mxu0 %v1112
    %1463 = vmatprep.subr.mxu0 %v1117
    %1464 = vmatpush1.msra.mxu0 %v1116
    %1465 = vmatprep.subr.mxu0 %v1121
    %1466 = vmatpush1.msra.mxu0 %v1120
    %1467 = vmatprep.subr.mxu0 %v1125
    %1468 = vmatpush1.msra.mxu0 %v1124
    %1469 = vmatprep.subr.mxu0 %v1129
    %1470 = vmatpush1.msra.mxu0 %v1128
    %1471 = vmatprep.subr.mxu0 %v1133
    %1472 = vmatpush1.msra.mxu0 %v1132
    %1473 = vmatprep.subr.mxu0 %v1137
    %1474 = vmatpush1.msra.mxu0 %v1136
    %1475 = vmatprep.subr.mxu0 %v1141
    %1476 = vmatpush1.msra.mxu0 %v1140
    %1477 = vmatprep.subr.mxu0 %v1145
    %1478 = vmatpush1.msra.mxu0 %v1144
    %1479 = vmatprep.subr.mxu0 %v1149
    %1480 = vmatpush1.msra.mxu0 %v1148
    %1481 = vmatprep.subr.mxu0 %v1153
    %1482 = vmatpush1.msra.mxu0 %v1152
    %1483 = vmatprep.subr.mxu0 %v1157
    %1484 = vmatpush1.msra.mxu0 %v1156
    %1485 = vmatprep.subr.mxu0 %v1161
    %1486 = vmatpush1.msra.mxu0 %v1160
    %1487 = vmatprep.subr.mxu0 %v1165
    %1488 = vmatpush1.msra.mxu0 %v1164
    %1489 = vmatprep.subr.mxu0 %v1169
    %1490 = vmatpush1.msra.mxu0 %v1168
    %1491 = vmatprep.subr.mxu0 %v1173
    %1492 = vmatpush1.msra.mxu0 %v1172
    %1493 = vmatprep.subr.mxu0 %v1177
    %1494 = vmatpush1.msra.mxu0 %v1176
    %1495 = vmatprep.subr.mxu0 %v1181
    %1496 = vmatpush1.msra.mxu0 %v1180
    %1497 = vmatprep.subr.mxu0 %v1185
    %1498 = vmatpush1.msra.mxu0 %v1184
    %1499 = vmatprep.subr.mxu0 %v1189
    %1500 = vmatpush1.msra.mxu0 %v1188
    %1501 = vmatprep.subr.mxu0 %v1193
    %1502 = vmatpush1.msra.mxu0 %v1192
    %1503 = vmatprep.subr.mxu0 %v1197
    %1504 = vmatpush1.msra.mxu0 %v1196
    %1505 = vmatprep.subr.mxu0 %v1201
    %1506 = vmatpush1.msra.mxu0 %v1200
    %1507 = vmatprep.subr.mxu0 %v1205
    %1508 = vmatpush1.msra.mxu0 %v1204
    %1509 = vmatprep.subr.mxu0 %v1209
    %1510 = vmatpush1.msra.mxu0 %v1208
    %1511 = vmatprep.mubr.f32.mxu0 0.0
    %1512 = vmatmul.mubr.f32.gmra.mrb[0].mxu0 0.0
    %v1513 = vpop.f32.mrb[0].mxu0
    %v1514 = vadd.f32 %v1443, %v1513
    %v1515 = vpop.f32.mrb[0].mxu0
    %v1516 = vadd.f32 %v1445, %v1515
    %1517 = vdwg.mxu0
    %v1518 = vtanh.pop %v1372
    %v1519 = vtanh.pop %v1374
    %v1520 = vtanh.pop %v1514
    %v1521 = vtanh.pop %v1516
    %1522 = vst [vmem:[#allocation3] sm:$0xff] %v1518
    %1523 = vst [vmem:[#allocation3 + $0x8] sm:$0xff] %v1519
    %1524 = vst [vmem:[#allocation3 + $0x10] sm:$0xff] %v1520
    %1525 = vst [vmem:[#allocation3 + $0x18] sm:$0xff] %v1521
    %v1527 = vlaneseq
    %v1528 = vshrl.u32 %v1527, 7
    %v1529 = vsub.s32 0, %v1528
    %v1530 = vrot.slane %v1211, %v1529
    %v1531 = vlaneseq
    %v1532 = vshrl.u32 %v1531, 7
    %v1533 = vsub.s32 1, %v1532
    %v1534 = vrot.slane %v1211, %v1533
    %v1535 = vlaneseq
    %v1536 = vshrl.u32 %v1535, 7
    %v1537 = vsub.s32 2, %v1536
    %v1538 = vrot.slane %v1211, %v1537
    %v1539 = vlaneseq
    %v1540 = vshrl.u32 %v1539, 7
    %v1541 = vsub.s32 3, %v1540
    %v1542 = vrot.slane %v1211, %v1541
    %v1547 = vmul.f32 %v1518, %v1530
    %v1548 = vmul.f32 %v1519, %v1534
    %v1549 = vmul.f32 %v1520, %v1538
    %v1550 = vmul.f32 %v1521, %v1542
    %v1551 = vadd.f32 %v1547, %v1548
    %v1552 = vadd.f32 %v1551, %v1549
    %v1553 = vadd.f32 %v1552, %v1550
    %1554 = vadd.xlane.f32.xlu0 %v1553
    %v1555 = vpop.xlane.xlu0 %1554
    %v1556 = vstv %s1212
    %v1557 = vadd.f32 %v1555, %v1556
    %v1558 = vxor.u32 %v1557, 2147483648
    %v1559 = vmul.f32 %v1558, 1.442695
    %v1560 = vpow.pop %v1559
    %v1561 = vadd.f32 %v1560, 1.0
    %v1562 = vrcp.pop %v1561
    %v1563 = vmul.f32 1.0, %v1562
    %v1564 = vld [vmem:[#allocation2] sm:$0xff]
    %v1565 = vld [vmem:[#allocation2 + $0x8] sm:$0xff]
    %v1566 = vld [vmem:[#allocation2 + $0x10] sm:$0xff]
    %v1567 = vld [vmem:[#allocation2 + $0x18] sm:$0xff]
    %v1568 = vmul.f32 %v1563, %v1564
    %v1569 = vmul.f32 %v1563, %v1565
    %v1570 = vmul.f32 %v1563, %v1566
    %v1571 = vmul.f32 %v1563, %v1567
    %1572 = vmatprep.subr.mxu0 %v955
    %1573 = vmatpush1.msra.mxu0 %v954
    %1574 = vmatprep.subr.mxu0 %v959
    %1575 = vmatpush1.msra.mxu0 %v958
    %1576 = vmatprep.subr.mxu0 %v963
    %1577 = vmatpush1.msra.mxu0 %v962
    %1578 = vmatprep.subr.mxu0 %v967
    %1579 = vmatpush1.msra.mxu0 %v966
    %1580 = vmatprep.subr.mxu0 %v971
    %1581 = vmatpush1.msra.mxu0 %v970
    %1582 = vmatprep.subr.mxu0 %v975
    %1583 = vmatpush1.msra.mxu0 %v974
    %1584 = vmatprep.subr.mxu0 %v979
    %1585 = vmatpush1.msra.mxu0 %v978
    %1586 = vmatprep.subr.mxu0 %v983
    %1587 = vmatpush1.msra.mxu0 %v982
    %1588 = vmatprep.subr.mxu0 %v987
    %1589 = vmatpush1.msra.mxu0 %v986
    %1590 = vmatprep.subr.mxu0 %v991
    %1591 = vmatpush1.msra.mxu0 %v990
    %1592 = vmatprep.subr.mxu0 %v995
    %1593 = vmatpush1.msra.mxu0 %v994
    %1594 = vmatprep.subr.mxu0 %v999
    %1595 = vmatpush1.msra.mxu0 %v998
    %1596 = vmatprep.subr.mxu0 %v1003
    %1597 = vmatpush1.msra.mxu0 %v1002
    %1598 = vmatprep.subr.mxu0 %v1007
    %1599 = vmatpush1.msra.mxu0 %v1006
    %1600 = vmatprep.subr.mxu0 %v1011
    %1601 = vmatpush1.msra.mxu0 %v1010
    %1602 = vmatprep.subr.mxu0 %v1015
    %1603 = vmatpush1.msra.mxu0 %v1014
    %1604 = vmatprep.subr.mxu0 %v1019
    %1605 = vmatpush1.msra.mxu0 %v1018
    %1606 = vmatprep.subr.mxu0 %v1023
    %1607 = vmatpush1.msra.mxu0 %v1022
    %1608 = vmatprep.subr.mxu0 %v1027
    %1609 = vmatpush1.msra.mxu0 %v1026
    %1610 = vmatprep.subr.mxu0 %v1031
    %1611 = vmatpush1.msra.mxu0 %v1030
    %1612 = vmatprep.subr.mxu0 %v1035
    %1613 = vmatpush1.msra.mxu0 %v1034
    %1614 = vmatprep.subr.mxu0 %v1039
    %1615 = vmatpush1.msra.mxu0 %v1038
    %1616 = vmatprep.subr.mxu0 %v1043
    %1617 = vmatpush1.msra.mxu0 %v1042
    %1618 = vmatprep.subr.mxu0 %v1047
    %1619 = vmatpush1.msra.mxu0 %v1046
    %1620 = vmatprep.subr.mxu0 %v1051
    %1621 = vmatpush1.msra.mxu0 %v1050
    %1622 = vmatprep.subr.mxu0 %v1055
    %1623 = vmatpush1.msra.mxu0 %v1054
    %1624 = vmatprep.subr.mxu0 %v1059
    %1625 = vmatpush1.msra.mxu0 %v1058
    %1626 = vmatprep.subr.mxu0 %v1063
    %1627 = vmatpush1.msra.mxu0 %v1062
    %1628 = vmatprep.subr.mxu0 %v1067
    %1629 = vmatpush1.msra.mxu0 %v1066
    %1630 = vmatprep.subr.mxu0 %v1071
    %1631 = vmatpush1.msra.mxu0 %v1070
    %1632 = vmatprep.subr.mxu0 %v1075
    %1633 = vmatpush1.msra.mxu0 %v1074
    %1634 = vmatprep.subr.mxu0 %v1079
    %1635 = vmatpush1.msra.mxu0 %v1078
    %1636 = vmatprep.mubr.f32.mxu0 %v1519
    %1637 = vmatmul.mubr.f32.gmra.mrb[0].mxu0 %v1518
    %v1638 = vpop.f32.mrb[0].mxu0
    %v1639 = vadd.f32 0.0, %v1638
    %v1640 = vpop.f32.mrb[0].mxu0
    %v1641 = vadd.f32 0.0, %v1640
    %1642 = vdwg.mxu0
    %1643 = vmatprep.subr.mxu0 %v1083
    %1644 = vmatpush1.msra.mxu0 %v1082
    %1645 = vmatprep.subr.mxu0 %v1087
    %1646 = vmatpush1.msra.mxu0 %v1086
    %1647 = vmatprep.subr.mxu0 %v1091
    %1648 = vmatpush1.msra.mxu0 %v1090
    %1649 = vmatprep.subr.mxu0 %v1095
    %1650 = vmatpush1.msra.mxu0 %v1094
    %1651 = vmatprep.subr.mxu0 %v1099
    %1652 = vmatpush1.msra.mxu0 %v1098
    %1653 = vmatprep.subr.mxu0 %v1103
    %1654 = vmatpush1.msra.mxu0 %v1102
    %1655 = vmatprep.subr.mxu0 %v1107
    %1656 = vmatpush1.msra.mxu0 %v1106
    %1657 = vmatprep.subr.mxu0 %v1111
    %1658 = vmatpush1.msra.mxu0 %v1110
    %1659 = vmatprep.subr.mxu0 %v1115
    %1660 = vmatpush1.msra.mxu0 %v1114
    %1661 = vmatprep.subr.mxu0 %v1119
    %1662 = vmatpush1.msra.mxu0 %v1118
    %1663 = vmatprep.subr.mxu0 %v1123
    %1664 = vmatpush1.msra.mxu0 %v1122
    %1665 = vmatprep.subr.mxu0 %v1127
    %1666 = vmatpush1.msra.mxu0 %v1126
    %1667 = vmatprep.subr.mxu0 %v1131
    %1668 = vmatpush1.msra.mxu0 %v1130
    %1669 = vmatprep.subr.mxu0 %v1135
    %1670 = vmatpush1.msra.mxu0 %v1134
    %1671 = vmatprep.subr.mxu0 %v1139
    %1672 = vmatpush1.msra.mxu0 %v1138
    %1673 = vmatprep.subr.mxu0 %v1143
    %1674 = vmatpush1.msra.mxu0 %v1142
    %1675 = vmatprep.subr.mxu0 %v1147
    %1676 = vmatpush1.msra.mxu0 %v1146
    %1677 = vmatprep.subr.mxu0 %v1151
    %1678 = vmatpush1.msra.mxu0 %v1150
    %1679 = vmatprep.subr.mxu0 %v1155
    %1680 = vmatpush1.msra.mxu0 %v1154
    %1681 = vmatprep.subr.mxu0 %v1159
    %1682 = vmatpush1.msra.mxu0 %v1158
    %1683 = vmatprep.subr.mxu0 %v1163
    %1684 = vmatpush1.msra.mxu0 %v1162
    %1685 = vmatprep.subr.mxu0 %v1167
    %1686 = vmatpush1.msra.mxu0 %v1166
    %1687 = vmatprep.subr.mxu0 %v1171
    %1688 = vmatpush1.msra.mxu0 %v1170
    %1689 = vmatprep.subr.mxu0 %v1175
    %1690 = vmatpush1.msra.mxu0 %v1174
    %1691 = vmatprep.subr.mxu0 %v1179
    %1692 = vmatpush1.msra.mxu0 %v1178
    %1693 = vmatprep.subr.mxu0 %v1183
    %1694 = vmatpush1.msra.mxu0 %v1182
    %1695 = vmatprep.subr.mxu0 %v1187
    %1696 = vmatpush1.msra.mxu0 %v1186
    %1697 = vmatprep.subr.mxu0 %v1191
    %1698 = vmatpush1.msra.mxu0 %v1190
    %1699 = vmatprep.subr.mxu0 %v1195
    %1700 = vmatpush1.msra.mxu0 %v1194
    %1701 = vmatprep.subr.mxu0 %v1199
    %1702 = vmatpush1.msra.mxu0 %v1198
    %1703 = vmatprep.subr.mxu0 %v1203
    %1704 = vmatpush1.msra.mxu0 %v1202
    %1705 = vmatprep.subr.mxu0 %v1207
    %1706 = vmatpush1.msra.mxu0 %v1206
    %1707 = vmatprep.mubr.f32.mxu0 %v1521
    %1708 = vmatmul.mubr.f32.gmra.mrb[0].mxu0 %v1520
    %v1709 = vpop.f32.mrb[0].mxu0
    %v1710 = vadd.f32 %v1639, %v1709
    %v1711 = vpop.f32.mrb[0].mxu0
    %v1712 = vadd.f32 %v1641, %v1711
    %1713 = vdwg.mxu0
    %1714 = vmatprep.subr.mxu0 %v957
    %1715 = vmatpush1.msra.mxu0 %v956
    %1716 = vmatprep.subr.mxu0 %v961
    %1717 = vmatpush1.msra.mxu0 %v960
    %1718 = vmatprep.subr.mxu0 %v965
    %1719 = vmatpush1.msra.mxu0 %v964
    %1720 = vmatprep.subr.mxu0 %v969
    %1721 = vmatpush1.msra.mxu0 %v968
    %1722 = vmatprep.subr.mxu0 %v973
    %1723 = vmatpush1.msra.mxu0 %v972
    %1724 = vmatprep.subr.mxu0 %v977
    %1725 = vmatpush1.msra.mxu0 %v976
    %1726 = vmatprep.subr.mxu0 %v981
    %1727 = vmatpush1.msra.mxu0 %v980
    %1728 = vmatprep.subr.mxu0 %v985
    %1729 = vmatpush1.msra.mxu0 %v984
    %1730 = vmatprep.subr.mxu0 %v989
    %1731 = vmatpush1.msra.mxu0 %v988
    %1732 = vmatprep.subr.mxu0 %v993
    %1733 = vmatpush1.msra.mxu0 %v992
    %1734 = vmatprep.subr.mxu0 %v997
    %1735 = vmatpush1.msra.mxu0 %v996
    %1736 = vmatprep.subr.mxu0 %v1001
    %1737 = vmatpush1.msra.mxu0 %v1000
    %1738 = vmatprep.subr.mxu0 %v1005
    %1739 = vmatpush1.msra.mxu0 %v1004
    %1740 = vmatprep.subr.mxu0 %v1009
    %1741 = vmatpush1.msra.mxu0 %v1008
    %1742 = vmatprep.subr.mxu0 %v1013
    %1743 = vmatpush1.msra.mxu0 %v1012
    %1744 = vmatprep.subr.mxu0 %v1017
    %1745 = vmatpush1.msra.mxu0 %v1016
    %1746 = vmatprep.subr.mxu0 %v1021
    %1747 = vmatpush1.msra.mxu0 %v1020
    %1748 = vmatprep.subr.mxu0 %v1025
    %1749 = vmatpush1.msra.mxu0 %v1024
    %1750 = vmatprep.subr.mxu0 %v1029
    %1751 = vmatpush1.msra.mxu0 %v1028
    %1752 = vmatprep.subr.mxu0 %v1033
    %1753 = vmatpush1.msra.mxu0 %v1032
    %1754 = vmatprep.subr.mxu0 %v1037
    %1755 = vmatpush1.msra.mxu0 %v1036
    %1756 = vmatprep.subr.mxu0 %v1041
    %1757 = vmatpush1.msra.mxu0 %v1040
    %1758 = vmatprep.subr.mxu0 %v1045
    %1759 = vmatpush1.msra.mxu0 %v1044
    %1760 = vmatprep.subr.mxu0 %v1049
    %1761 = vmatpush1.msra.mxu0 %v1048
    %1762 = vmatprep.subr.mxu0 %v1053
    %1763 = vmatpush1.msra.mxu0 %v1052
    %1764 = vmatprep.subr.mxu0 %v1057
    %1765 = vmatpush1.msra.mxu0 %v1056
    %1766 = vmatprep.subr.mxu0 %v1061
    %1767 = vmatpush1.msra.mxu0 %v1060
    %1768 = vmatprep.subr.mxu0 %v1065
    %1769 = vmatpush1.msra.mxu0 %v1064
    %1770 = vmatprep.subr.mxu0 %v1069
    %1771 = vmatpush1.msra.mxu0 %v1068
    %1772 = vmatprep.subr.mxu0 %v1073
    %1773 = vmatpush1.msra.mxu0 %v1072
    %1774 = vmatprep.subr.mxu0 %v1077
    %1775 = vmatpush1.msra.mxu0 %v1076
    %1776 = vmatprep.subr.mxu0 %v1081
    %1777 = vmatpush1.msra.mxu0 %v1080
    %1778 = vmatprep.mubr.f32.mxu0 %v1519
    %1779 = vmatmul.mubr.f32.gmra.mrb[0].mxu0 %v1518
    %v1780 = vpop.f32.mrb[0].mxu0
    %v1781 = vadd.f32 0.0, %v1780
    %v1782 = vpop.f32.mrb[0].mxu0
    %v1783 = vadd.f32 0.0, %v1782
    %1784 = vdwg.mxu0
    %1785 = vmatprep.subr.mxu0 %v1085
    %1786 = vmatpush1.msra.mxu0 %v1084
    %1787 = vmatprep.subr.mxu0 %v1089
    %1788 = vmatpush1.msra.mxu0 %v1088
    %1789 = vmatprep.subr.mxu0 %v1093
    %1790 = vmatpush1.msra.mxu0 %v1092
    %1791 = vmatprep.subr.mxu0 %v1097
    %1792 = vmatpush1.msra.mxu0 %v1096
    %1793 = vmatprep.subr.mxu0 %v1101
    %1794 = vmatpush1.msra.mxu0 %v1100
    %1795 = vmatprep.subr.mxu0 %v1105
    %1796 = vmatpush1.msra.mxu0 %v1104
    %1797 = vmatprep.subr.mxu0 %v1109
    %1798 = vmatpush1.msra.mxu0 %v1108
    %1799 = vmatprep.subr.mxu0 %v1113
    %1800 = vmatpush1.msra.mxu0 %v1112
    %1801 = vmatprep.subr.mxu0 %v1117
    %1802 = vmatpush1.msra.mxu0 %v1116
    %1803 = vmatprep.subr.mxu0 %v1121
    %1804 = vmatpush1.msra.mxu0 %v1120
    %1805 = vmatprep.subr.mxu0 %v1125
    %1806 = vmatpush1.msra.mxu0 %v1124
    %1807 = vmatprep.subr.mxu0 %v1129
    %1808 = vmatpush1.msra.mxu0 %v1128
    %1809 = vmatprep.subr.mxu0 %v1133
    %1810 = vmatpush1.msra.mxu0 %v1132
    %1811 = vmatprep.subr.mxu0 %v1137
    %1812 = vmatpush1.msra.mxu0 %v1136
    %1813 = vmatprep.subr.mxu0 %v1141
    %1814 = vmatpush1.msra.mxu0 %v1140
    %1815 = vmatprep.subr.mxu0 %v1145
    %1816 = vmatpush1.msra.mxu0 %v1144
    %1817 = vmatprep.subr.mxu0 %v1149
    %1818 = vmatpush1.msra.mxu0 %v1148
    %1819 = vmatprep.subr.mxu0 %v1153
    %1820 = vmatpush1.msra.mxu0 %v1152
    %1821 = vmatprep.subr.mxu0 %v1157
    %1822 = vmatpush1.msra.mxu0 %v1156
    %1823 = vmatprep.subr.mxu0 %v1161
    %1824 = vmatpush1.msra.mxu0 %v1160
    %1825 = vmatprep.subr.mxu0 %v1165
    %1826 = vmatpush1.msra.mxu0 %v1164
    %1827 = vmatprep.subr.mxu0 %v1169
    %1828 = vmatpush1.msra.mxu0 %v1168
    %1829 = vmatprep.subr.mxu0 %v1173
    %1830 = vmatpush1.msra.mxu0 %v1172
    %1831 = vmatprep.subr.mxu0 %v1177
    %1832 = vmatpush1.msra.mxu0 %v1176
    %1833 = vmatprep.subr.mxu0 %v1181
    %1834 = vmatpush1.msra.mxu0 %v1180
    %1835 = vmatprep.subr.mxu0 %v1185
    %1836 = vmatpush1.msra.mxu0 %v1184
    %1837 = vmatprep.subr.mxu0 %v1189
    %1838 = vmatpush1.msra.mxu0 %v1188
    %1839 = vmatprep.subr.mxu0 %v1193
    %1840 = vmatpush1.msra.mxu0 %v1192
    %1841 = vmatprep.subr.mxu0 %v1197
    %1842 = vmatpush1.msra.mxu0 %v1196
    %1843 = vmatprep.subr.mxu0 %v1201
    %1844 = vmatpush1.msra.mxu0 %v1200
    %1845 = vmatprep.subr.mxu0 %v1205
    %1846 = vmatpush1.msra.mxu0 %v1204
    %1847 = vmatprep.subr.mxu0 %v1209
    %1848 = vmatpush1.msra.mxu0 %v1208
    %1849 = vmatprep.mubr.f32.mxu0 %v1521
    %1850 = vmatmul.mubr.f32.gmra.mrb[0].mxu0 %v1520
    %v1851 = vpop.f32.mrb[0].mxu0
    %v1852 = vadd.f32 %v1781, %v1851
    %v1853 = vpop.f32.mrb[0].mxu0
    %v1854 = vadd.f32 %v1783, %v1853
    %1855 = vdwg.mxu0
    %v1856 = vadd.f32 %v1568, %v1710
    %v1857 = vadd.f32 %v1569, %v1712
    %v1858 = vadd.f32 %v1570, %v1852
    %v1859 = vadd.f32 %v1571, %v1854
    %v1860 = vadd.f32 %v1856, %v1217
    %v1861 = vadd.f32 %v1857, %v1221
    %v1862 = vadd.f32 %v1858, %v1225
    %v1863 = vadd.f32 %v1859, %v1229
    %v1864 = vtanh.pop %v1860
    %v1865 = vtanh.pop %v1861
    %v1866 = vtanh.pop %v1862
    %v1867 = vtanh.pop %v1863
    %s1868 = scalar_lea.vmem [#allocation3], 32
    %1869 = vst [vmem:[%s1868] sm:$0xff] %v1864
    %1870 = vst [vmem:[%s1868 + $0x8] sm:$0xff] %v1865
    %1871 = vst [vmem:[%s1868 + $0x10] sm:$0xff] %v1866
    %1872 = vst [vmem:[%s1868 + $0x18] sm:$0xff] %v1867
    %v1873 = vmul.f32 %v1864, %v1530
    %v1874 = vmul.f32 %v1865, %v1534
    %v1875 = vmul.f32 %v1866, %v1538
    %v1876 = vmul.f32 %v1867, %v1542
    %v1877 = vadd.f32 %v1873, %v1874
    %v1878 = vadd.f32 %v1877, %v1875
    %v1879 = vadd.f32 %v1878, %v1876
    %1880 = vadd.xlane.f32.xlu0 %v1879
    %v1881 = vpop.xlane.xlu0 %1880
    %v1882 = vadd.f32 %v1881, %v1556
    %v1883 = vxor.u32 %v1882, 2147483648
    %v1884 = vmul.f32 %v1883, 1.442695
    %v1885 = vpow.pop %v1884
    %v1886 = vadd.f32 %v1885, 1.0
    %v1887 = vrcp.pop %v1886
    %v1888 = vmul.f32 1.0, %v1887
    %s1889 = scalar_lea.vmem [#allocation2], 32
    %v1890 = vld [vmem:[%s1889] sm:$0xff]
    %v1891 = vld [vmem:[%s1889 + $0x8] sm:$0xff]
    %v1892 = vld [vmem:[%s1889 + $0x10] sm:$0xff]
    %v1893 = vld [vmem:[%s1889 + $0x18] sm:$0xff]
    %v1894 = vmul.f32 %v1888, %v1890
    %v1895 = vmul.f32 %v1888, %v1891
    %v1896 = vmul.f32 %v1888, %v1892
    %v1897 = vmul.f32 %v1888, %v1893
    %1898 = vmatprep.subr.mxu0 %v955
    %1899 = vmatpush1.msra.mxu0 %v954
    %1900 = vmatprep.subr.mxu0 %v959
    %1901 = vmatpush1.msra.mxu0 %v958
    %1902 = vmatprep.subr.mxu0 %v963
    %1903 = vmatpush1.msra.mxu0 %v962
    %1904 = vmatprep.subr.mxu0 %v967
    %1905 = vmatpush1.msra.mxu0 %v966
    %1906 = vmatprep.subr.mxu0 %v971
    %1907 = vmatpush1.msra.mxu0 %v970
    %1908 = vmatprep.subr.mxu0 %v975
    %1909 = vmatpush1.msra.mxu0 %v974
    %1910 = vmatprep.subr.mxu0 %v979
    %1911 = vmatpush1.msra.mxu0 %v978
    %1912 = vmatprep.subr.mxu0 %v983
    %1913 = vmatpush1.msra.mxu0 %v982
    %1914 = vmatprep.subr.mxu0 %v987
    %1915 = vmatpush1.msra.mxu0 %v986
    %1916 = vmatprep.subr.mxu0 %v991
    %1917 = vmatpush1.msra.mxu0 %v990
    %1918 = vmatprep.subr.mxu0 %v995
    %1919 = vmatpush1.msra.mxu0 %v994
    %1920 = vmatprep.subr.mxu0 %v999
    %1921 = vmatpush1.msra.mxu0 %v998
    %1922 = vmatprep.subr.mxu0 %v1003
    %1923 = vmatpush1.msra.mxu0 %v1002
    %1924 = vmatprep.subr.mxu0 %v1007
    %1925 = vmatpush1.msra.mxu0 %v1006
    %1926 = vmatprep.subr.mxu0 %v1011
    %1927 = vmatpush1.msra.mxu0 %v1010
    %1928 = vmatprep.subr.mxu0 %v1015
    %1929 = vmatpush1.msra.mxu0 %v1014
    %1930 = vmatprep.subr.mxu0 %v1019
    %1931 = vmatpush1.msra.mxu0 %v1018
    %1932 = vmatprep.subr.mxu0 %v1023
    %1933 = vmatpush1.msra.mxu0 %v1022
    %1934 = vmatprep.subr.mxu0 %v1027
    %1935 = vmatpush1.msra.mxu0 %v1026
    %1936 = vmatprep.subr.mxu0 %v1031
    %1937 = vmatpush1.msra.mxu0 %v1030
    %1938 = vmatprep.subr.mxu0 %v1035
    %1939 = vmatpush1.msra.mxu0 %v1034
    %1940 = vmatprep.subr.mxu0 %v1039
    %1941 = vmatpush1.msra.mxu0 %v1038
    %1942 = vmatprep.subr.mxu0 %v1043
    %1943 = vmatpush1.msra.mxu0 %v1042
    %1944 = vmatprep.subr.mxu0 %v1047
    %1945 = vmatpush1.msra.mxu0 %v1046
    %1946 = vmatprep.subr.mxu0 %v1051
    %1947 = vmatpush1.msra.mxu0 %v1050
    %1948 = vmatprep.subr.mxu0 %v1055
    %1949 = vmatpush1.msra.mxu0 %v1054
    %1950 = vmatprep.subr.mxu0 %v1059
    %1951 = vmatpush1.msra.mxu0 %v1058
    %1952 = vmatprep.subr.mxu0 %v1063
    %1953 = vmatpush1.msra.mxu0 %v1062
    %1954 = vmatprep.subr.mxu0 %v1067
    %1955 = vmatpush1.msra.mxu0 %v1066
    %1956 = vmatprep.subr.mxu0 %v1071
    %1957 = vmatpush1.msra.mxu0 %v1070
    %1958 = vmatprep.subr.mxu0 %v1075
    %1959 = vmatpush1.msra.mxu0 %v1074
    %1960 = vmatprep.subr.mxu0 %v1079
    %1961 = vmatpush1.msra.mxu0 %v1078
    %1962 = vmatprep.mubr.f32.mxu0 %v1865
    %1963 = vmatmul.mubr.f32.gmra.mrb[0].mxu0 %v1864
    %v1964 = vpop.f32.mrb[0].mxu0
    %v1965 = vadd.f32 0.0, %v1964
    %v1966 = vpop.f32.mrb[0].mxu0
    %v1967 = vadd.f32 0.0, %v1966
    %1968 = vdwg.mxu0
    %1969 = vmatprep.subr.mxu0 %v1083
    %1970 = vmatpush1.msra.mxu0 %v1082
    %1971 = vmatprep.subr.mxu0 %v1087
    %1972 = vmatpush1.msra.mxu0 %v1086
    %1973 = vmatprep.subr.mxu0 %v1091
    %1974 = vmatpush1.msra.mxu0 %v1090
    %1975 = vmatprep.subr.mxu0 %v1095
    %1976 = vmatpush1.msra.mxu0 %v1094
    %1977 = vmatprep.subr.mxu0 %v1099
    %1978 = vmatpush1.msra.mxu0 %v1098
    %1979 = vmatprep.subr.mxu0 %v1103
    %1980 = vmatpush1.msra.mxu0 %v1102
    %1981 = vmatprep.subr.mxu0 %v1107
    %1982 = vmatpush1.msra.mxu0 %v1106
    %1983 = vmatprep.subr.mxu0 %v1111
    %1984 = vmatpush1.msra.mxu0 %v1110
    %1985 = vmatprep.subr.mxu0 %v1115
    %1986 = vmatpush1.msra.mxu0 %v1114
    %1987 = vmatprep.subr.mxu0 %v1119
    %1988 = vmatpush1.msra.mxu0 %v1118
    %1989 = vmatprep.subr.mxu0 %v1123
    %1990 = vmatpush1.msra.mxu0 %v1122
    %1991 = vmatprep.subr.mxu0 %v1127
    %1992 = vmatpush1.msra.mxu0 %v1126
    %1993 = vmatprep.subr.mxu0 %v1131
    %1994 = vmatpush1.msra.mxu0 %v1130
    %1995 = vmatprep.subr.mxu0 %v1135
    %1996 = vmatpush1.msra.mxu0 %v1134
    %1997 = vmatprep.subr.mxu0 %v1139
    %1998 = vmatpush1.msra.mxu0 %v1138
    %1999 = vmatprep.subr.mxu0 %v1143
    %2000 = vmatpush1.msra.mxu0 %v1142
    %2001 = vmatprep.subr.mxu0 %v1147
    %2002 = vmatpush1.msra.mxu0 %v1146
    %2003 = vmatprep.subr.mxu0 %v1151
    %2004 = vmatpush1.msra.mxu0 %v1150
    %2005 = vmatprep.subr.mxu0 %v1155
    %2006 = vmatpush1.msra.mxu0 %v1154
    %2007 = vmatprep.subr.mxu0 %v1159
    %2008 = vmatpush1.msra.mxu0 %v1158
    %2009 = vmatprep.subr.mxu0 %v1163
    %2010 = vmatpush1.msra.mxu0 %v1162
    %2011 = vmatprep.subr.mxu0 %v1167
    %2012 = vmatpush1.msra.mxu0 %v1166
    %2013 = vmatprep.subr.mxu0 %v1171
    %2014 = vmatpush1.msra.mxu0 %v1170
    %2015 = vmatprep.subr.mxu0 %v1175
    %2016 = vmatpush1.msra.mxu0 %v1174
    %2017 = vmatprep.subr.mxu0 %v1179
    %2018 = vmatpush1.msra.mxu0 %v1178
    %2019 = vmatprep.subr.mxu0 %v1183
    %2020 = vmatpush1.msra.mxu0 %v1182
    %2021 = vmatprep.subr.mxu0 %v1187
    %2022 = vmatpush1.msra.mxu0 %v1186
    %2023 = vmatprep.subr.mxu0 %v1191
    %2024 = vmatpush1.msra.mxu0 %v1190
    %2025 = vmatprep.subr.mxu0 %v1195
    %2026 = vmatpush1.msra.mxu0 %v1194
    %2027 = vmatprep.subr.mxu0 %v1199
    %2028 = vmatpush1.msra.mxu0 %v1198
    %2029 = vmatprep.subr.mxu0 %v1203
    %2030 = vmatpush1.msra.mxu0 %v1202
    %2031 = vmatprep.subr.mxu0 %v1207
    %2032 = vmatpush1.msra.mxu0 %v1206
    %2033 = vmatprep.mubr.f32.mxu0 %v1867
    %2034 = vmatmul.mubr.f32.gmra.mrb[0].mxu0 %v1866
    %v2035 = vpop.f32.mrb[0].mxu0
    %v2036 = vadd.f32 %v1965, %v2035
    %v2037 = vpop.f32.mrb[0].mxu0
    %v2038 = vadd.f32 %v1967, %v2037
    %2039 = vdwg.mxu0
    %2040 = vmatprep.subr.mxu0 %v957
    %2041 = vmatpush1.msra.mxu0 %v956
    %2042 = vmatprep.subr.mxu0 %v961
    %2043 = vmatpush1.msra.mxu0 %v960
    %2044 = vmatprep.subr.mxu0 %v965
    %2045 = vmatpush1.msra.mxu0 %v964
    %2046 = vmatprep.subr.mxu0 %v969
    %2047 = vmatpush1.msra.mxu0 %v968
    %2048 = vmatprep.subr.mxu0 %v973
    %2049 = vmatpush1.msra.mxu0 %v972
    %2050 = vmatprep.subr.mxu0 %v977
    %2051 = vmatpush1.msra.mxu0 %v976
    %2052 = vmatprep.subr.mxu0 %v981
    %2053 = vmatpush1.msra.mxu0 %v980
    %2054 = vmatprep.subr.mxu0 %v985
    %2055 = vmatpush1.msra.mxu0 %v984
    %2056 = vmatprep.subr.mxu0 %v989
    %2057 = vmatpush1.msra.mxu0 %v988
    %2058 = vmatprep.subr.mxu0 %v993
    %2059 = vmatpush1.msra.mxu0 %v992
    %2060 = vmatprep.subr.mxu0 %v997
    %2061 = vmatpush1.msra.mxu0 %v996
    %2062 = vmatprep.subr.mxu0 %v1001
    %2063 = vmatpush1.msra.mxu0 %v1000
    %2064 = vmatprep.subr.mxu0 %v1005
    %2065 = vmatpush1.msra.mxu0 %v1004
    %2066 = vmatprep.subr.mxu0 %v1009
    %2067 = vmatpush1.msra.mxu0 %v1008
    %2068 = vmatprep.subr.mxu0 %v1013
    %2069 = vmatpush1.msra.mxu0 %v1012
    %2070 = vmatprep.subr.mxu0 %v1017
    %2071 = vmatpush1.msra.mxu0 %v1016
    %2072 = vmatprep.subr.mxu0 %v1021
    %2073 = vmatpush1.msra.mxu0 %v1020
    %2074 = vmatprep.subr.mxu0 %v1025
    %2075 = vmatpush1.msra.mxu0 %v1024
    %2076 = vmatprep.subr.mxu0 %v1029
    %2077 = vmatpush1.msra.mxu0 %v1028
    %2078 = vmatprep.subr.mxu0 %v1033
    %2079 = vmatpush1.msra.mxu0 %v1032
    %2080 = vmatprep.subr.mxu0 %v1037
    %2081 = vmatpush1.msra.mxu0 %v1036
    %2082 = vmatprep.subr.mxu0 %v1041
    %2083 = vmatpush1.msra.mxu0 %v1040
    %2084 = vmatprep.subr.mxu0 %v1045
    %2085 = vmatpush1.msra.mxu0 %v1044
    %2086 = vmatprep.subr.mxu0 %v1049
    %2087 = vmatpush1.msra.mxu0 %v1048
    %2088 = vmatprep.subr.mxu0 %v1053
    %2089 = vmatpush1.msra.mxu0 %v1052
    %2090 = vmatprep.subr.mxu0 %v1057
    %2091 = vmatpush1.msra.mxu0 %v1056
    %2092 = vmatprep.subr.mxu0 %v1061
    %2093 = vmatpush1.msra.mxu0 %v1060
    %2094 = vmatprep.subr.mxu0 %v1065
    %2095 = vmatpush1.msra.mxu0 %v1064
    %2096 = vmatprep.subr.mxu0 %v1069
    %2097 = vmatpush1.msra.mxu0 %v1068
    %2098 = vmatprep.subr.mxu0 %v1073
    %2099 = vmatpush1.msra.mxu0 %v1072
    %2100 = vmatprep.subr.mxu0 %v1077
    %2101 = vmatpush1.msra.mxu0 %v1076
    %2102 = vmatprep.subr.mxu0 %v1081
    %2103 = vmatpush1.msra.mxu0 %v1080
    %2104 = vmatprep.mubr.f32.mxu0 %v1865
    %2105 = vmatmul.mubr.f32.gmra.mrb[0].mxu0 %v1864
    %v2106 = vpop.f32.mrb[0].mxu0
    %v2107 = vadd.f32 0.0, %v2106
    %v2108 = vpop.f32.mrb[0].mxu0
    %v2109 = vadd.f32 0.0, %v2108
    %2110 = vdwg.mxu0
    %2111 = vmatprep.subr.mxu0 %v1085
    %2112 = vmatpush1.msra.mxu0 %v1084
    %2113 = vmatprep.subr.mxu0 %v1089
    %2114 = vmatpush1.msra.mxu0 %v1088
    %2115 = vmatprep.subr.mxu0 %v1093
    %2116 = vmatpush1.msra.mxu0 %v1092
    %2117 = vmatprep.subr.mxu0 %v1097
    %2118 = vmatpush1.msra.mxu0 %v1096
    %2119 = vmatprep.subr.mxu0 %v1101
    %2120 = vmatpush1.msra.mxu0 %v1100
    %2121 = vmatprep.subr.mxu0 %v1105
    %2122 = vmatpush1.msra.mxu0 %v1104
    %2123 = vmatprep.subr.mxu0 %v1109
    %2124 = vmatpush1.msra.mxu0 %v1108
    %2125 = vmatprep.subr.mxu0 %v1113
    %2126 = vmatpush1.msra.mxu0 %v1112
    %2127 = vmatprep.subr.mxu0 %v1117
    %2128 = vmatpush1.msra.mxu0 %v1116
    %2129 = vmatprep.subr.mxu0 %v1121
    %2130 = vmatpush1.msra.mxu0 %v1120
    %2131 = vmatprep.subr.mxu0 %v1125
    %2132 = vmatpush1.msra.mxu0 %v1124
    %2133 = vmatprep.subr.mxu0 %v1129
    %2134 = vmatpush1.msra.mxu0 %v1128
    %2135 = vmatprep.subr.mxu0 %v1133
    %2136 = vmatpush1.msra.mxu0 %v1132
    %2137 = vmatprep.subr.mxu0 %v1137
    %2138 = vmatpush1.msra.mxu0 %v1136
    %2139 = vmatprep.subr.mxu0 %v1141
    %2140 = vmatpush1.msra.mxu0 %v1140
    %2141 = vmatprep.subr.mxu0 %v1145
    %2142 = vmatpush1.msra.mxu0 %v1144
    %2143 = vmatprep.subr.mxu0 %v1149
    %2144 = vmatpush1.msra.mxu0 %v1148
    %2145 = vmatprep.subr.mxu0 %v1153
    %2146 = vmatpush1.msra.mxu0 %v1152
    %2147 = vmatprep.subr.mxu0 %v1157
    %2148 = vmatpush1.msra.mxu0 %v1156
    %2149 = vmatprep.subr.mxu0 %v1161
    %2150 = vmatpush1.msra.mxu0 %v1160
    %2151 = vmatprep.subr.mxu0 %v1165
    %2152 = vmatpush1.msra.mxu0 %v1164
    %2153 = vmatprep.subr.mxu0 %v1169
    %2154 = vmatpush1.msra.mxu0 %v1168
    %2155 = vmatprep.subr.mxu0 %v1173
    %2156 = vmatpush1.msra.mxu0 %v1172
    %2157 = vmatprep.subr.mxu0 %v1177
    %2158 = vmatpush1.msra.mxu0 %v1176
    %2159 = vmatprep.subr.mxu0 %v1181
    %2160 = vmatpush1.msra.mxu0 %v1180
    %2161 = vmatprep.subr.mxu0 %v1185
    %2162 = vmatpush1.msra.mxu0 %v1184
    %2163 = vmatprep.subr.mxu0 %v1189
    %2164 = vmatpush1.msra.mxu0 %v1188
    %2165 = vmatprep.subr.mxu0 %v1193
    %2166 = vmatpush1.msra.mxu0 %v1192
    %2167 = vmatprep.subr.mxu0 %v1197
    %2168 = vmatpush1.msra.mxu0 %v1196
    %2169 = vmatprep.subr.mxu0 %v1201
    %2170 = vmatpush1.msra.mxu0 %v1200
    %2171 = vmatprep.subr.mxu0 %v1205
    %2172 = vmatpush1.msra.mxu0 %v1204
    %2173 = vmatprep.subr.mxu0 %v1209
    %2174 = vmatpush1.msra.mxu0 %v1208
    %2175 = vmatprep.mubr.f32.mxu0 %v1867
    %2176 = vmatmul.mubr.f32.gmra.mrb[0].mxu0 %v1866
    %v2177 = vpop.f32.mrb[0].mxu0
    %v2178 = vadd.f32 %v2107, %v2177
    %v2179 = vpop.f32.mrb[0].mxu0
    %v2180 = vadd.f32 %v2109, %v2179
    %2181 = vdwg.mxu0
    %v2182 = vadd.f32 %v1894, %v2036
    %v2183 = vadd.f32 %v1895, %v2038
    %v2184 = vadd.f32 %v1896, %v2178
    %v2185 = vadd.f32 %v1897, %v2180
    %v2186 = vadd.f32 %v2182, %v1217
    %v2187 = vadd.f32 %v2183, %v1221
    %v2188 = vadd.f32 %v2184, %v1225
    %v2189 = vadd.f32 %v2185, %v1229
    %v2190 = vtanh.pop %v2186
    %v2191 = vtanh.pop %v2187
    %v2192 = vtanh.pop %v2188
    %v2193 = vtanh.pop %v2189
    %s2194 = scalar_lea.vmem [#allocation3], 64
    %2195 = vst [vmem:[%s2194] sm:$0xff] %v2190
    %2196 = vst [vmem:[%s2194 + $0x8] sm:$0xff] %v2191
    %2197 = vst [vmem:[%s2194 + $0x10] sm:$0xff] %v2192
    %2198 = vst [vmem:[%s2194 + $0x18] sm:$0xff] %v2193
    %v2199 = vmul.f32 %v2190, %v1530
    %v2200 = vmul.f32 %v2191, %v1534
    %v2201 = vmul.f32 %v2192, %v1538
    %v2202 = vmul.f32 %v2193, %v1542
    %v2203 = vadd.f32 %v2199, %v2200
    %v2204 = vadd.f32 %v2203, %v2201
    %v2205 = vadd.f32 %v2204, %v2202
    %2206 = vadd.xlane.f32.xlu0 %v2205
    %v2207 = vpop.xlane.xlu0 %2206
    %v2208 = vadd.f32 %v2207, %v1556
    %v2209 = vxor.u32 %v2208, 2147483648
    %v2210 = vmul.f32 %v2209, 1.442695
    %v2211 = vpow.pop %v2210
    %v2212 = vadd.f32 %v2211, 1.0
    %v2213 = vrcp.pop %v2212
    %v2214 = vmul.f32 1.0, %v2213
    %s2215 = scalar_lea.vmem [#allocation2], 64
    %v2216 = vld [vmem:[%s2215] sm:$0xff]
    %v2217 = vld [vmem:[%s2215 + $0x8] sm:$0xff]
    %v2218 = vld [vmem:[%s2215 + $0x10] sm:$0xff]
    %v2219 = vld [vmem:[%s2215 + $0x18] sm:$0xff]
    %v2220 = vmul.f32 %v2214, %v2216
    %v2221 = vmul.f32 %v2214, %v2217
    %v2222 = vmul.f32 %v2214, %v2218
    %v2223 = vmul.f32 %v2214, %v2219
    %2224 = vmatprep.subr.mxu0 %v955
    %2225 = vmatpush1.msra.mxu0 %v954
    %2226 = vmatprep.subr.mxu0 %v959
    %2227 = vmatpush1.msra.mxu0 %v958
    %2228 = vmatprep.subr.mxu0 %v963
    %2229 = vmatpush1.msra.mxu0 %v962
    %2230 = vmatprep.subr.mxu0 %v967
    %2231 = vmatpush1.msra.mxu0 %v966
    %2232 = vmatprep.subr.mxu0 %v971
    %2233 = vmatpush1.msra.mxu0 %v970
    %2234 = vmatprep.subr.mxu0 %v975
    %2235 = vmatpush1.msra.mxu0 %v974
    %2236 = vmatprep.subr.mxu0 %v979
    %2237 = vmatpush1.msra.mxu0 %v978
    %2238 = vmatprep.subr.mxu0 %v983
    %2239 = vmatpush1.msra.mxu0 %v982
    %2240 = vmatprep.subr.mxu0 %v987
    %2241 = vmatpush1.msra.mxu0 %v986
    %2242 = vmatprep.subr.mxu0 %v991
    %2243 = vmatpush1.msra.mxu0 %v990
    %2244 = vmatprep.subr.mxu0 %v995
    %2245 = vmatpush1.msra.mxu0 %v994
    %2246 = vmatprep.subr.mxu0 %v999
    %2247 = vmatpush1.msra.mxu0 %v998
    %2248 = vmatprep.subr.mxu0 %v1003
    %2249 = vmatpush1.msra.mxu0 %v1002
    %2250 = vmatprep.subr.mxu0 %v1007
    %2251 = vmatpush1.msra.mxu0 %v1006
    %2252 = vmatprep.subr.mxu0 %v1011
    %2253 = vmatpush1.msra.mxu0 %v1010
    %2254 = vmatprep.subr.mxu0 %v1015
    %2255 = vmatpush1.msra.mxu0 %v1014
    %2256 = vmatprep.subr.mxu0 %v1019
    %2257 = vmatpush1.msra.mxu0 %v1018
    %2258 = vmatprep.subr.mxu0 %v1023
    %2259 = vmatpush1.msra.mxu0 %v1022
    %2260 = vmatprep.subr.mxu0 %v1027
    %2261 = vmatpush1.msra.mxu0 %v1026
    %2262 = vmatprep.subr.mxu0 %v1031
    %2263 = vmatpush1.msra.mxu0 %v1030
    %2264 = vmatprep.subr.mxu0 %v1035
    %2265 = vmatpush1.msra.mxu0 %v1034
    %2266 = vmatprep.subr.mxu0 %v1039
    %2267 = vmatpush1.msra.mxu0 %v1038
    %2268 = vmatprep.subr.mxu0 %v1043
    %2269 = vmatpush1.msra.mxu0 %v1042
    %2270 = vmatprep.subr.mxu0 %v1047
    %2271 = vmatpush1.msra.mxu0 %v1046
    %2272 = vmatprep.subr.mxu0 %v1051
    %2273 = vmatpush1.msra.mxu0 %v1050
    %2274 = vmatprep.subr.mxu0 %v1055
    %2275 = vmatpush1.msra.mxu0 %v1054
    %2276 = vmatprep.subr.mxu0 %v1059
    %2277 = vmatpush1.msra.mxu0 %v1058
    %2278 = vmatprep.subr.mxu0 %v1063
    %2279 = vmatpush1.msra.mxu0 %v1062
    %2280 = vmatprep.subr.mxu0 %v1067
    %2281 = vmatpush1.msra.mxu0 %v1066
    %2282 = vmatprep.subr.mxu0 %v1071
    %2283 = vmatpush1.msra.mxu0 %v1070
    %2284 = vmatprep.subr.mxu0 %v1075
    %2285 = vmatpush1.msra.mxu0 %v1074
    %2286 = vmatprep.subr.mxu0 %v1079
    %2287 = vmatpush1.msra.mxu0 %v1078
    %2288 = vmatprep.mubr.f32.mxu0 %v2191
    %2289 = vmatmul.mubr.f32.gmra.mrb[0].mxu0 %v2190
    %v2290 = vpop.f32.mrb[0].mxu0
    %v2291 = vadd.f32 0.0, %v2290
    %v2292 = vpop.f32.mrb[0].mxu0
    %v2293 = vadd.f32 0.0, %v2292
    %2294 = vdwg.mxu0
    %2295 = vmatprep.subr.mxu0 %v1083
    %2296 = vmatpush1.msra.mxu0 %v1082
    %2297 = vmatprep.subr.mxu0 %v1087
    %2298 = vmatpush1.msra.mxu0 %v1086
    %2299 = vmatprep.subr.mxu0 %v1091
    %2300 = vmatpush1.msra.mxu0 %v1090
    %2301 = vmatprep.subr.mxu0 %v1095
    %2302 = vmatpush1.msra.mxu0 %v1094
    %2303 = vmatprep.subr.mxu0 %v1099
    %2304 = vmatpush1.msra.mxu0 %v1098
    %2305 = vmatprep.subr.mxu0 %v1103
    %2306 = vmatpush1.msra.mxu0 %v1102
    %2307 = vmatprep.subr.mxu0 %v1107
    %2308 = vmatpush1.msra.mxu0 %v1106
    %2309 = vmatprep.subr.mxu0 %v1111
    %2310 = vmatpush1.msra.mxu0 %v1110
    %2311 = vmatprep.subr.mxu0 %v1115
    %2312 = vmatpush1.msra.mxu0 %v1114
    %2313 = vmatprep.subr.mxu0 %v1119
    %2314 = vmatpush1.msra.mxu0 %v1118
    %2315 = vmatprep.subr.mxu0 %v1123
    %2316 = vmatpush1.msra.mxu0 %v1122
    %2317 = vmatprep.subr.mxu0 %v1127
    %2318 = vmatpush1.msra.mxu0 %v1126
    %2319 = vmatprep.subr.mxu0 %v1131
    %2320 = vmatpush1.msra.mxu0 %v1130
    %2321 = vmatprep.subr.mxu0 %v1135
    %2322 = vmatpush1.msra.mxu0 %v1134
    %2323 = vmatprep.subr.mxu0 %v1139
    %2324 = vmatpush1.msra.mxu0 %v1138
    %2325 = vmatprep.subr.mxu0 %v1143
    %2326 = vmatpush1.msra.mxu0 %v1142
    %2327 = vmatprep.subr.mxu0 %v1147
    %2328 = vmatpush1.msra.mxu0 %v1146
    %2329 = vmatprep.subr.mxu0 %v1151
    %2330 = vmatpush1.msra.mxu0 %v1150
    %2331 = vmatprep.subr.mxu0 %v1155
    %2332 = vmatpush1.msra.mxu0 %v1154
    %2333 = vmatprep.subr.mxu0 %v1159
    %2334 = vmatpush1.msra.mxu0 %v1158
    %2335 = vmatprep.subr.mxu0 %v1163
    %2336 = vmatpush1.msra.mxu0 %v1162
    %2337 = vmatprep.subr.mxu0 %v1167
    %2338 = vmatpush1.msra.mxu0 %v1166
    %2339 = vmatprep.subr.mxu0 %v1171
    %2340 = vmatpush1.msra.mxu0 %v1170
    %2341 = vmatprep.subr.mxu0 %v1175
    %2342 = vmatpush1.msra.mxu0 %v1174
    %2343 = vmatprep.subr.mxu0 %v1179
    %2344 = vmatpush1.msra.mxu0 %v1178
    %2345 = vmatprep.subr.mxu0 %v1183
    %2346 = vmatpush1.msra.mxu0 %v1182
    %2347 = vmatprep.subr.mxu0 %v1187
    %2348 = vmatpush1.msra.mxu0 %v1186
    %2349 = vmatprep.subr.mxu0 %v1191
    %2350 = vmatpush1.msra.mxu0 %v1190
    %2351 = vmatprep.subr.mxu0 %v1195
    %2352 = vmatpush1.msra.mxu0 %v1194
    %2353 = vmatprep.subr.mxu0 %v1199
    %2354 = vmatpush1.msra.mxu0 %v1198
    %2355 = vmatprep.subr.mxu0 %v1203
    %2356 = vmatpush1.msra.mxu0 %v1202
    %2357 = vmatprep.subr.mxu0 %v1207
    %2358 = vmatpush1.msra.mxu0 %v1206
    %2359 = vmatprep.mubr.f32.mxu0 %v2193
    %2360 = vmatmul.mubr.f32.gmra.mrb[0].mxu0 %v2192
    %v2361 = vpop.f32.mrb[0].mxu0
    %v2362 = vadd.f32 %v2291, %v2361
    %v2363 = vpop.f32.mrb[0].mxu0
    %v2364 = vadd.f32 %v2293, %v2363
    %2365 = vdwg.mxu0
    %2366 = vmatprep.subr.mxu0 %v957
    %2367 = vmatpush1.msra.mxu0 %v956
    %2368 = vmatprep.subr.mxu0 %v961
    %2369 = vmatpush1.msra.mxu0 %v960
    %2370 = vmatprep.subr.mxu0 %v965
    %2371 = vmatpush1.msra.mxu0 %v964
    %2372 = vmatprep.subr.mxu0 %v969
    %2373 = vmatpush1.msra.mxu0 %v968
    %2374 = vmatprep.subr.mxu0 %v973
    %2375 = vmatpush1.msra.mxu0 %v972
    %2376 = vmatprep.subr.mxu0 %v977
    %2377 = vmatpush1.msra.mxu0 %v976
    %2378 = vmatprep.subr.mxu0 %v981
    %2379 = vmatpush1.msra.mxu0 %v980
    %2380 = vmatprep.subr.mxu0 %v985
    %2381 = vmatpush1.msra.mxu0 %v984
    %2382 = vmatprep.subr.mxu0 %v989
    %2383 = vmatpush1.msra.mxu0 %v988
    %2384 = vmatprep.subr.mxu0 %v993
    %2385 = vmatpush1.msra.mxu0 %v992
    %2386 = vmatprep.subr.mxu0 %v997
    %2387 = vmatpush1.msra.mxu0 %v996
    %2388 = vmatprep.subr.mxu0 %v1001
    %2389 = vmatpush1.msra.mxu0 %v1000
    %2390 = vmatprep.subr.mxu0 %v1005
    %2391 = vmatpush1.msra.mxu0 %v1004
    %2392 = vmatprep.subr.mxu0 %v1009
    %2393 = vmatpush1.msra.mxu0 %v1008
    %2394 = vmatprep.subr.mxu0 %v1013
    %2395 = vmatpush1.msra.mxu0 %v1012
    %2396 = vmatprep.subr.mxu0 %v1017
    %2397 = vmatpush1.msra.mxu0 %v1016
    %2398 = vmatprep.subr.mxu0 %v1021
    %2399 = vmatpush1.msra.mxu0 %v1020
    %2400 = vmatprep.subr.mxu0 %v1025
    %2401 = vmatpush1.msra.mxu0 %v1024
    %2402 = vmatprep.subr.mxu0 %v1029
    %2403 = vmatpush1.msra.mxu0 %v1028
    %2404 = vmatprep.subr.mxu0 %v1033
    %2405 = vmatpush1.msra.mxu0 %v1032
    %2406 = vmatprep.subr.mxu0 %v1037
    %2407 = vmatpush1.msra.mxu0 %v1036
    %2408 = vmatprep.subr.mxu0 %v1041
    %2409 = vmatpush1.msra.mxu0 %v1040
    %2410 = vmatprep.subr.mxu0 %v1045
    %2411 = vmatpush1.msra.mxu0 %v1044
    %2412 = vmatprep.subr.mxu0 %v1049
    %2413 = vmatpush1.msra.mxu0 %v1048
    %2414 = vmatprep.subr.mxu0 %v1053
    %2415 = vmatpush1.msra.mxu0 %v1052
    %2416 = vmatprep.subr.mxu0 %v1057
    %2417 = vmatpush1.msra.mxu0 %v1056
    %2418 = vmatprep.subr.mxu0 %v1061
    %2419 = vmatpush1.msra.mxu0 %v1060
    %2420 = vmatprep.subr.mxu0 %v1065
    %2421 = vmatpush1.msra.mxu0 %v1064
    %2422 = vmatprep.subr.mxu0 %v1069
    %2423 = vmatpush1.msra.mxu0 %v1068
    %2424 = vmatprep.subr.mxu0 %v1073
    %2425 = vmatpush1.msra.mxu0 %v1072
    %2426 = vmatprep.subr.mxu0 %v1077
    %2427 = vmatpush1.msra.mxu0 %v1076
    %2428 = vmatprep.subr.mxu0 %v1081
    %2429 = vmatpush1.msra.mxu0 %v1080
    %2430 = vmatprep.mubr.f32.mxu0 %v2191
    %2431 = vmatmul.mubr.f32.gmra.mrb[0].mxu0 %v2190
    %v2432 = vpop.f32.mrb[0].mxu0
    %v2433 = vadd.f32 0.0, %v2432
    %v2434 = vpop.f32.mrb[0].mxu0
    %v2435 = vadd.f32 0.0, %v2434
    %2436 = vdwg.mxu0
    %2437 = vmatprep.subr.mxu0 %v1085
    %2438 = vmatpush1.msra.mxu0 %v1084
    %2439 = vmatprep.subr.mxu0 %v1089
    %2440 = vmatpush1.msra.mxu0 %v1088
    %2441 = vmatprep.subr.mxu0 %v1093
    %2442 = vmatpush1.msra.mxu0 %v1092
    %2443 = vmatprep.subr.mxu0 %v1097
    %2444 = vmatpush1.msra.mxu0 %v1096
    %2445 = vmatprep.subr.mxu0 %v1101
    %2446 = vmatpush1.msra.mxu0 %v1100
    %2447 = vmatprep.subr.mxu0 %v1105
    %2448 = vmatpush1.msra.mxu0 %v1104
    %2449 = vmatprep.subr.mxu0 %v1109
    %2450 = vmatpush1.msra.mxu0 %v1108
    %2451 = vmatprep.subr.mxu0 %v1113
    %2452 = vmatpush1.msra.mxu0 %v1112
    %2453 = vmatprep.subr.mxu0 %v1117
    %2454 = vmatpush1.msra.mxu0 %v1116
    %2455 = vmatprep.subr.mxu0 %v1121
    %2456 = vmatpush1.msra.mxu0 %v1120
    %2457 = vmatprep.subr.mxu0 %v1125
    %2458 = vmatpush1.msra.mxu0 %v1124
    %2459 = vmatprep.subr.mxu0 %v1129
    %2460 = vmatpush1.msra.mxu0 %v1128
    %2461 = vmatprep.subr.mxu0 %v1133
    %2462 = vmatpush1.msra.mxu0 %v1132
    %2463 = vmatprep.subr.mxu0 %v1137
    %2464 = vmatpush1.msra.mxu0 %v1136
    %2465 = vmatprep.subr.mxu0 %v1141
    %2466 = vmatpush1.msra.mxu0 %v1140
    %2467 = vmatprep.subr.mxu0 %v1145
    %2468 = vmatpush1.msra.mxu0 %v1144
    %2469 = vmatprep.subr.mxu0 %v1149
    %2470 = vmatpush1.msra.mxu0 %v1148
    %2471 = vmatprep.subr.mxu0 %v1153
    %2472 = vmatpush1.msra.mxu0 %v1152
    %2473 = vmatprep.subr.mxu0 %v1157
    %2474 = vmatpush1.msra.mxu0 %v1156
    %2475 = vmatprep.subr.mxu0 %v1161
    %2476 = vmatpush1.msra.mxu0 %v1160
    %2477 = vmatprep.subr.mxu0 %v1165
    %2478 = vmatpush1.msra.mxu0 %v1164
    %2479 = vmatprep.subr.mxu0 %v1169
    %2480 = vmatpush1.msra.mxu0 %v1168
    %2481 = vmatprep.subr.mxu0 %v1173
    %2482 = vmatpush1.msra.mxu0 %v1172
    %2483 = vmatprep.subr.mxu0 %v1177
    %2484 = vmatpush1.msra.mxu0 %v1176
    %2485 = vmatprep.subr.mxu0 %v1181
    %2486 = vmatpush1.msra.mxu0 %v1180
    %2487 = vmatprep.subr.mxu0 %v1185
    %2488 = vmatpush1.msra.mxu0 %v1184
    %2489 = vmatprep.subr.mxu0 %v1189
    %2490 = vmatpush1.msra.mxu0 %v1188
    %2491 = vmatprep.subr.mxu0 %v1193
    %2492 = vmatpush1.msra.mxu0 %v1192
    %2493 = vmatprep.subr.mxu0 %v1197
    %2494 = vmatpush1.msra.mxu0 %v1196
    %2495 = vmatprep.subr.mxu0 %v1201
    %2496 = vmatpush1.msra.mxu0 %v1200
    %2497 = vmatprep.subr.mxu0 %v1205
    %2498 = vmatpush1.msra.mxu0 %v1204
    %2499 = vmatprep.subr.mxu0 %v1209
    %2500 = vmatpush1.msra.mxu0 %v1208
    %2501 = vmatprep.mubr.f32.mxu0 %v2193
    %2502 = vmatmul.mubr.f32.gmra.mrb[0].mxu0 %v2192
    %v2503 = vpop.f32.mrb[0].mxu0
    %v2504 = vadd.f32 %v2433, %v2503
    %v2505 = vpop.f32.mrb[0].mxu0
    %v2506 = vadd.f32 %v2435, %v2505
    %2507 = vdwg.mxu0
    %v2508 = vadd.f32 %v2220, %v2362
    %v2509 = vadd.f32 %v2221, %v2364
    %v2510 = vadd.f32 %v2222, %v2504
    %v2511 = vadd.f32 %v2223, %v2506
    %v2512 = vadd.f32 %v2508, %v1217
    %v2513 = vadd.f32 %v2509, %v1221
    %v2514 = vadd.f32 %v2510, %v1225
    %v2515 = vadd.f32 %v2511, %v1229
    %v2516 = vtanh.pop %v2512
    %v2517 = vtanh.pop %v2513
    %v2518 = vtanh.pop %v2514
    %v2519 = vtanh.pop %v2515
    %s2520 = scalar_lea.vmem [#allocation3], 96
    %2521 = vst [vmem:[%s2520] sm:$0xff] %v2516
    %2522 = vst [vmem:[%s2520 + $0x8] sm:$0xff] %v2517
    %2523 = vst [vmem:[%s2520 + $0x10] sm:$0xff] %v2518
    %2524 = vst [vmem:[%s2520 + $0x18] sm:$0xff] %v2519
    %v2525 = vmul.f32 %v2516, %v1530
    %v2526 = vmul.f32 %v2517, %v1534
    %v2527 = vmul.f32 %v2518, %v1538
    %v2528 = vmul.f32 %v2519, %v1542
    %v2529 = vadd.f32 %v2525, %v2526
    %v2530 = vadd.f32 %v2529, %v2527
    %v2531 = vadd.f32 %v2530, %v2528
    %2532 = vadd.xlane.f32.xlu0 %v2531
    %v2533 = vpop.xlane.xlu0 %2532
    %v2534 = vadd.f32 %v2533, %v1556
    %v2535 = vxor.u32 %v2534, 2147483648
    %v2536 = vmul.f32 %v2535, 1.442695
    %v2537 = vpow.pop %v2536
    %v2538 = vadd.f32 %v2537, 1.0
    %v2539 = vrcp.pop %v2538
    %v2540 = vmul.f32 1.0, %v2539
    %s2541 = scalar_lea.vmem [#allocation2], 96
    %v2542 = vld [vmem:[%s2541] sm:$0xff]
    %v2543 = vld [vmem:[%s2541 + $0x8] sm:$0xff]
    %v2544 = vld [vmem:[%s2541 + $0x10] sm:$0xff]
    %v2545 = vld [vmem:[%s2541 + $0x18] sm:$0xff]
    %v2546 = vmul.f32 %v2540, %v2542
    %v2547 = vmul.f32 %v2540, %v2543
    %v2548 = vmul.f32 %v2540, %v2544
    %v2549 = vmul.f32 %v2540, %v2545
    %2550 = vmatprep.subr.mxu0 %v955
    %2551 = vmatpush1.msra.mxu0 %v954
    %2552 = vmatprep.subr.mxu0 %v959
    %2553 = vmatpush1.msra.mxu0 %v958
    %2554 = vmatprep.subr.mxu0 %v963
    %2555 = vmatpush1.msra.mxu0 %v962
    %2556 = vmatprep.subr.mxu0 %v967
    %2557 = vmatpush1.msra.mxu0 %v966
    %2558 = vmatprep.subr.mxu0 %v971
    %2559 = vmatpush1.msra.mxu0 %v970
    %2560 = vmatprep.subr.mxu0 %v975
    %2561 = vmatpush1.msra.mxu0 %v974
    %2562 = vmatprep.subr.mxu0 %v979
    %2563 = vmatpush1.msra.mxu0 %v978
    %2564 = vmatprep.subr.mxu0 %v983
    %2565 = vmatpush1.msra.mxu0 %v982
    %2566 = vmatprep.subr.mxu0 %v987
    %2567 = vmatpush1.msra.mxu0 %v986
    %2568 = vmatprep.subr.mxu0 %v991
    %2569 = vmatpush1.msra.mxu0 %v990
    %2570 = vmatprep.subr.mxu0 %v995
    %2571 = vmatpush1.msra.mxu0 %v994
    %2572 = vmatprep.subr.mxu0 %v999
    %2573 = vmatpush1.msra.mxu0 %v998
    %2574 = vmatprep.subr.mxu0 %v1003
    %2575 = vmatpush1.msra.mxu0 %v1002
    %2576 = vmatprep.subr.mxu0 %v1007
    %2577 = vmatpush1.msra.mxu0 %v1006
    %2578 = vmatprep.subr.mxu0 %v1011
    %2579 = vmatpush1.msra.mxu0 %v1010
    %2580 = vmatprep.subr.mxu0 %v1015
    %2581 = vmatpush1.msra.mxu0 %v1014
    %2582 = vmatprep.subr.mxu0 %v1019
    %2583 = vmatpush1.msra.mxu0 %v1018
    %2584 = vmatprep.subr.mxu0 %v1023
    %2585 = vmatpush1.msra.mxu0 %v1022
    %2586 = vmatprep.subr.mxu0 %v1027
    %2587 = vmatpush1.msra.mxu0 %v1026
    %2588 = vmatprep.subr.mxu0 %v1031
    %2589 = vmatpush1.msra.mxu0 %v1030
    %2590 = vmatprep.subr.mxu0 %v1035
    %2591 = vmatpush1.msra.mxu0 %v1034
    %2592 = vmatprep.subr.mxu0 %v1039
    %2593 = vmatpush1.msra.mxu0 %v1038
    %2594 = vmatprep.subr.mxu0 %v1043
    %2595 = vmatpush1.msra.mxu0 %v1042
    %2596 = vmatprep.subr.mxu0 %v1047
    %2597 = vmatpush1.msra.mxu0 %v1046
    %2598 = vmatprep.subr.mxu0 %v1051
    %2599 = vmatpush1.msra.mxu0 %v1050
    %2600 = vmatprep.subr.mxu0 %v1055
    %2601 = vmatpush1.msra.mxu0 %v1054
    %2602 = vmatprep.subr.mxu0 %v1059
    %2603 = vmatpush1.msra.mxu0 %v1058
    %2604 = vmatprep.subr.mxu0 %v1063
    %2605 = vmatpush1.msra.mxu0 %v1062
    %2606 = vmatprep.subr.mxu0 %v1067
    %2607 = vmatpush1.msra.mxu0 %v1066
    %2608 = vmatprep.subr.mxu0 %v1071
    %2609 = vmatpush1.msra.mxu0 %v1070
    %2610 = vmatprep.subr.mxu0 %v1075
    %2611 = vmatpush1.msra.mxu0 %v1074
    %2612 = vmatprep.subr.mxu0 %v1079
    %2613 = vmatpush1.msra.mxu0 %v1078
    %2614 = vmatprep.mubr.f32.mxu0 %v2517
    %2615 = vmatmul.mubr.f32.gmra.mrb[0].mxu0 %v2516
    %v2616 = vpop.f32.mrb[0].mxu0
    %v2617 = vadd.f32 0.0, %v2616
    %v2618 = vpop.f32.mrb[0].mxu0
    %v2619 = vadd.f32 0.0, %v2618
    %2620 = vdwg.mxu0
    %2621 = vmatprep.subr.mxu0 %v1083
    %2622 = vmatpush1.msra.mxu0 %v1082
    %2623 = vmatprep.subr.mxu0 %v1087
    %2624 = vmatpush1.msra.mxu0 %v1086
    %2625 = vmatprep.subr.mxu0 %v1091
    %2626 = vmatpush1.msra.mxu0 %v1090
    %2627 = vmatprep.subr.mxu0 %v1095
    %2628 = vmatpush1.msra.mxu0 %v1094
    %2629 = vmatprep.subr.mxu0 %v1099
    %2630 = vmatpush1.msra.mxu0 %v1098
    %2631 = vmatprep.subr.mxu0 %v1103
    %2632 = vmatpush1.msra.mxu0 %v1102
    %2633 = vmatprep.subr.mxu0 %v1107
    %2634 = vmatpush1.msra.mxu0 %v1106
    %2635 = vmatprep.subr.mxu0 %v1111
    %2636 = vmatpush1.msra.mxu0 %v1110
    %2637 = vmatprep.subr.mxu0 %v1115
    %2638 = vmatpush1.msra.mxu0 %v1114
    %2639 = vmatprep.subr.mxu0 %v1119
    %2640 = vmatpush1.msra.mxu0 %v1118
    %2641 = vmatprep.subr.mxu0 %v1123
    %2642 = vmatpush1.msra.mxu0 %v1122
    %2643 = vmatprep.subr.mxu0 %v1127
    %2644 = vmatpush1.msra.mxu0 %v1126
    %2645 = vmatprep.subr.mxu0 %v1131
    %2646 = vmatpush1.msra.mxu0 %v1130
    %2647 = vmatprep.subr.mxu0 %v1135
    %2648 = vmatpush1.msra.mxu0 %v1134
    %2649 = vmatprep.subr.mxu0 %v1139
    %2650 = vmatpush1.msra.mxu0 %v1138
    %2651 = vmatprep.subr.mxu0 %v1143
    %2652 = vmatpush1.msra.mxu0 %v1142
    %2653 = vmatprep.subr.mxu0 %v1147
    %2654 = vmatpush1.msra.mxu0 %v1146
    %2655 = vmatprep.subr.mxu0 %v1151
    %2656 = vmatpush1.msra.mxu0 %v1150
    %2657 = vmatprep.subr.mxu0 %v1155
    %2658 = vmatpush1.msra.mxu0 %v1154
    %2659 = vmatprep.subr.mxu0 %v1159
    %2660 = vmatpush1.msra.mxu0 %v1158
    %2661 = vmatprep.subr.mxu0 %v1163
    %2662 = vmatpush1.msra.mxu0 %v1162
    %2663 = vmatprep.subr.mxu0 %v1167
    %2664 = vmatpush1.msra.mxu0 %v1166
    %2665 = vmatprep.subr.mxu0 %v1171
    %2666 = vmatpush1.msra.mxu0 %v1170
    %2667 = vmatprep.subr.mxu0 %v1175
    %2668 = vmatpush1.msra.mxu0 %v1174
    %2669 = vmatprep.subr.mxu0 %v1179
    %2670 = vmatpush1.msra.mxu0 %v1178
    %2671 = vmatprep.subr.mxu0 %v1183
    %2672 = vmatpush1.msra.mxu0 %v1182
    %2673 = vmatprep.subr.mxu0 %v1187
    %2674 = vmatpush1.msra.mxu0 %v1186
    %2675 = vmatprep.subr.mxu0 %v1191
    %2676 = vmatpush1.msra.mxu0 %v1190
    %2677 = vmatprep.subr.mxu0 %v1195
    %2678 = vmatpush1.msra.mxu0 %v1194
    %2679 = vmatprep.subr.mxu0 %v1199
    %2680 = vmatpush1.msra.mxu0 %v1198
    %2681 = vmatprep.subr.mxu0 %v1203
    %2682 = vmatpush1.msra.mxu0 %v1202
    %2683 = vmatprep.subr.mxu0 %v1207
    %2684 = vmatpush1.msra.mxu0 %v1206
    %2685 = vmatprep.mubr.f32.mxu0 %v2519
    %2686 = vmatmul.mubr.f32.gmra.mrb[0].mxu0 %v2518
    %v2687 = vpop.f32.mrb[0].mxu0
    %v2688 = vadd.f32 %v2617, %v2687
    %v2689 = vpop.f32.mrb[0].mxu0
    %v2690 = vadd.f32 %v2619, %v2689
    %2691 = vdwg.mxu0
    %2692 = vmatprep.subr.mxu0 %v957
    %2693 = vmatpush1.msra.mxu0 %v956
    %2694 = vmatprep.subr.mxu0 %v961
    %2695 = vmatpush1.msra.mxu0 %v960
    %2696 = vmatprep.subr.mxu0 %v965
    %2697 = vmatpush1.msra.mxu0 %v964
    %2698 = vmatprep.subr.mxu0 %v969
    %2699 = vmatpush1.msra.mxu0 %v968
    %2700 = vmatprep.subr.mxu0 %v973
    %2701 = vmatpush1.msra.mxu0 %v972
    %2702 = vmatprep.subr.mxu0 %v977
    %2703 = vmatpush1.msra.mxu0 %v976
    %2704 = vmatprep.subr.mxu0 %v981
    %2705 = vmatpush1.msra.mxu0 %v980
    %2706 = vmatprep.subr.mxu0 %v985
    %2707 = vmatpush1.msra.mxu0 %v984
    %2708 = vmatprep.subr.mxu0 %v989
    %2709 = vmatpush1.msra.mxu0 %v988
    %2710 = vmatprep.subr.mxu0 %v993
    %2711 = vmatpush1.msra.mxu0 %v992
    %2712 = vmatprep.subr.mxu0 %v997
    %2713 = vmatpush1.msra.mxu0 %v996
    %2714 = vmatprep.subr.mxu0 %v1001
    %2715 = vmatpush1.msra.mxu0 %v1000
    %2716 = vmatprep.subr.mxu0 %v1005
    %2717 = vmatpush1.msra.mxu0 %v1004
    %2718 = vmatprep.subr.mxu0 %v1009
    %2719 = vmatpush1.msra.mxu0 %v1008
    %2720 = vmatprep.subr.mxu0 %v1013
    %2721 = vmatpush1.msra.mxu0 %v1012
    %2722 = vmatprep.subr.mxu0 %v1017
    %2723 = vmatpush1.msra.mxu0 %v1016
    %2724 = vmatprep.subr.mxu0 %v1021
    %2725 = vmatpush1.msra.mxu0 %v1020
    %2726 = vmatprep.subr.mxu0 %v1025
    %2727 = vmatpush1.msra.mxu0 %v1024
    %2728 = vmatprep.subr.mxu0 %v1029
    %2729 = vmatpush1.msra.mxu0 %v1028
    %2730 = vmatprep.subr.mxu0 %v1033
    %2731 = vmatpush1.msra.mxu0 %v1032
    %2732 = vmatprep.subr.mxu0 %v1037
    %2733 = vmatpush1.msra.mxu0 %v1036
    %2734 = vmatprep.subr.mxu0 %v1041
    %2735 = vmatpush1.msra.mxu0 %v1040
    %2736 = vmatprep.subr.mxu0 %v1045
    %2737 = vmatpush1.msra.mxu0 %v1044
    %2738 = vmatprep.subr.mxu0 %v1049
    %2739 = vmatpush1.msra.mxu0 %v1048
    %2740 = vmatprep.subr.mxu0 %v1053
    %2741 = vmatpush1.msra.mxu0 %v1052
    %2742 = vmatprep.subr.mxu0 %v1057
    %2743 = vmatpush1.msra.mxu0 %v1056
    %2744 = vmatprep.subr.mxu0 %v1061
    %2745 = vmatpush1.msra.mxu0 %v1060
    %2746 = vmatprep.subr.mxu0 %v1065
    %2747 = vmatpush1.msra.mxu0 %v1064
    %2748 = vmatprep.subr.mxu0 %v1069
    %2749 = vmatpush1.msra.mxu0 %v1068
    %2750 = vmatprep.subr.mxu0 %v1073
    %2751 = vmatpush1.msra.mxu0 %v1072
    %2752 = vmatprep.subr.mxu0 %v1077
    %2753 = vmatpush1.msra.mxu0 %v1076
    %2754 = vmatprep.subr.mxu0 %v1081
    %2755 = vmatpush1.msra.mxu0 %v1080
    %2756 = vmatprep.mubr.f32.mxu0 %v2517
    %2757 = vmatmul.mubr.f32.gmra.mrb[0].mxu0 %v2516
    %v2758 = vpop.f32.mrb[0].mxu0
    %v2759 = vadd.f32 0.0, %v2758
    %v2760 = vpop.f32.mrb[0].mxu0
    %v2761 = vadd.f32 0.0, %v2760
    %2762 = vdwg.mxu0
    %2763 = vmatprep.subr.mxu0 %v1085
    %2764 = vmatpush1.msra.mxu0 %v1084
    %2765 = vmatprep.subr.mxu0 %v1089
    %2766 = vmatpush1.msra.mxu0 %v1088
    %2767 = vmatprep.subr.mxu0 %v1093
    %2768 = vmatpush1.msra.mxu0 %v1092
    %2769 = vmatprep.subr.mxu0 %v1097
    %2770 = vmatpush1.msra.mxu0 %v1096
    %2771 = vmatprep.subr.mxu0 %v1101
    %2772 = vmatpush1.msra.mxu0 %v1100
    %2773 = vmatprep.subr.mxu0 %v1105
    %2774 = vmatpush1.msra.mxu0 %v1104
    %2775 = vmatprep.subr.mxu0 %v1109
    %2776 = vmatpush1.msra.mxu0 %v1108
    %2777 = vmatprep.subr.mxu0 %v1113
    %2778 = vmatpush1.msra.mxu0 %v1112
    %2779 = vmatprep.subr.mxu0 %v1117
    %2780 = vmatpush1.msra.mxu0 %v1116
    %2781 = vmatprep.subr.mxu0 %v1121
    %2782 = vmatpush1.msra.mxu0 %v1120
    %2783 = vmatprep.subr.mxu0 %v1125
    %2784 = vmatpush1.msra.mxu0 %v1124
    %2785 = vmatprep.subr.mxu0 %v1129
    %2786 = vmatpush1.msra.mxu0 %v1128
    %2787 = vmatprep.subr.mxu0 %v1133
    %2788 = vmatpush1.msra.mxu0 %v1132
    %2789 = vmatprep.subr.mxu0 %v1137
    %2790 = vmatpush1.msra.mxu0 %v1136
    %2791 = vmatprep.subr.mxu0 %v1141
    %2792 = vmatpush1.msra.mxu0 %v1140
    %2793 = vmatprep.subr.mxu0 %v1145
    %2794 = vmatpush1.msra.mxu0 %v1144
    %2795 = vmatprep.subr.mxu0 %v1149
    %2796 = vmatpush1.msra.mxu0 %v1148
    %2797 = vmatprep.subr.mxu0 %v1153
    %2798 = vmatpush1.msra.mxu0 %v1152
    %2799 = vmatprep.subr.mxu0 %v1157
    %2800 = vmatpush1.msra.mxu0 %v1156
    %2801 = vmatprep.subr.mxu0 %v1161
    %2802 = vmatpush1.msra.mxu0 %v1160
    %2803 = vmatprep.subr.mxu0 %v1165
    %2804 = vmatpush1.msra.mxu0 %v1164
    %2805 = vmatprep.subr.mxu0 %v1169
    %2806 = vmatpush1.msra.mxu0 %v1168
    %2807 = vmatprep.subr.mxu0 %v1173
    %2808 = vmatpush1.msra.mxu0 %v1172
    %2809 = vmatprep.subr.mxu0 %v1177
    %2810 = vmatpush1.msra.mxu0 %v1176
    %2811 = vmatprep.subr.mxu0 %v1181
    %2812 = vmatpush1.msra.mxu0 %v1180
    %2813 = vmatprep.subr.mxu0 %v1185
    %2814 = vmatpush1.msra.mxu0 %v1184
    %2815 = vmatprep.subr.mxu0 %v1189
    %2816 = vmatpush1.msra.mxu0 %v1188
    %2817 = vmatprep.subr.mxu0 %v1193
    %2818 = vmatpush1.msra.mxu0 %v1192
    %2819 = vmatprep.subr.mxu0 %v1197
    %2820 = vmatpush1.msra.mxu0 %v1196
    %2821 = vmatprep.subr.mxu0 %v1201
    %2822 = vmatpush1.msra.mxu0 %v1200
    %2823 = vmatprep.subr.mxu0 %v1205
    %2824 = vmatpush1.msra.mxu0 %v1204
    %2825 = vmatprep.subr.mxu0 %v1209
    %2826 = vmatpush1.msra.mxu0 %v1208
    %2827 = vmatprep.mubr.f32.mxu0 %v2519
    %2828 = vmatmul.mubr.f32.gmra.mrb[0].mxu0 %v2518
    %v2829 = vpop.f32.mrb[0].mxu0
    %v2830 = vadd.f32 %v2759, %v2829
    %v2831 = vpop.f32.mrb[0].mxu0
    %v2832 = vadd.f32 %v2761, %v2831
    %2833 = vdwg.mxu0
    %v2834 = vadd.f32 %v2546, %v2688
    %v2835 = vadd.f32 %v2547, %v2690
    %v2836 = vadd.f32 %v2548, %v2830
    %v2837 = vadd.f32 %v2549, %v2832
    %v2838 = vadd.f32 %v2834, %v1217
    %v2839 = vadd.f32 %v2835, %v1221
    %v2840 = vadd.f32 %v2836, %v1225
    %v2841 = vadd.f32 %v2837, %v1229
    %v2842 = vtanh.pop %v2838
    %v2843 = vtanh.pop %v2839
    %v2844 = vtanh.pop %v2840
    %v2845 = vtanh.pop %v2841
    %s2846 = scalar_lea.vmem [#allocation3], 128
    %2847 = vst [vmem:[%s2846] sm:$0xff] %v2842
    %2848 = vst [vmem:[%s2846 + $0x8] sm:$0xff] %v2843
    %2849 = vst [vmem:[%s2846 + $0x10] sm:$0xff] %v2844
    %2850 = vst [vmem:[%s2846 + $0x18] sm:$0xff] %v2845
    %v2851 = vmul.f32 %v2842, %v1530
    %v2852 = vmul.f32 %v2843, %v1534
    %v2853 = vmul.f32 %v2844, %v1538
    %v2854 = vmul.f32 %v2845, %v1542
    %v2855 = vadd.f32 %v2851, %v2852
    %v2856 = vadd.f32 %v2855, %v2853
    %v2857 = vadd.f32 %v2856, %v2854
    %2858 = vadd.xlane.f32.xlu0 %v2857
    %v2859 = vpop.xlane.xlu0 %2858
    %v2860 = vadd.f32 %v2859, %v1556
    %v2861 = vxor.u32 %v2860, 2147483648
    %v2862 = vmul.f32 %v2861, 1.442695
    %v2863 = vpow.pop %v2862
    %v2864 = vadd.f32 %v2863, 1.0
    %v2865 = vrcp.pop %v2864
    %v2866 = vmul.f32 1.0, %v2865
    %s2867 = scalar_lea.vmem [#allocation2], 128
    %v2868 = vld [vmem:[%s2867] sm:$0xff]
    %v2869 = vld [vmem:[%s2867 + $0x8] sm:$0xff]
    %v2870 = vld [vmem:[%s2867 + $0x10] sm:$0xff]
    %v2871 = vld [vmem:[%s2867 + $0x18] sm:$0xff]
    %v2872 = vmul.f32 %v2866, %v2868
    %v2873 = vmul.f32 %v2866, %v2869
    %v2874 = vmul.f32 %v2866, %v2870
    %v2875 = vmul.f32 %v2866, %v2871
    %2876 = vmatprep.subr.mxu0 %v955
    %2877 = vmatpush1.msra.mxu0 %v954
    %2878 = vmatprep.subr.mxu0 %v959
    %2879 = vmatpush1.msra.mxu0 %v958
    %2880 = vmatprep.subr.mxu0 %v963
    %2881 = vmatpush1.msra.mxu0 %v962
    %2882 = vmatprep.subr.mxu0 %v967
    %2883 = vmatpush1.msra.mxu0 %v966
    %2884 = vmatprep.subr.mxu0 %v971
    %2885 = vmatpush1.msra.mxu0 %v970
    %2886 = vmatprep.subr.mxu0 %v975
    %2887 = vmatpush1.msra.mxu0 %v974
    %2888 = vmatprep.subr.mxu0 %v979
    %2889 = vmatpush1.msra.mxu0 %v978
    %2890 = vmatprep.subr.mxu0 %v983
    %2891 = vmatpush1.msra.mxu0 %v982
    %2892 = vmatprep.subr.mxu0 %v987
    %2893 = vmatpush1.msra.mxu0 %v986
    %2894 = vmatprep.subr.mxu0 %v991
    %2895 = vmatpush1.msra.mxu0 %v990
    %2896 = vmatprep.subr.mxu0 %v995
    %2897 = vmatpush1.msra.mxu0 %v994
    %2898 = vmatprep.subr.mxu0 %v999
    %2899 = vmatpush1.msra.mxu0 %v998
    %2900 = vmatprep.subr.mxu0 %v1003
    %2901 = vmatpush1.msra.mxu0 %v1002
    %2902 = vmatprep.subr.mxu0 %v1007
    %2903 = vmatpush1.msra.mxu0 %v1006
    %2904 = vmatprep.subr.mxu0 %v1011
    %2905 = vmatpush1.msra.mxu0 %v1010
    %2906 = vmatprep.subr.mxu0 %v1015
    %2907 = vmatpush1.msra.mxu0 %v1014
    %2908 = vmatprep.subr.mxu0 %v1019
    %2909 = vmatpush1.msra.mxu0 %v1018
    %2910 = vmatprep.subr.mxu0 %v1023
    %2911 = vmatpush1.msra.mxu0 %v1022
    %2912 = vmatprep.subr.mxu0 %v1027
    %2913 = vmatpush1.msra.mxu0 %v1026
    %2914 = vmatprep.subr.mxu0 %v1031
    %2915 = vmatpush1.msra.mxu0 %v1030
    %2916 = vmatprep.subr.mxu0 %v1035
    %2917 = vmatpush1.msra.mxu0 %v1034
    %2918 = vmatprep.subr.mxu0 %v1039
    %2919 = vmatpush1.msra.mxu0 %v1038
    %2920 = vmatprep.subr.mxu0 %v1043
    %2921 = vmatpush1.msra.mxu0 %v1042
    %2922 = vmatprep.subr.mxu0 %v1047
    %2923 = vmatpush1.msra.mxu0 %v1046
    %2924 = vmatprep.subr.mxu0 %v1051
    %2925 = vmatpush1.msra.mxu0 %v1050
    %2926 = vmatprep.subr.mxu0 %v1055
    %2927 = vmatpush1.msra.mxu0 %v1054
    %2928 = vmatprep.subr.mxu0 %v1059
    %2929 = vmatpush1.msra.mxu0 %v1058
    %2930 = vmatprep.subr.mxu0 %v1063
    %2931 = vmatpush1.msra.mxu0 %v1062
    %2932 = vmatprep.subr.mxu0 %v1067
    %2933 = vmatpush1.msra.mxu0 %v1066
    %2934 = vmatprep.subr.mxu0 %v1071
    %2935 = vmatpush1.msra.mxu0 %v1070
    %2936 = vmatprep.subr.mxu0 %v1075
    %2937 = vmatpush1.msra.mxu0 %v1074
    %2938 = vmatprep.subr.mxu0 %v1079
    %2939 = vmatpush1.msra.mxu0 %v1078
    %2940 = vmatprep.mubr.f32.mxu0 %v2843
    %2941 = vmatmul.mubr.f32.gmra.mrb[0].mxu0 %v2842
    %v2942 = vpop.f32.mrb[0].mxu0
    %v2943 = vadd.f32 0.0, %v2942
    %v2944 = vpop.f32.mrb[0].mxu0
    %v2945 = vadd.f32 0.0, %v2944
    %2946 = vdwg.mxu0
    %2947 = vmatprep.subr.mxu0 %v1083
    %2948 = vmatpush1.msra.mxu0 %v1082
    %2949 = vmatprep.subr.mxu0 %v1087
    %2950 = vmatpush1.msra.mxu0 %v1086
    %2951 = vmatprep.subr.mxu0 %v1091
    %2952 = vmatpush1.msra.mxu0 %v1090
    %2953 = vmatprep.subr.mxu0 %v1095
    %2954 = vmatpush1.msra.mxu0 %v1094
    %2955 = vmatprep.subr.mxu0 %v1099
    %2956 = vmatpush1.msra.mxu0 %v1098
    %2957 = vmatprep.subr.mxu0 %v1103
    %2958 = vmatpush1.msra.mxu0 %v1102
    %2959 = vmatprep.subr.mxu0 %v1107
    %2960 = vmatpush1.msra.mxu0 %v1106
    %2961 = vmatprep.subr.mxu0 %v1111
    %2962 = vmatpush1.msra.mxu0 %v1110
    %2963 = vmatprep.subr.mxu0 %v1115
    %2964 = vmatpush1.msra.mxu0 %v1114
    %2965 = vmatprep.subr.mxu0 %v1119
    %2966 = vmatpush1.msra.mxu0 %v1118
    %2967 = vmatprep.subr.mxu0 %v1123
    %2968 = vmatpush1.msra.mxu0 %v1122
    %2969 = vmatprep.subr.mxu0 %v1127
    %2970 = vmatpush1.msra.mxu0 %v1126
    %2971 = vmatprep.subr.mxu0 %v1131
    %2972 = vmatpush1.msra.mxu0 %v1130
    %2973 = vmatprep.subr.mxu0 %v1135
    %2974 = vmatpush1.msra.mxu0 %v1134
    %2975 = vmatprep.subr.mxu0 %v1139
    %2976 = vmatpush1.msra.mxu0 %v1138
    %2977 = vmatprep.subr.mxu0 %v1143
    %2978 = vmatpush1.msra.mxu0 %v1142
    %2979 = vmatprep.subr.mxu0 %v1147
    %2980 = vmatpush1.msra.mxu0 %v1146
    %2981 = vmatprep.subr.mxu0 %v1151
    %2982 = vmatpush1.msra.mxu0 %v1150
    %2983 = vmatprep.subr.mxu0 %v1155
    %2984 = vmatpush1.msra.mxu0 %v1154
    %2985 = vmatprep.subr.mxu0 %v1159
    %2986 = vmatpush1.msra.mxu0 %v1158
    %2987 = vmatprep.subr.mxu0 %v1163
    %2988 = vmatpush1.msra.mxu0 %v1162
    %2989 = vmatprep.subr.mxu0 %v1167
    %2990 = vmatpush1.msra.mxu0 %v1166
    %2991 = vmatprep.subr.mxu0 %v1171
    %2992 = vmatpush1.msra.mxu0 %v1170
    %2993 = vmatprep.subr.mxu0 %v1175
    %2994 = vmatpush1.msra.mxu0 %v1174
    %2995 = vmatprep.subr.mxu0 %v1179
    %2996 = vmatpush1.msra.mxu0 %v1178
    %2997 = vmatprep.subr.mxu0 %v1183
    %2998 = vmatpush1.msra.mxu0 %v1182
    %2999 = vmatprep.subr.mxu0 %v1187
    %3000 = vmatpush1.msra.mxu0 %v1186
    %3001 = vmatprep.subr.mxu0 %v1191
    %3002 = vmatpush1.msra.mxu0 %v1190
    %3003 = vmatprep.subr.mxu0 %v1195
    %3004 = vmatpush1.msra.mxu0 %v1194
    %3005 = vmatprep.subr.mxu0 %v1199
    %3006 = vmatpush1.msra.mxu0 %v1198
    %3007 = vmatprep.subr.mxu0 %v1203
    %3008 = vmatpush1.msra.mxu0 %v1202
    %3009 = vmatprep.subr.mxu0 %v1207
    %3010 = vmatpush1.msra.mxu0 %v1206
    %3011 = vmatprep.mubr.f32.mxu0 %v2845
    %3012 = vmatmul.mubr.f32.gmra.mrb[0].mxu0 %v2844
    %v3013 = vpop.f32.mrb[0].mxu0
    %v3014 = vadd.f32 %v2943, %v3013
    %v3015 = vpop.f32.mrb[0].mxu0
    %v3016 = vadd.f32 %v2945, %v3015
    %3017 = vdwg.mxu0
    %3018 = vmatprep.subr.mxu0 %v957
    %3019 = vmatpush1.msra.mxu0 %v956
    %3020 = vmatprep.subr.mxu0 %v961
    %3021 = vmatpush1.msra.mxu0 %v960
    %3022 = vmatprep.subr.mxu0 %v965
    %3023 = vmatpush1.msra.mxu0 %v964
    %3024 = vmatprep.subr.mxu0 %v969
    %3025 = vmatpush1.msra.mxu0 %v968
    %3026 = vmatprep.subr.mxu0 %v973
    %3027 = vmatpush1.msra.mxu0 %v972
    %3028 = vmatprep.subr.mxu0 %v977
    %3029 = vmatpush1.msra.mxu0 %v976
    %3030 = vmatprep.subr.mxu0 %v981
    %3031 = vmatpush1.msra.mxu0 %v980
    %3032 = vmatprep.subr.mxu0 %v985
    %3033 = vmatpush1.msra.mxu0 %v984
    %3034 = vmatprep.subr.mxu0 %v989
    %3035 = vmatpush1.msra.mxu0 %v988
    %3036 = vmatprep.subr.mxu0 %v993
    %3037 = vmatpush1.msra.mxu0 %v992
    %3038 = vmatprep.subr.mxu0 %v997
    %3039 = vmatpush1.msra.mxu0 %v996
    %3040 = vmatprep.subr.mxu0 %v1001
    %3041 = vmatpush1.msra.mxu0 %v1000
    %3042 = vmatprep.subr.mxu0 %v1005
    %3043 = vmatpush1.msra.mxu0 %v1004
    %3044 = vmatprep.subr.mxu0 %v1009
    %3045 = vmatpush1.msra.mxu0 %v1008
    %3046 = vmatprep.subr.mxu0 %v1013
    %3047 = vmatpush1.msra.mxu0 %v1012
    %3048 = vmatprep.subr.mxu0 %v1017
    %3049 = vmatpush1.msra.mxu0 %v1016
    %3050 = vmatprep.subr.mxu0 %v1021
    %3051 = vmatpush1.msra.mxu0 %v1020
    %3052 = vmatprep.subr.mxu0 %v1025
    %3053 = vmatpush1.msra.mxu0 %v1024
    %3054 = vmatprep.subr.mxu0 %v1029
    %3055 = vmatpush1.msra.mxu0 %v1028
    %3056 = vmatprep.subr.mxu0 %v1033
    %3057 = vmatpush1.msra.mxu0 %v1032
    %3058 = vmatprep.subr.mxu0 %v1037
    %3059 = vmatpush1.msra.mxu0 %v1036
    %3060 = vmatprep.subr.mxu0 %v1041
    %3061 = vmatpush1.msra.mxu0 %v1040
    %3062 = vmatprep.subr.mxu0 %v1045
    %3063 = vmatpush1.msra.mxu0 %v1044
    %3064 = vmatprep.subr.mxu0 %v1049
    %3065 = vmatpush1.msra.mxu0 %v1048
    %3066 = vmatprep.subr.mxu0 %v1053
    %3067 = vmatpush1.msra.mxu0 %v1052
    %3068 = vmatprep.subr.mxu0 %v1057
    %3069 = vmatpush1.msra.mxu0 %v1056
    %3070 = vmatprep.subr.mxu0 %v1061
    %3071 = vmatpush1.msra.mxu0 %v1060
    %3072 = vmatprep.subr.mxu0 %v1065
    %3073 = vmatpush1.msra.mxu0 %v1064
    %3074 = vmatprep.subr.mxu0 %v1069
    %3075 = vmatpush1.msra.mxu0 %v1068
    %3076 = vmatprep.subr.mxu0 %v1073
    %3077 = vmatpush1.msra.mxu0 %v1072
    %3078 = vmatprep.subr.mxu0 %v1077
    %3079 = vmatpush1.msra.mxu0 %v1076
    %3080 = vmatprep.subr.mxu0 %v1081
    %3081 = vmatpush1.msra.mxu0 %v1080
    %3082 = vmatprep.mubr.f32.mxu0 %v2843
    %3083 = vmatmul.mubr.f32.gmra.mrb[0].mxu0 %v2842
    %v3084 = vpop.f32.mrb[0].mxu0
    %v3085 = vadd.f32 0.0, %v3084
    %v3086 = vpop.f32.mrb[0].mxu0
    %v3087 = vadd.f32 0.0, %v3086
    %3088 = vdwg.mxu0
    %3089 = vmatprep.subr.mxu0 %v1085
    %3090 = vmatpush1.msra.mxu0 %v1084
    %3091 = vmatprep.subr.mxu0 %v1089
    %3092 = vmatpush1.msra.mxu0 %v1088
    %3093 = vmatprep.subr.mxu0 %v1093
    %3094 = vmatpush1.msra.mxu0 %v1092
    %3095 = vmatprep.subr.mxu0 %v1097
    %3096 = vmatpush1.msra.mxu0 %v1096
    %3097 = vmatprep.subr.mxu0 %v1101
    %3098 = vmatpush1.msra.mxu0 %v1100
    %3099 = vmatprep.subr.mxu0 %v1105
    %3100 = vmatpush1.msra.mxu0 %v1104
    %3101 = vmatprep.subr.mxu0 %v1109
    %3102 = vmatpush1.msra.mxu0 %v1108
    %3103 = vmatprep.subr.mxu0 %v1113
    %3104 = vmatpush1.msra.mxu0 %v1112
    %3105 = vmatprep.subr.mxu0 %v1117
    %3106 = vmatpush1.msra.mxu0 %v1116
    %3107 = vmatprep.subr.mxu0 %v1121
    %3108 = vmatpush1.msra.mxu0 %v1120
    %3109 = vmatprep.subr.mxu0 %v1125
    %3110 = vmatpush1.msra.mxu0 %v1124
    %3111 = vmatprep.subr.mxu0 %v1129
    %3112 = vmatpush1.msra.mxu0 %v1128
    %3113 = vmatprep.subr.mxu0 %v1133
    %3114 = vmatpush1.msra.mxu0 %v1132
    %3115 = vmatprep.subr.mxu0 %v1137
    %3116 = vmatpush1.msra.mxu0 %v1136
    %3117 = vmatprep.subr.mxu0 %v1141
    %3118 = vmatpush1.msra.mxu0 %v1140
    %3119 = vmatprep.subr.mxu0 %v1145
    %3120 = vmatpush1.msra.mxu0 %v1144
    %3121 = vmatprep.subr.mxu0 %v1149
    %3122 = vmatpush1.msra.mxu0 %v1148
    %3123 = vmatprep.subr.mxu0 %v1153
    %3124 = vmatpush1.msra.mxu0 %v1152
    %3125 = vmatprep.subr.mxu0 %v1157
    %3126 = vmatpush1.msra.mxu0 %v1156
    %3127 = vmatprep.subr.mxu0 %v1161
    %3128 = vmatpush1.msra.mxu0 %v1160
    %3129 = vmatprep.subr.mxu0 %v1165
    %3130 = vmatpush1.msra.mxu0 %v1164
    %3131 = vmatprep.subr.mxu0 %v1169
    %3132 = vmatpush1.msra.mxu0 %v1168
    %3133 = vmatprep.subr.mxu0 %v1173
    %3134 = vmatpush1.msra.mxu0 %v1172
    %3135 = vmatprep.subr.mxu0 %v1177
    %3136 = vmatpush1.msra.mxu0 %v1176
    %3137 = vmatprep.subr.mxu0 %v1181
    %3138 = vmatpush1.msra.mxu0 %v1180
    %3139 = vmatprep.subr.mxu0 %v1185
    %3140 = vmatpush1.msra.mxu0 %v1184
    %3141 = vmatprep.subr.mxu0 %v1189
    %3142 = vmatpush1.msra.mxu0 %v1188
    %3143 = vmatprep.subr.mxu0 %v1193
    %3144 = vmatpush1.msra.mxu0 %v1192
    %3145 = vmatprep.subr.mxu0 %v1197
    %3146 = vmatpush1.msra.mxu0 %v1196
    %3147 = vmatprep.subr.mxu0 %v1201
    %3148 = vmatpush1.msra.mxu0 %v1200
    %3149 = vmatprep.subr.mxu0 %v1205
    %3150 = vmatpush1.msra.mxu0 %v1204
    %3151 = vmatprep.subr.mxu0 %v1209
    %3152 = vmatpush1.msra.mxu0 %v1208
    %3153 = vmatprep.mubr.f32.mxu0 %v2845
    %3154 = vmatmul.mubr.f32.gmra.mrb[0].mxu0 %v2844
    %v3155 = vpop.f32.mrb[0].mxu0
    %v3156 = vadd.f32 %v3085, %v3155
    %v3157 = vpop.f32.mrb[0].mxu0
    %v3158 = vadd.f32 %v3087, %v3157
    %3159 = vdwg.mxu0
    %v3160 = vadd.f32 %v2872, %v3014
    %v3161 = vadd.f32 %v2873, %v3016
    %v3162 = vadd.f32 %v2874, %v3156
    %v3163 = vadd.f32 %v2875, %v3158
    %v3164 = vadd.f32 %v3160, %v1217
    %v3165 = vadd.f32 %v3161, %v1221
    %v3166 = vadd.f32 %v3162, %v1225
    %v3167 = vadd.f32 %v3163, %v1229
    %v3168 = vtanh.pop %v3164
    %v3169 = vtanh.pop %v3165
    %v3170 = vtanh.pop %v3166
    %v3171 = vtanh.pop %v3167
    %s3172 = scalar_lea.vmem [#allocation3], 160
    %3173 = vst [vmem:[%s3172] sm:$0xff] %v3168
    %3174 = vst [vmem:[%s3172 + $0x8] sm:$0xff] %v3169
    %3175 = vst [vmem:[%s3172 + $0x10] sm:$0xff] %v3170
    %3176 = vst [vmem:[%s3172 + $0x18] sm:$0xff] %v3171
    %v3177 = vmul.f32 %v3168, %v1530
    %v3178 = vmul.f32 %v3169, %v1534
    %v3179 = vmul.f32 %v3170, %v1538
    %v3180 = vmul.f32 %v3171, %v1542
    %v3181 = vadd.f32 %v3177, %v3178
    %v3182 = vadd.f32 %v3181, %v3179
    %v3183 = vadd.f32 %v3182, %v3180
    %3184 = vadd.xlane.f32.xlu0 %v3183
    %v3185 = vpop.xlane.xlu0 %3184
    %v3186 = vadd.f32 %v3185, %v1556
    %v3187 = vxor.u32 %v3186, 2147483648
    %v3188 = vmul.f32 %v3187, 1.442695
    %v3189 = vpow.pop %v3188
    %v3190 = vadd.f32 %v3189, 1.0
    %v3191 = vrcp.pop %v3190
    %v3192 = vmul.f32 1.0, %v3191
    %s3193 = scalar_lea.vmem [#allocation2], 160
    %v3194 = vld [vmem:[%s3193] sm:$0xff]
    %v3195 = vld [vmem:[%s3193 + $0x8] sm:$0xff]
    %v3196 = vld [vmem:[%s3193 + $0x10] sm:$0xff]
    %v3197 = vld [vmem:[%s3193 + $0x18] sm:$0xff]
    %v3198 = vmul.f32 %v3192, %v3194
    %v3199 = vmul.f32 %v3192, %v3195
    %v3200 = vmul.f32 %v3192, %v3196
    %v3201 = vmul.f32 %v3192, %v3197
    %3202 = vmatprep.subr.mxu0 %v955
    %3203 = vmatpush1.msra.mxu0 %v954
    %3204 = vmatprep.subr.mxu0 %v959
    %3205 = vmatpush1.msra.mxu0 %v958
    %3206 = vmatprep.subr.mxu0 %v963
    %3207 = vmatpush1.msra.mxu0 %v962
    %3208 = vmatprep.subr.mxu0 %v967
    %3209 = vmatpush1.msra.mxu0 %v966
    %3210 = vmatprep.subr.mxu0 %v971
    %3211 = vmatpush1.msra.mxu0 %v970
    %3212 = vmatprep.subr.mxu0 %v975
    %3213 = vmatpush1.msra.mxu0 %v974
    %3214 = vmatprep.subr.mxu0 %v979
    %3215 = vmatpush1.msra.mxu0 %v978
    %3216 = vmatprep.subr.mxu0 %v983
    %3217 = vmatpush1.msra.mxu0 %v982
    %3218 = vmatprep.subr.mxu0 %v987
    %3219 = vmatpush1.msra.mxu0 %v986
    %3220 = vmatprep.subr.mxu0 %v991
    %3221 = vmatpush1.msra.mxu0 %v990
    %3222 = vmatprep.subr.mxu0 %v995
    %3223 = vmatpush1.msra.mxu0 %v994
    %3224 = vmatprep.subr.mxu0 %v999
    %3225 = vmatpush1.msra.mxu0 %v998
    %3226 = vmatprep.subr.mxu0 %v1003
    %3227 = vmatpush1.msra.mxu0 %v1002
    %3228 = vmatprep.subr.mxu0 %v1007
    %3229 = vmatpush1.msra.mxu0 %v1006
    %3230 = vmatprep.subr.mxu0 %v1011
    %3231 = vmatpush1.msra.mxu0 %v1010
    %3232 = vmatprep.subr.mxu0 %v1015
    %3233 = vmatpush1.msra.mxu0 %v1014
    %3234 = vmatprep.subr.mxu0 %v1019
    %3235 = vmatpush1.msra.mxu0 %v1018
    %3236 = vmatprep.subr.mxu0 %v1023
    %3237 = vmatpush1.msra.mxu0 %v1022
    %3238 = vmatprep.subr.mxu0 %v1027
    %3239 = vmatpush1.msra.mxu0 %v1026
    %3240 = vmatprep.subr.mxu0 %v1031
    %3241 = vmatpush1.msra.mxu0 %v1030
    %3242 = vmatprep.subr.mxu0 %v1035
    %3243 = vmatpush1.msra.mxu0 %v1034
    %3244 = vmatprep.subr.mxu0 %v1039
    %3245 = vmatpush1.msra.mxu0 %v1038
    %3246 = vmatprep.subr.mxu0 %v1043
    %3247 = vmatpush1.msra.mxu0 %v1042
    %3248 = vmatprep.subr.mxu0 %v1047
    %3249 = vmatpush1.msra.mxu0 %v1046
    %3250 = vmatprep.subr.mxu0 %v1051
    %3251 = vmatpush1.msra.mxu0 %v1050
    %3252 = vmatprep.subr.mxu0 %v1055
    %3253 = vmatpush1.msra.mxu0 %v1054
    %3254 = vmatprep.subr.mxu0 %v1059
    %3255 = vmatpush1.msra.mxu0 %v1058
    %3256 = vmatprep.subr.mxu0 %v1063
    %3257 = vmatpush1.msra.mxu0 %v1062
    %3258 = vmatprep.subr.mxu0 %v1067
    %3259 = vmatpush1.msra.mxu0 %v1066
    %3260 = vmatprep.subr.mxu0 %v1071
    %3261 = vmatpush1.msra.mxu0 %v1070
    %3262 = vmatprep.subr.mxu0 %v1075
    %3263 = vmatpush1.msra.mxu0 %v1074
    %3264 = vmatprep.subr.mxu0 %v1079
    %3265 = vmatpush1.msra.mxu0 %v1078
    %3266 = vmatprep.mubr.f32.mxu0 %v3169
    %3267 = vmatmul.mubr.f32.gmra.mrb[0].mxu0 %v3168
    %v3268 = vpop.f32.mrb[0].mxu0
    %v3269 = vadd.f32 0.0, %v3268
    %v3270 = vpop.f32.mrb[0].mxu0
    %v3271 = vadd.f32 0.0, %v3270
    %3272 = vdwg.mxu0
    %3273 = vmatprep.subr.mxu0 %v1083
    %3274 = vmatpush1.msra.mxu0 %v1082
    %3275 = vmatprep.subr.mxu0 %v1087
    %3276 = vmatpush1.msra.mxu0 %v1086
    %3277 = vmatprep.subr.mxu0 %v1091
    %3278 = vmatpush1.msra.mxu0 %v1090
    %3279 = vmatprep.subr.mxu0 %v1095
    %3280 = vmatpush1.msra.mxu0 %v1094
    %3281 = vmatprep.subr.mxu0 %v1099
    %3282 = vmatpush1.msra.mxu0 %v1098
    %3283 = vmatprep.subr.mxu0 %v1103
    %3284 = vmatpush1.msra.mxu0 %v1102
    %3285 = vmatprep.subr.mxu0 %v1107
    %3286 = vmatpush1.msra.mxu0 %v1106
    %3287 = vmatprep.subr.mxu0 %v1111
    %3288 = vmatpush1.msra.mxu0 %v1110
    %3289 = vmatprep.subr.mxu0 %v1115
    %3290 = vmatpush1.msra.mxu0 %v1114
    %3291 = vmatprep.subr.mxu0 %v1119
    %3292 = vmatpush1.msra.mxu0 %v1118
    %3293 = vmatprep.subr.mxu0 %v1123
    %3294 = vmatpush1.msra.mxu0 %v1122
    %3295 = vmatprep.subr.mxu0 %v1127
    %3296 = vmatpush1.msra.mxu0 %v1126
    %3297 = vmatprep.subr.mxu0 %v1131
    %3298 = vmatpush1.msra.mxu0 %v1130
    %3299 = vmatprep.subr.mxu0 %v1135
    %3300 = vmatpush1.msra.mxu0 %v1134
    %3301 = vmatprep.subr.mxu0 %v1139
    %3302 = vmatpush1.msra.mxu0 %v1138
    %3303 = vmatprep.subr.mxu0 %v1143
    %3304 = vmatpush1.msra.mxu0 %v1142
    %3305 = vmatprep.subr.mxu0 %v1147
    %3306 = vmatpush1.msra.mxu0 %v1146
    %3307 = vmatprep.subr.mxu0 %v1151
    %3308 = vmatpush1.msra.mxu0 %v1150
    %3309 = vmatprep.subr.mxu0 %v1155
    %3310 = vmatpush1.msra.mxu0 %v1154
    %3311 = vmatprep.subr.mxu0 %v1159
    %3312 = vmatpush1.msra.mxu0 %v1158
    %3313 = vmatprep.subr.mxu0 %v1163
    %3314 = vmatpush1.msra.mxu0 %v1162
    %3315 = vmatprep.subr.mxu0 %v1167
    %3316 = vmatpush1.msra.mxu0 %v1166
    %3317 = vmatprep.subr.mxu0 %v1171
    %3318 = vmatpush1.msra.mxu0 %v1170
    %3319 = vmatprep.subr.mxu0 %v1175
    %3320 = vmatpush1.msra.mxu0 %v1174
    %3321 = vmatprep.subr.mxu0 %v1179
    %3322 = vmatpush1.msra.mxu0 %v1178
    %3323 = vmatprep.subr.mxu0 %v1183
    %3324 = vmatpush1.msra.mxu0 %v1182
    %3325 = vmatprep.subr.mxu0 %v1187
    %3326 = vmatpush1.msra.mxu0 %v1186
    %3327 = vmatprep.subr.mxu0 %v1191
    %3328 = vmatpush1.msra.mxu0 %v1190
    %3329 = vmatprep.subr.mxu0 %v1195
    %3330 = vmatpush1.msra.mxu0 %v1194
    %3331 = vmatprep.subr.mxu0 %v1199
    %3332 = vmatpush1.msra.mxu0 %v1198
    %3333 = vmatprep.subr.mxu0 %v1203
    %3334 = vmatpush1.msra.mxu0 %v1202
    %3335 = vmatprep.subr.mxu0 %v1207
    %3336 = vmatpush1.msra.mxu0 %v1206
    %3337 = vmatprep.mubr.f32.mxu0 %v3171
    %3338 = vmatmul.mubr.f32.gmra.mrb[0].mxu0 %v3170
    %v3339 = vpop.f32.mrb[0].mxu0
    %v3340 = vadd.f32 %v3269, %v3339
    %v3341 = vpop.f32.mrb[0].mxu0
    %v3342 = vadd.f32 %v3271, %v3341
    %3343 = vdwg.mxu0
    %3344 = vmatprep.subr.mxu0 %v957
    %3345 = vmatpush1.msra.mxu0 %v956
    %3346 = vmatprep.subr.mxu0 %v961
    %3347 = vmatpush1.msra.mxu0 %v960
    %3348 = vmatprep.subr.mxu0 %v965
    %3349 = vmatpush1.msra.mxu0 %v964
    %3350 = vmatprep.subr.mxu0 %v969
    %3351 = vmatpush1.msra.mxu0 %v968
    %3352 = vmatprep.subr.mxu0 %v973
    %3353 = vmatpush1.msra.mxu0 %v972
    %3354 = vmatprep.subr.mxu0 %v977
    %3355 = vmatpush1.msra.mxu0 %v976
    %3356 = vmatprep.subr.mxu0 %v981
    %3357 = vmatpush1.msra.mxu0 %v980
    %3358 = vmatprep.subr.mxu0 %v985
    %3359 = vmatpush1.msra.mxu0 %v984
    %3360 = vmatprep.subr.mxu0 %v989
    %3361 = vmatpush1.msra.mxu0 %v988
    %3362 = vmatprep.subr.mxu0 %v993
    %3363 = vmatpush1.msra.mxu0 %v992
    %3364 = vmatprep.subr.mxu0 %v997
    %3365 = vmatpush1.msra.mxu0 %v996
    %3366 = vmatprep.subr.mxu0 %v1001
    %3367 = vmatpush1.msra.mxu0 %v1000
    %3368 = vmatprep.subr.mxu0 %v1005
    %3369 = vmatpush1.msra.mxu0 %v1004
    %3370 = vmatprep.subr.mxu0 %v1009
    %3371 = vmatpush1.msra.mxu0 %v1008
    %3372 = vmatprep.subr.mxu0 %v1013
    %3373 = vmatpush1.msra.mxu0 %v1012
    %3374 = vmatprep.subr.mxu0 %v1017
    %3375 = vmatpush1.msra.mxu0 %v1016
    %3376 = vmatprep.subr.mxu0 %v1021
    %3377 = vmatpush1.msra.mxu0 %v1020
    %3378 = vmatprep.subr.mxu0 %v1025
    %3379 = vmatpush1.msra.mxu0 %v1024
    %3380 = vmatprep.subr.mxu0 %v1029
    %3381 = vmatpush1.msra.mxu0 %v1028
    %3382 = vmatprep.subr.mxu0 %v1033
    %3383 = vmatpush1.msra.mxu0 %v1032
    %3384 = vmatprep.subr.mxu0 %v1037
    %3385 = vmatpush1.msra.mxu0 %v1036
    %3386 = vmatprep.subr.mxu0 %v1041
    %3387 = vmatpush1.msra.mxu0 %v1040
    %3388 = vmatprep.subr.mxu0 %v1045
    %3389 = vmatpush1.msra.mxu0 %v1044
    %3390 = vmatprep.subr.mxu0 %v1049
    %3391 = vmatpush1.msra.mxu0 %v1048
    %3392 = vmatprep.subr.mxu0 %v1053
    %3393 = vmatpush1.msra.mxu0 %v1052
    %3394 = vmatprep.subr.mxu0 %v1057
    %3395 = vmatpush1.msra.mxu0 %v1056
    %3396 = vmatprep.subr.mxu0 %v1061
    %3397 = vmatpush1.msra.mxu0 %v1060
    %3398 = vmatprep.subr.mxu0 %v1065
    %3399 = vmatpush1.msra.mxu0 %v1064
    %3400 = vmatprep.subr.mxu0 %v1069
    %3401 = vmatpush1.msra.mxu0 %v1068
    %3402 = vmatprep.subr.mxu0 %v1073
    %3403 = vmatpush1.msra.mxu0 %v1072
    %3404 = vmatprep.subr.mxu0 %v1077
    %3405 = vmatpush1.msra.mxu0 %v1076
    %3406 = vmatprep.subr.mxu0 %v1081
    %3407 = vmatpush1.msra.mxu0 %v1080
    %3408 = vmatprep.mubr.f32.mxu0 %v3169
    %3409 = vmatmul.mubr.f32.gmra.mrb[0].mxu0 %v3168
    %v3410 = vpop.f32.mrb[0].mxu0
    %v3411 = vadd.f32 0.0, %v3410
    %v3412 = vpop.f32.mrb[0].mxu0
    %v3413 = vadd.f32 0.0, %v3412
    %3414 = vdwg.mxu0
    %3415 = vmatprep.subr.mxu0 %v1085
    %3416 = vmatpush1.msra.mxu0 %v1084
    %3417 = vmatprep.subr.mxu0 %v1089
    %3418 = vmatpush1.msra.mxu0 %v1088
    %3419 = vmatprep.subr.mxu0 %v1093
    %3420 = vmatpush1.msra.mxu0 %v1092
    %3421 = vmatprep.subr.mxu0 %v1097
    %3422 = vmatpush1.msra.mxu0 %v1096
    %3423 = vmatprep.subr.mxu0 %v1101
    %3424 = vmatpush1.msra.mxu0 %v1100
    %3425 = vmatprep.subr.mxu0 %v1105
    %3426 = vmatpush1.msra.mxu0 %v1104
    %3427 = vmatprep.subr.mxu0 %v1109
    %3428 = vmatpush1.msra.mxu0 %v1108
    %3429 = vmatprep.subr.mxu0 %v1113
    %3430 = vmatpush1.msra.mxu0 %v1112
    %3431 = vmatprep.subr.mxu0 %v1117
    %3432 = vmatpush1.msra.mxu0 %v1116
    %3433 = vmatprep.subr.mxu0 %v1121
    %3434 = vmatpush1.msra.mxu0 %v1120
    %3435 = vmatprep.subr.mxu0 %v1125
    %3436 = vmatpush1.msra.mxu0 %v1124
    %3437 = vmatprep.subr.mxu0 %v1129
    %3438 = vmatpush1.msra.mxu0 %v1128
    %3439 = vmatprep.subr.mxu0 %v1133
    %3440 = vmatpush1.msra.mxu0 %v1132
    %3441 = vmatprep.subr.mxu0 %v1137
    %3442 = vmatpush1.msra.mxu0 %v1136
    %3443 = vmatprep.subr.mxu0 %v1141
    %3444 = vmatpush1.msra.mxu0 %v1140
    %3445 = vmatprep.subr.mxu0 %v1145
    %3446 = vmatpush1.msra.mxu0 %v1144
    %3447 = vmatprep.subr.mxu0 %v1149
    %3448 = vmatpush1.msra.mxu0 %v1148
    %3449 = vmatprep.subr.mxu0 %v1153
    %3450 = vmatpush1.msra.mxu0 %v1152
    %3451 = vmatprep.subr.mxu0 %v1157
    %3452 = vmatpush1.msra.mxu0 %v1156
    %3453 = vmatprep.subr.mxu0 %v1161
    %3454 = vmatpush1.msra.mxu0 %v1160
    %3455 = vmatprep.subr.mxu0 %v1165
    %3456 = vmatpush1.msra.mxu0 %v1164
    %3457 = vmatprep.subr.mxu0 %v1169
    %3458 = vmatpush1.msra.mxu0 %v1168
    %3459 = vmatprep.subr.mxu0 %v1173
    %3460 = vmatpush1.msra.mxu0 %v1172
    %3461 = vmatprep.subr.mxu0 %v1177
    %3462 = vmatpush1.msra.mxu0 %v1176
    %3463 = vmatprep.subr.mxu0 %v1181
    %3464 = vmatpush1.msra.mxu0 %v1180
    %3465 = vmatprep.subr.mxu0 %v1185
    %3466 = vmatpush1.msra.mxu0 %v1184
    %3467 = vmatprep.subr.mxu0 %v1189
    %3468 = vmatpush1.msra.mxu0 %v1188
    %3469 = vmatprep.subr.mxu0 %v1193
    %3470 = vmatpush1.msra.mxu0 %v1192
    %3471 = vmatprep.subr.mxu0 %v1197
    %3472 = vmatpush1.msra.mxu0 %v1196
    %3473 = vmatprep.subr.mxu0 %v1201
    %3474 = vmatpush1.msra.mxu0 %v1200
    %3475 = vmatprep.subr.mxu0 %v1205
    %3476 = vmatpush1.msra.mxu0 %v1204
    %3477 = vmatprep.subr.mxu0 %v1209
    %3478 = vmatpush1.msra.mxu0 %v1208
    %3479 = vmatprep.mubr.f32.mxu0 %v3171
    %3480 = vmatmul.mubr.f32.gmra.mrb[0].mxu0 %v3170
    %v3481 = vpop.f32.mrb[0].mxu0
    %v3482 = vadd.f32 %v3411, %v3481
    %v3483 = vpop.f32.mrb[0].mxu0
    %v3484 = vadd.f32 %v3413, %v3483
    %3485 = vdwg.mxu0
    %v3486 = vadd.f32 %v3198, %v3340
    %v3487 = vadd.f32 %v3199, %v3342
    %v3488 = vadd.f32 %v3200, %v3482
    %v3489 = vadd.f32 %v3201, %v3484
    %v3490 = vadd.f32 %v3486, %v1217
    %v3491 = vadd.f32 %v3487, %v1221
    %v3492 = vadd.f32 %v3488, %v1225
    %v3493 = vadd.f32 %v3489, %v1229
    %v3494 = vtanh.pop %v3490
    %v3495 = vtanh.pop %v3491
    %v3496 = vtanh.pop %v3492
    %v3497 = vtanh.pop %v3493
    %s3498 = scalar_lea.vmem [#allocation3], 192
    %3499 = vst [vmem:[%s3498] sm:$0xff] %v3494
    %3500 = vst [vmem:[%s3498 + $0x8] sm:$0xff] %v3495
    %3501 = vst [vmem:[%s3498 + $0x10] sm:$0xff] %v3496
    %3502 = vst [vmem:[%s3498 + $0x18] sm:$0xff] %v3497
    %v3503 = vmul.f32 %v3494, %v1530
    %v3504 = vmul.f32 %v3495, %v1534
    %v3505 = vmul.f32 %v3496, %v1538
    %v3506 = vmul.f32 %v3497, %v1542
    %v3507 = vadd.f32 %v3503, %v3504
    %v3508 = vadd.f32 %v3507, %v3505
    %v3509 = vadd.f32 %v3508, %v3506
    %3510 = vadd.xlane.f32.xlu0 %v3509
    %v3511 = vpop.xlane.xlu0 %3510
    %v3512 = vadd.f32 %v3511, %v1556
    %v3513 = vxor.u32 %v3512, 2147483648
    %v3514 = vmul.f32 %v3513, 1.442695
    %v3515 = vpow.pop %v3514
    %v3516 = vadd.f32 %v3515, 1.0
    %v3517 = vrcp.pop %v3516
    %v3518 = vmul.f32 1.0, %v3517
    %s3519 = scalar_lea.vmem [#allocation2], 192
    %v3520 = vld [vmem:[%s3519] sm:$0xff]
    %v3521 = vld [vmem:[%s3519 + $0x8] sm:$0xff]
    %v3522 = vld [vmem:[%s3519 + $0x10] sm:$0xff]
    %v3523 = vld [vmem:[%s3519 + $0x18] sm:$0xff]
    %v3524 = vmul.f32 %v3518, %v3520
    %v3525 = vmul.f32 %v3518, %v3521
    %v3526 = vmul.f32 %v3518, %v3522
    %v3527 = vmul.f32 %v3518, %v3523
    %3528 = vmatprep.subr.mxu0 %v955
    %3529 = vmatpush1.msra.mxu0 %v954
    %3530 = vmatprep.subr.mxu0 %v959
    %3531 = vmatpush1.msra.mxu0 %v958
    %3532 = vmatprep.subr.mxu0 %v963
    %3533 = vmatpush1.msra.mxu0 %v962
    %3534 = vmatprep.subr.mxu0 %v967
    %3535 = vmatpush1.msra.mxu0 %v966
    %3536 = vmatprep.subr.mxu0 %v971
    %3537 = vmatpush1.msra.mxu0 %v970
    %3538 = vmatprep.subr.mxu0 %v975
    %3539 = vmatpush1.msra.mxu0 %v974
    %3540 = vmatprep.subr.mxu0 %v979
    %3541 = vmatpush1.msra.mxu0 %v978
    %3542 = vmatprep.subr.mxu0 %v983
    %3543 = vmatpush1.msra.mxu0 %v982
    %3544 = vmatprep.subr.mxu0 %v987
    %3545 = vmatpush1.msra.mxu0 %v986
    %3546 = vmatprep.subr.mxu0 %v991
    %3547 = vmatpush1.msra.mxu0 %v990
    %3548 = vmatprep.subr.mxu0 %v995
    %3549 = vmatpush1.msra.mxu0 %v994
    %3550 = vmatprep.subr.mxu0 %v999
    %3551 = vmatpush1.msra.mxu0 %v998
    %3552 = vmatprep.subr.mxu0 %v1003
    %3553 = vmatpush1.msra.mxu0 %v1002
    %3554 = vmatprep.subr.mxu0 %v1007
    %3555 = vmatpush1.msra.mxu0 %v1006
    %3556 = vmatprep.subr.mxu0 %v1011
    %3557 = vmatpush1.msra.mxu0 %v1010
    %3558 = vmatprep.subr.mxu0 %v1015
    %3559 = vmatpush1.msra.mxu0 %v1014
    %3560 = vmatprep.subr.mxu0 %v1019
    %3561 = vmatpush1.msra.mxu0 %v1018
    %3562 = vmatprep.subr.mxu0 %v1023
    %3563 = vmatpush1.msra.mxu0 %v1022
    %3564 = vmatprep.subr.mxu0 %v1027
    %3565 = vmatpush1.msra.mxu0 %v1026
    %3566 = vmatprep.subr.mxu0 %v1031
    %3567 = vmatpush1.msra.mxu0 %v1030
    %3568 = vmatprep.subr.mxu0 %v1035
    %3569 = vmatpush1.msra.mxu0 %v1034
    %3570 = vmatprep.subr.mxu0 %v1039
    %3571 = vmatpush1.msra.mxu0 %v1038
    %3572 = vmatprep.subr.mxu0 %v1043
    %3573 = vmatpush1.msra.mxu0 %v1042
    %3574 = vmatprep.subr.mxu0 %v1047
    %3575 = vmatpush1.msra.mxu0 %v1046
    %3576 = vmatprep.subr.mxu0 %v1051
    %3577 = vmatpush1.msra.mxu0 %v1050
    %3578 = vmatprep.subr.mxu0 %v1055
    %3579 = vmatpush1.msra.mxu0 %v1054
    %3580 = vmatprep.subr.mxu0 %v1059
    %3581 = vmatpush1.msra.mxu0 %v1058
    %3582 = vmatprep.subr.mxu0 %v1063
    %3583 = vmatpush1.msra.mxu0 %v1062
    %3584 = vmatprep.subr.mxu0 %v1067
    %3585 = vmatpush1.msra.mxu0 %v1066
    %3586 = vmatprep.subr.mxu0 %v1071
    %3587 = vmatpush1.msra.mxu0 %v1070
    %3588 = vmatprep.subr.mxu0 %v1075
    %3589 = vmatpush1.msra.mxu0 %v1074
    %3590 = vmatprep.subr.mxu0 %v1079
    %3591 = vmatpush1.msra.mxu0 %v1078
    %3592 = vmatprep.mubr.f32.mxu0 %v3495
    %3593 = vmatmul.mubr.f32.gmra.mrb[0].mxu0 %v3494
    %v3594 = vpop.f32.mrb[0].mxu0
    %v3595 = vadd.f32 0.0, %v3594
    %v3596 = vpop.f32.mrb[0].mxu0
    %v3597 = vadd.f32 0.0, %v3596
    %3598 = vdwg.mxu0
    %3599 = vmatprep.subr.mxu0 %v1083
    %3600 = vmatpush1.msra.mxu0 %v1082
    %3601 = vmatprep.subr.mxu0 %v1087
    %3602 = vmatpush1.msra.mxu0 %v1086
    %3603 = vmatprep.subr.mxu0 %v1091
    %3604 = vmatpush1.msra.mxu0 %v1090
    %3605 = vmatprep.subr.mxu0 %v1095
    %3606 = vmatpush1.msra.mxu0 %v1094
    %3607 = vmatprep.subr.mxu0 %v1099
    %3608 = vmatpush1.msra.mxu0 %v1098
    %3609 = vmatprep.subr.mxu0 %v1103
    %3610 = vmatpush1.msra.mxu0 %v1102
    %3611 = vmatprep.subr.mxu0 %v1107
    %3612 = vmatpush1.msra.mxu0 %v1106
    %3613 = vmatprep.subr.mxu0 %v1111
    %3614 = vmatpush1.msra.mxu0 %v1110
    %3615 = vmatprep.subr.mxu0 %v1115
    %3616 = vmatpush1.msra.mxu0 %v1114
    %3617 = vmatprep.subr.mxu0 %v1119
    %3618 = vmatpush1.msra.mxu0 %v1118
    %3619 = vmatprep.subr.mxu0 %v1123
    %3620 = vmatpush1.msra.mxu0 %v1122
    %3621 = vmatprep.subr.mxu0 %v1127
    %3622 = vmatpush1.msra.mxu0 %v1126
    %3623 = vmatprep.subr.mxu0 %v1131
    %3624 = vmatpush1.msra.mxu0 %v1130
    %3625 = vmatprep.subr.mxu0 %v1135
    %3626 = vmatpush1.msra.mxu0 %v1134
    %3627 = vmatprep.subr.mxu0 %v1139
    %3628 = vmatpush1.msra.mxu0 %v1138
    %3629 = vmatprep.subr.mxu0 %v1143
    %3630 = vmatpush1.msra.mxu0 %v1142
    %3631 = vmatprep.subr.mxu0 %v1147
    %3632 = vmatpush1.msra.mxu0 %v1146
    %3633 = vmatprep.subr.mxu0 %v1151
    %3634 = vmatpush1.msra.mxu0 %v1150
    %3635 = vmatprep.subr.mxu0 %v1155
    %3636 = vmatpush1.msra.mxu0 %v1154
    %3637 = vmatprep.subr.mxu0 %v1159
    %3638 = vmatpush1.msra.mxu0 %v1158
    %3639 = vmatprep.subr.mxu0 %v1163
    %3640 = vmatpush1.msra.mxu0 %v1162
    %3641 = vmatprep.subr.mxu0 %v1167
    %3642 = vmatpush1.msra.mxu0 %v1166
    %3643 = vmatprep.subr.mxu0 %v1171
    %3644 = vmatpush1.msra.mxu0 %v1170
    %3645 = vmatprep.subr.mxu0 %v1175
    %3646 = vmatpush1.msra.mxu0 %v1174
    %3647 = vmatprep.subr.mxu0 %v1179
    %3648 = vmatpush1.msra.mxu0 %v1178
    %3649 = vmatprep.subr.mxu0 %v1183
    %3650 = vmatpush1.msra.mxu0 %v1182
    %3651 = vmatprep.subr.mxu0 %v1187
    %3652 = vmatpush1.msra.mxu0 %v1186
    %3653 = vmatprep.subr.mxu0 %v1191
    %3654 = vmatpush1.msra.mxu0 %v1190
    %3655 = vmatprep.subr.mxu0 %v1195
    %3656 = vmatpush1.msra.mxu0 %v1194
    %3657 = vmatprep.subr.mxu0 %v1199
    %3658 = vmatpush1.msra.mxu0 %v1198
    %3659 = vmatprep.subr.mxu0 %v1203
    %3660 = vmatpush1.msra.mxu0 %v1202
    %3661 = vmatprep.subr.mxu0 %v1207
    %3662 = vmatpush1.msra.mxu0 %v1206
    %3663 = vmatprep.mubr.f32.mxu0 %v3497
    %3664 = vmatmul.mubr.f32.gmra.mrb[0].mxu0 %v3496
    %v3665 = vpop.f32.mrb[0].mxu0
    %v3666 = vadd.f32 %v3595, %v3665
    %v3667 = vpop.f32.mrb[0].mxu0
    %v3668 = vadd.f32 %v3597, %v3667
    %3669 = vdwg.mxu0
    %3670 = vmatprep.subr.mxu0 %v957
    %3671 = vmatpush1.msra.mxu0 %v956
    %3672 = vmatprep.subr.mxu0 %v961
    %3673 = vmatpush1.msra.mxu0 %v960
    %3674 = vmatprep.subr.mxu0 %v965
    %3675 = vmatpush1.msra.mxu0 %v964
    %3676 = vmatprep.subr.mxu0 %v969
    %3677 = vmatpush1.msra.mxu0 %v968
    %3678 = vmatprep.subr.mxu0 %v973
    %3679 = vmatpush1.msra.mxu0 %v972
    %3680 = vmatprep.subr.mxu0 %v977
    %3681 = vmatpush1.msra.mxu0 %v976
    %3682 = vmatprep.subr.mxu0 %v981
    %3683 = vmatpush1.msra.mxu0 %v980
    %3684 = vmatprep.subr.mxu0 %v985
    %3685 = vmatpush1.msra.mxu0 %v984
    %3686 = vmatprep.subr.mxu0 %v989
    %3687 = vmatpush1.msra.mxu0 %v988
    %3688 = vmatprep.subr.mxu0 %v993
    %3689 = vmatpush1.msra.mxu0 %v992
    %3690 = vmatprep.subr.mxu0 %v997
    %3691 = vmatpush1.msra.mxu0 %v996
    %3692 = vmatprep.subr.mxu0 %v1001
    %3693 = vmatpush1.msra.mxu0 %v1000
    %3694 = vmatprep.subr.mxu0 %v1005
    %3695 = vmatpush1.msra.mxu0 %v1004
    %3696 = vmatprep.subr.mxu0 %v1009
    %3697 = vmatpush1.msra.mxu0 %v1008
    %3698 = vmatprep.subr.mxu0 %v1013
    %3699 = vmatpush1.msra.mxu0 %v1012
    %3700 = vmatprep.subr.mxu0 %v1017
    %3701 = vmatpush1.msra.mxu0 %v1016
    %3702 = vmatprep.subr.mxu0 %v1021
    %3703 = vmatpush1.msra.mxu0 %v1020
    %3704 = vmatprep.subr.mxu0 %v1025
    %3705 = vmatpush1.msra.mxu0 %v1024
    %3706 = vmatprep.subr.mxu0 %v1029
    %3707 = vmatpush1.msra.mxu0 %v1028
    %3708 = vmatprep.subr.mxu0 %v1033
    %3709 = vmatpush1.msra.mxu0 %v1032
    %3710 = vmatprep.subr.mxu0 %v1037
    %3711 = vmatpush1.msra.mxu0 %v1036
    %3712 = vmatprep.subr.mxu0 %v1041
    %3713 = vmatpush1.msra.mxu0 %v1040
    %3714 = vmatprep.subr.mxu0 %v1045
    %3715 = vmatpush1.msra.mxu0 %v1044
    %3716 = vmatprep.subr.mxu0 %v1049
    %3717 = vmatpush1.msra.mxu0 %v1048
    %3718 = vmatprep.subr.mxu0 %v1053
    %3719 = vmatpush1.msra.mxu0 %v1052
    %3720 = vmatprep.subr.mxu0 %v1057
    %3721 = vmatpush1.msra.mxu0 %v1056
    %3722 = vmatprep.subr.mxu0 %v1061
    %3723 = vmatpush1.msra.mxu0 %v1060
    %3724 = vmatprep.subr.mxu0 %v1065
    %3725 = vmatpush1.msra.mxu0 %v1064
    %3726 = vmatprep.subr.mxu0 %v1069
    %3727 = vmatpush1.msra.mxu0 %v1068
    %3728 = vmatprep.subr.mxu0 %v1073
    %3729 = vmatpush1.msra.mxu0 %v1072
    %3730 = vmatprep.subr.mxu0 %v1077
    %3731 = vmatpush1.msra.mxu0 %v1076
    %3732 = vmatprep.subr.mxu0 %v1081
    %3733 = vmatpush1.msra.mxu0 %v1080
    %3734 = vmatprep.mubr.f32.mxu0 %v3495
    %3735 = vmatmul.mubr.f32.gmra.mrb[0].mxu0 %v3494
    %v3736 = vpop.f32.mrb[0].mxu0
    %v3737 = vadd.f32 0.0, %v3736
    %v3738 = vpop.f32.mrb[0].mxu0
    %v3739 = vadd.f32 0.0, %v3738
    %3740 = vdwg.mxu0
    %3741 = vmatprep.subr.mxu0 %v1085
    %3742 = vmatpush1.msra.mxu0 %v1084
    %3743 = vmatprep.subr.mxu0 %v1089
    %3744 = vmatpush1.msra.mxu0 %v1088
    %3745 = vmatprep.subr.mxu0 %v1093
    %3746 = vmatpush1.msra.mxu0 %v1092
    %3747 = vmatprep.subr.mxu0 %v1097
    %3748 = vmatpush1.msra.mxu0 %v1096
    %3749 = vmatprep.subr.mxu0 %v1101
    %3750 = vmatpush1.msra.mxu0 %v1100
    %3751 = vmatprep.subr.mxu0 %v1105
    %3752 = vmatpush1.msra.mxu0 %v1104
    %3753 = vmatprep.subr.mxu0 %v1109
    %3754 = vmatpush1.msra.mxu0 %v1108
    %3755 = vmatprep.subr.mxu0 %v1113
    %3756 = vmatpush1.msra.mxu0 %v1112
    %3757 = vmatprep.subr.mxu0 %v1117
    %3758 = vmatpush1.msra.mxu0 %v1116
    %3759 = vmatprep.subr.mxu0 %v1121
    %3760 = vmatpush1.msra.mxu0 %v1120
    %3761 = vmatprep.subr.mxu0 %v1125
    %3762 = vmatpush1.msra.mxu0 %v1124
    %3763 = vmatprep.subr.mxu0 %v1129
    %3764 = vmatpush1.msra.mxu0 %v1128
    %3765 = vmatprep.subr.mxu0 %v1133
    %3766 = vmatpush1.msra.mxu0 %v1132
    %3767 = vmatprep.subr.mxu0 %v1137
    %3768 = vmatpush1.msra.mxu0 %v1136
    %3769 = vmatprep.subr.mxu0 %v1141
    %3770 = vmatpush1.msra.mxu0 %v1140
    %3771 = vmatprep.subr.mxu0 %v1145
    %3772 = vmatpush1.msra.mxu0 %v1144
    %3773 = vmatprep.subr.mxu0 %v1149
    %3774 = vmatpush1.msra.mxu0 %v1148
    %3775 = vmatprep.subr.mxu0 %v1153
    %3776 = vmatpush1.msra.mxu0 %v1152
    %3777 = vmatprep.subr.mxu0 %v1157
    %3778 = vmatpush1.msra.mxu0 %v1156
    %3779 = vmatprep.subr.mxu0 %v1161
    %3780 = vmatpush1.msra.mxu0 %v1160
    %3781 = vmatprep.subr.mxu0 %v1165
    %3782 = vmatpush1.msra.mxu0 %v1164
    %3783 = vmatprep.subr.mxu0 %v1169
    %3784 = vmatpush1.msra.mxu0 %v1168
    %3785 = vmatprep.subr.mxu0 %v1173
    %3786 = vmatpush1.msra.mxu0 %v1172
    %3787 = vmatprep.subr.mxu0 %v1177
    %3788 = vmatpush1.msra.mxu0 %v1176
    %3789 = vmatprep.subr.mxu0 %v1181
    %3790 = vmatpush1.msra.mxu0 %v1180
    %3791 = vmatprep.subr.mxu0 %v1185
    %3792 = vmatpush1.msra.mxu0 %v1184
    %3793 = vmatprep.subr.mxu0 %v1189
    %3794 = vmatpush1.msra.mxu0 %v1188
    %3795 = vmatprep.subr.mxu0 %v1193
    %3796 = vmatpush1.msra.mxu0 %v1192
    %3797 = vmatprep.subr.mxu0 %v1197
    %3798 = vmatpush1.msra.mxu0 %v1196
    %3799 = vmatprep.subr.mxu0 %v1201
    %3800 = vmatpush1.msra.mxu0 %v1200
    %3801 = vmatprep.subr.mxu0 %v1205
    %3802 = vmatpush1.msra.mxu0 %v1204
    %3803 = vmatprep.subr.mxu0 %v1209
    %3804 = vmatpush1.msra.mxu0 %v1208
    %3805 = vmatprep.mubr.f32.mxu0 %v3497
    %3806 = vmatmul.mubr.f32.gmra.mrb[0].mxu0 %v3496
    %v3807 = vpop.f32.mrb[0].mxu0
    %v3808 = vadd.f32 %v3737, %v3807
    %v3809 = vpop.f32.mrb[0].mxu0
    %v3810 = vadd.f32 %v3739, %v3809
    %3811 = vdwg.mxu0
    %v3812 = vadd.f32 %v3524, %v3666
    %v3813 = vadd.f32 %v3525, %v3668
    %v3814 = vadd.f32 %v3526, %v3808
    %v3815 = vadd.f32 %v3527, %v3810
    %v3816 = vadd.f32 %v3812, %v1217
    %v3817 = vadd.f32 %v3813, %v1221
    %v3818 = vadd.f32 %v3814, %v1225
    %v3819 = vadd.f32 %v3815, %v1229
    %v3820 = vtanh.pop %v3816
    %v3821 = vtanh.pop %v3817
    %v3822 = vtanh.pop %v3818
    %v3823 = vtanh.pop %v3819
    %s3824 = scalar_lea.vmem [#allocation3], 224
    %3825 = vst [vmem:[%s3824] sm:$0xff] %v3820
    %3826 = vst [vmem:[%s3824 + $0x8] sm:$0xff] %v3821
    %3827 = vst [vmem:[%s3824 + $0x10] sm:$0xff] %v3822
    %3828 = vst [vmem:[%s3824 + $0x18] sm:$0xff] %v3823
    %v3829 = vld [vmem:[#allocation3] sm:$0xff]
    %v3830 = vld [vmem:[#allocation3 + $0x8] sm:$0xff]
    %v3831 = vld [vmem:[#allocation3 + $0x10] sm:$0xff]
    %v3832 = vld [vmem:[#allocation3 + $0x18] sm:$0xff]
    %v3833 = vld [vmem:[#allocation3 + $0x20] sm:$0xff]
    %v3834 = vld [vmem:[#allocation3 + $0x28] sm:$0xff]
    %v3835 = vld [vmem:[#allocation3 + $0x30] sm:$0xff]
    %v3836 = vld [vmem:[#allocation3 + $0x38] sm:$0xff]
    %v3837 = vld [vmem:[#allocation3 + $0x40] sm:$0xff]
    %v3838 = vld [vmem:[#allocation3 + $0x48] sm:$0xff]
    %v3839 = vld [vmem:[#allocation3 + $0x50] sm:$0xff]
    %v3840 = vld [vmem:[#allocation3 + $0x58] sm:$0xff]
    %v3841 = vld [vmem:[#allocation3 + $0x60] sm:$0xff]
    %v3842 = vld [vmem:[#allocation3 + $0x68] sm:$0xff]
    %v3843 = vld [vmem:[#allocation3 + $0x70] sm:$0xff]
    %v3844 = vld [vmem:[#allocation3 + $0x78] sm:$0xff]
    %v3845 = vld [vmem:[#allocation3 + $0x80] sm:$0xff]
    %v3846 = vld [vmem:[#allocation3 + $0x88] sm:$0xff]
    %v3847 = vld [vmem:[#allocation3 + $0x90] sm:$0xff]
    %v3848 = vld [vmem:[#allocation3 + $0x98] sm:$0xff]
    %v3849 = vld [vmem:[#allocation3 + $0xa0] sm:$0xff]
    %v3850 = vld [vmem:[#allocation3 + $0xa8] sm:$0xff]
    %v3851 = vld [vmem:[#allocation3 + $0xb0] sm:$0xff]
    %v3852 = vld [vmem:[#allocation3 + $0xb8] sm:$0xff]
    %v3853 = vld [vmem:[#allocation3 + $0xc0] sm:$0xff]
    %v3854 = vld [vmem:[#allocation3 + $0xc8] sm:$0xff]
    %v3855 = vld [vmem:[#allocation3 + $0xd0] sm:$0xff]
    %v3856 = vld [vmem:[#allocation3 + $0xd8] sm:$0xff]
    %v3857 = vld [vmem:[#allocation3 + $0xe0] sm:$0xff]
    %v3858 = vld [vmem:[#allocation3 + $0xe8] sm:$0xff]
    %v3859 = vld [vmem:[#allocation3 + $0xf0] sm:$0xff]
    %v3860 = vld [vmem:[#allocation3 + $0xf8] sm:$0xff]
    %v3861 = vld [vmem:[#allocation18] sm:$0xff]
    %v3862 = vld [vmem:[#allocation18 + $0x8] sm:$0xff]
    %v3863 = vld [vmem:[#allocation18 + $0x10] sm:$0xff]
    %v3864 = vld [vmem:[#allocation18 + $0x18] sm:$0xff]
    %v3865 = vld [vmem:[#allocation18 + $0x20] sm:$0xff]
    %v3866 = vld [vmem:[#allocation18 + $0x28] sm:$0xff]
    %v3867 = vld [vmem:[#allocation18 + $0x30] sm:$0xff]
    %v3868 = vld [vmem:[#allocation18 + $0x38] sm:$0xff]
    %v3869 = vld [vmem:[#allocation18 + $0x40] sm:$0xff]
    %v3870 = vld [vmem:[#allocation18 + $0x48] sm:$0xff]
    %v3871 = vld [vmem:[#allocation18 + $0x50] sm:$0xff]
    %v3872 = vld [vmem:[#allocation18 + $0x58] sm:$0xff]
    %v3873 = vld [vmem:[#allocation18 + $0x60] sm:$0xff]
    %v3874 = vld [vmem:[#allocation18 + $0x68] sm:$0xff]
    %v3875 = vld [vmem:[#allocation18 + $0x70] sm:$0xff]
    %v3876 = vld [vmem:[#allocation18 + $0x78] sm:$0xff]
    %v3877 = vld [vmem:[#allocation18 + $0x80] sm:$0xff]
    %v3878 = vld [vmem:[#allocation18 + $0x88] sm:$0xff]
    %v3879 = vld [vmem:[#allocation18 + $0x90] sm:$0xff]
    %v3880 = vld [vmem:[#allocation18 + $0x98] sm:$0xff]
    %v3881 = vld [vmem:[#allocation18 + $0xa0] sm:$0xff]
    %v3882 = vld [vmem:[#allocation18 + $0xa8] sm:$0xff]
    %v3883 = vld [vmem:[#allocation18 + $0xb0] sm:$0xff]
    %v3884 = vld [vmem:[#allocation18 + $0xb8] sm:$0xff]
    %v3885 = vld [vmem:[#allocation18 + $0xc0] sm:$0xff]
    %v3886 = vld [vmem:[#allocation18 + $0xc8] sm:$0xff]
    %v3887 = vld [vmem:[#allocation18 + $0xd0] sm:$0xff]
    %v3888 = vld [vmem:[#allocation18 + $0xd8] sm:$0xff]
    %v3889 = vld [vmem:[#allocation18 + $0xe0] sm:$0xff]
    %v3890 = vld [vmem:[#allocation18 + $0xe8] sm:$0xff]
    %v3891 = vld [vmem:[#allocation18 + $0xf0] sm:$0xff]
    %v3892 = vld [vmem:[#allocation18 + $0xf8] sm:$0xff]
    %v3893 = vld [vmem:[#allocation18 + $0x100] sm:$0xff]
    %v3894 = vld [vmem:[#allocation18 + $0x108] sm:$0xff]
    %v3895 = vld [vmem:[#allocation18 + $0x110] sm:$0xff]
    %v3896 = vld [vmem:[#allocation18 + $0x118] sm:$0xff]
    %v3897 = vld [vmem:[#allocation18 + $0x120] sm:$0xff]
    %v3898 = vld [vmem:[#allocation18 + $0x128] sm:$0xff]
    %v3899 = vld [vmem:[#allocation18 + $0x130] sm:$0xff]
    %v3900 = vld [vmem:[#allocation18 + $0x138] sm:$0xff]
    %v3901 = vld [vmem:[#allocation18 + $0x140] sm:$0xff]
    %v3902 = vld [vmem:[#allocation18 + $0x148] sm:$0xff]
    %v3903 = vld [vmem:[#allocation18 + $0x150] sm:$0xff]
    %v3904 = vld [vmem:[#allocation18 + $0x158] sm:$0xff]
    %v3905 = vld [vmem:[#allocation18 + $0x160] sm:$0xff]
    %v3906 = vld [vmem:[#allocation18 + $0x168] sm:$0xff]
    %v3907 = vld [vmem:[#allocation18 + $0x170] sm:$0xff]
    %v3908 = vld [vmem:[#allocation18 + $0x178] sm:$0xff]
    %v3909 = vld [vmem:[#allocation18 + $0x180] sm:$0xff]
    %v3910 = vld [vmem:[#allocation18 + $0x188] sm:$0xff]
    %v3911 = vld [vmem:[#allocation18 + $0x190] sm:$0xff]
    %v3912 = vld [vmem:[#allocation18 + $0x198] sm:$0xff]
    %v3913 = vld [vmem:[#allocation18 + $0x1a0] sm:$0xff]
    %v3914 = vld [vmem:[#allocation18 + $0x1a8] sm:$0xff]
    %v3915 = vld [vmem:[#allocation18 + $0x1b0] sm:$0xff]
    %v3916 = vld [vmem:[#allocation18 + $0x1b8] sm:$0xff]
    %v3917 = vld [vmem:[#allocation18 + $0x1c0] sm:$0xff]
    %v3918 = vld [vmem:[#allocation18 + $0x1c8] sm:$0xff]
    %v3919 = vld [vmem:[#allocation18 + $0x1d0] sm:$0xff]
    %v3920 = vld [vmem:[#allocation18 + $0x1d8] sm:$0xff]
    %v3921 = vld [vmem:[#allocation18 + $0x1e0] sm:$0xff]
    %v3922 = vld [vmem:[#allocation18 + $0x1e8] sm:$0xff]
    %v3923 = vld [vmem:[#allocation18 + $0x1f0] sm:$0xff]
    %v3924 = vld [vmem:[#allocation18 + $0x1f8] sm:$0xff]
    %v3925 = vld [vmem:[%s11] sm:$0x1]
    %v3927 = vlaneseq
    %v3928 = vshrl.u32 %v3927, 7
    %v3929 = vsub.s32 0, %v3928
    %v3930 = vrot.slane %v3925, %v3929
    %3932 = vmatprep.subr.mxu0 0.0
    %3933 = vmatpush1.msra.mxu0 %v3861
    %3934 = vmatprep.subr.mxu0 0.0
    %3935 = vmatpush1.msra.mxu0 %v3862
    %3936 = vmatprep.subr.mxu0 0.0
    %3937 = vmatpush1.msra.mxu0 %v3863
    %3938 = vmatprep.subr.mxu0 0.0
    %3939 = vmatpush1.msra.mxu0 %v3864
    %3940 = vmatprep.subr.mxu0 0.0
    %3941 = vmatpush1.msra.mxu0 %v3865
    %3942 = vmatprep.subr.mxu0 0.0
    %3943 = vmatpush1.msra.mxu0 %v3866
    %3944 = vmatprep.subr.mxu0 0.0
    %3945 = vmatpush1.msra.mxu0 %v3867
    %3946 = vmatprep.subr.mxu0 0.0
    %3947 = vmatpush1.msra.mxu0 %v3868
    %3948 = vmatprep.subr.mxu0 0.0
    %3949 = vmatpush1.msra.mxu0 %v3869
    %3950 = vmatprep.subr.mxu0 0.0
    %3951 = vmatpush1.msra.mxu0 %v3870
    %3952 = vmatprep.subr.mxu0 0.0
    %3953 = vmatpush1.msra.mxu0 %v3871
    %3954 = vmatprep.subr.mxu0 0.0
    %3955 = vmatpush1.msra.mxu0 %v3872
    %3956 = vmatprep.subr.mxu0 0.0
    %3957 = vmatpush1.msra.mxu0 %v3873
    %3958 = vmatprep.subr.mxu0 0.0
    %3959 = vmatpush1.msra.mxu0 %v3874
    %3960 = vmatprep.subr.mxu0 0.0
    %3961 = vmatpush1.msra.mxu0 %v3875
    %3962 = vmatprep.subr.mxu0 0.0
    %3963 = vmatpush1.msra.mxu0 %v3876
    %3964 = vmatprep.subr.mxu0 0.0
    %3965 = vmatpush1.msra.mxu0 %v3877
    %3966 = vmatprep.subr.mxu0 0.0
    %3967 = vmatpush1.msra.mxu0 %v3878
    %3968 = vmatprep.subr.mxu0 0.0
    %3969 = vmatpush1.msra.mxu0 %v3879
    %3970 = vmatprep.subr.mxu0 0.0
    %3971 = vmatpush1.msra.mxu0 %v3880
    %3972 = vmatprep.subr.mxu0 0.0
    %3973 = vmatpush1.msra.mxu0 %v3881
    %3974 = vmatprep.subr.mxu0 0.0
    %3975 = vmatpush1.msra.mxu0 %v3882
    %3976 = vmatprep.subr.mxu0 0.0
    %3977 = vmatpush1.msra.mxu0 %v3883
    %3978 = vmatprep.subr.mxu0 0.0
    %3979 = vmatpush1.msra.mxu0 %v3884
    %3980 = vmatprep.subr.mxu0 0.0
    %3981 = vmatpush1.msra.mxu0 %v3885
    %3982 = vmatprep.subr.mxu0 0.0
    %3983 = vmatpush1.msra.mxu0 %v3886
    %3984 = vmatprep.subr.mxu0 0.0
    %3985 = vmatpush1.msra.mxu0 %v3887
    %3986 = vmatprep.subr.mxu0 0.0
    %3987 = vmatpush1.msra.mxu0 %v3888
    %3988 = vmatprep.subr.mxu0 0.0
    %3989 = vmatpush1.msra.mxu0 %v3889
    %3990 = vmatprep.subr.mxu0 0.0
    %3991 = vmatpush1.msra.mxu0 %v3890
    %3992 = vmatprep.subr.mxu0 0.0
    %3993 = vmatpush1.msra.mxu0 %v3891
    %3994 = vmatprep.subr.mxu0 0.0
    %3995 = vmatpush1.msra.mxu0 %v3892
    %3996 = vmatprep.mubr.f32.mxu0 %v3830
    %3997 = vmatmul.mubr.f32.gmra.mrb[0].mxu0 %v3829
    %v3998 = vpop.f32.mrb[0].mxu0
    %v3999 = vadd.f32 %v3930, %v3998
    %v4000 = vpop.f32.mrb[0].mxu0
    %4001 = vmatprep.mubr.f32.mxu0 %v3834
    %4002 = vmatmul.mubr.f32.gmra.mrb[0].mxu0 %v3833
    %v4003 = vpop.f32.mrb[0].mxu0
    %v4004 = vadd.f32 %v3930, %v4003
    %v4005 = vpop.f32.mrb[0].mxu0
    %4006 = vmatprep.mubr.f32.mxu0 %v3838
    %4007 = vmatmul.mubr.f32.gmra.mrb[0].mxu0 %v3837
    %v4008 = vpop.f32.mrb[0].mxu0
    %v4009 = vadd.f32 %v3930, %v4008
    %v4010 = vpop.f32.mrb[0].mxu0
    %4011 = vmatprep.mubr.f32.mxu0 %v3842
    %4012 = vmatmul.mubr.f32.gmra.mrb[0].mxu0 %v3841
    %v4013 = vpop.f32.mrb[0].mxu0
    %v4014 = vadd.f32 %v3930, %v4013
    %v4015 = vpop.f32.mrb[0].mxu0
    %4016 = vmatprep.mubr.f32.mxu0 %v3846
    %4017 = vmatmul.mubr.f32.gmra.mrb[0].mxu0 %v3845
    %v4018 = vpop.f32.mrb[0].mxu0
    %v4019 = vadd.f32 %v3930, %v4018
    %v4020 = vpop.f32.mrb[0].mxu0
    %4021 = vmatprep.mubr.f32.mxu0 %v3850
    %4022 = vmatmul.mubr.f32.gmra.mrb[0].mxu0 %v3849
    %v4023 = vpop.f32.mrb[0].mxu0
    %v4024 = vadd.f32 %v3930, %v4023
    %v4025 = vpop.f32.mrb[0].mxu0
    %4026 = vmatprep.mubr.f32.mxu0 %v3854
    %4027 = vmatmul.mubr.f32.gmra.mrb[0].mxu0 %v3853
    %v4028 = vpop.f32.mrb[0].mxu0
    %v4029 = vadd.f32 %v3930, %v4028
    %v4030 = vpop.f32.mrb[0].mxu0
    %4031 = vmatprep.mubr.f32.mxu0 %v3858
    %4032 = vmatmul.mubr.f32.gmra.mrb[0].mxu0 %v3857
    %v4033 = vpop.f32.mrb[0].mxu0
    %v4034 = vadd.f32 %v3930, %v4033
    %v4035 = vpop.f32.mrb[0].mxu0
    %4036 = vdwg.mxu0
    %4037 = vmatprep.subr.mxu0 0.0
    %4038 = vmatpush1.msra.mxu0 %v3893
    %4039 = vmatprep.subr.mxu0 0.0
    %4040 = vmatpush1.msra.mxu0 %v3894
    %4041 = vmatprep.subr.mxu0 0.0
    %4042 = vmatpush1.msra.mxu0 %v3895
    %4043 = vmatprep.subr.mxu0 0.0
    %4044 = vmatpush1.msra.mxu0 %v3896
    %4045 = vmatprep.subr.mxu0 0.0
    %4046 = vmatpush1.msra.mxu0 %v3897
    %4047 = vmatprep.subr.mxu0 0.0
    %4048 = vmatpush1.msra.mxu0 %v3898
    %4049 = vmatprep.subr.mxu0 0.0
    %4050 = vmatpush1.msra.mxu0 %v3899
    %4051 = vmatprep.subr.mxu0 0.0
    %4052 = vmatpush1.msra.mxu0 %v3900
    %4053 = vmatprep.subr.mxu0 0.0
    %4054 = vmatpush1.msra.mxu0 %v3901
    %4055 = vmatprep.subr.mxu0 0.0
    %4056 = vmatpush1.msra.mxu0 %v3902
    %4057 = vmatprep.subr.mxu0 0.0
    %4058 = vmatpush1.msra.mxu0 %v3903
    %4059 = vmatprep.subr.mxu0 0.0
    %4060 = vmatpush1.msra.mxu0 %v3904
    %4061 = vmatprep.subr.mxu0 0.0
    %4062 = vmatpush1.msra.mxu0 %v3905
    %4063 = vmatprep.subr.mxu0 0.0
    %4064 = vmatpush1.msra.mxu0 %v3906
    %4065 = vmatprep.subr.mxu0 0.0
    %4066 = vmatpush1.msra.mxu0 %v3907
    %4067 = vmatprep.subr.mxu0 0.0
    %4068 = vmatpush1.msra.mxu0 %v3908
    %4069 = vmatprep.subr.mxu0 0.0
    %4070 = vmatpush1.msra.mxu0 %v3909
    %4071 = vmatprep.subr.mxu0 0.0
    %4072 = vmatpush1.msra.mxu0 %v3910
    %4073 = vmatprep.subr.mxu0 0.0
    %4074 = vmatpush1.msra.mxu0 %v3911
    %4075 = vmatprep.subr.mxu0 0.0
    %4076 = vmatpush1.msra.mxu0 %v3912
    %4077 = vmatprep.subr.mxu0 0.0
    %4078 = vmatpush1.msra.mxu0 %v3913
    %4079 = vmatprep.subr.mxu0 0.0
    %4080 = vmatpush1.msra.mxu0 %v3914
    %4081 = vmatprep.subr.mxu0 0.0
    %4082 = vmatpush1.msra.mxu0 %v3915
    %4083 = vmatprep.subr.mxu0 0.0
    %4084 = vmatpush1.msra.mxu0 %v3916
    %4085 = vmatprep.subr.mxu0 0.0
    %4086 = vmatpush1.msra.mxu0 %v3917
    %4087 = vmatprep.subr.mxu0 0.0
    %4088 = vmatpush1.msra.mxu0 %v3918
    %4089 = vmatprep.subr.mxu0 0.0
    %4090 = vmatpush1.msra.mxu0 %v3919
    %4091 = vmatprep.subr.mxu0 0.0
    %4092 = vmatpush1.msra.mxu0 %v3920
    %4093 = vmatprep.subr.mxu0 0.0
    %4094 = vmatpush1.msra.mxu0 %v3921
    %4095 = vmatprep.subr.mxu0 0.0
    %4096 = vmatpush1.msra.mxu0 %v3922
    %4097 = vmatprep.subr.mxu0 0.0
    %4098 = vmatpush1.msra.mxu0 %v3923
    %4099 = vmatprep.subr.mxu0 0.0
    %4100 = vmatpush1.msra.mxu0 %v3924
    %4101 = vmatprep.mubr.f32.mxu0 %v3832
    %4102 = vmatmul.mubr.f32.gmra.mrb[0].mxu0 %v3831
    %v4103 = vpop.f32.mrb[0].mxu0
    %v4104 = vadd.f32 %v3999, %v4103
    %v4105 = vpop.f32.mrb[0].mxu0
    %4106 = vmatprep.mubr.f32.mxu0 %v3836
    %4107 = vmatmul.mubr.f32.gmra.mrb[0].mxu0 %v3835
    %v4108 = vpop.f32.mrb[0].mxu0
    %v4109 = vadd.f32 %v4004, %v4108
    %v4110 = vpop.f32.mrb[0].mxu0
    %4111 = vmatprep.mubr.f32.mxu0 %v3840
    %4112 = vmatmul.mubr.f32.gmra.mrb[0].mxu0 %v3839
    %v4113 = vpop.f32.mrb[0].mxu0
    %v4114 = vadd.f32 %v4009, %v4113
    %v4115 = vpop.f32.mrb[0].mxu0
    %4116 = vmatprep.mubr.f32.mxu0 %v3844
    %4117 = vmatmul.mubr.f32.gmra.mrb[0].mxu0 %v3843
    %v4118 = vpop.f32.mrb[0].mxu0
    %v4119 = vadd.f32 %v4014, %v4118
    %v4120 = vpop.f32.mrb[0].mxu0
    %4121 = vmatprep.mubr.f32.mxu0 %v3848
    %4122 = vmatmul.mubr.f32.gmra.mrb[0].mxu0 %v3847
    %v4123 = vpop.f32.mrb[0].mxu0
    %v4124 = vadd.f32 %v4019, %v4123
    %v4125 = vpop.f32.mrb[0].mxu0
    %4126 = vmatprep.mubr.f32.mxu0 %v3852
    %4127 = vmatmul.mubr.f32.gmra.mrb[0].mxu0 %v3851
    %v4128 = vpop.f32.mrb[0].mxu0
    %v4129 = vadd.f32 %v4024, %v4128
    %v4130 = vpop.f32.mrb[0].mxu0
    %4131 = vmatprep.mubr.f32.mxu0 %v3856
    %4132 = vmatmul.mubr.f32.gmra.mrb[0].mxu0 %v3855
    %v4133 = vpop.f32.mrb[0].mxu0
    %v4134 = vadd.f32 %v4029, %v4133
    %v4135 = vpop.f32.mrb[0].mxu0
    %4136 = vmatprep.mubr.f32.mxu0 %v3860
    %4137 = vmatmul.mubr.f32.gmra.mrb[0].mxu0 %v3859
    %v4138 = vpop.f32.mrb[0].mxu0
    %v4139 = vadd.f32 %v4034, %v4138
    %v4140 = vpop.f32.mrb[0].mxu0
    %4141 = vdwg.mxu0
    %4142 = vst [vmem:[#allocation21] sm:$0xff] %v4104
    %4143 = vst [vmem:[#allocation21 + $0x8] sm:$0xff] %v4109
    %4144 = vst [vmem:[#allocation21 + $0x10] sm:$0xff] %v4114
    %4145 = vst [vmem:[#allocation21 + $0x18] sm:$0xff] %v4119
    %4146 = vst [vmem:[#allocation21 + $0x20] sm:$0xff] %v4124
    %4147 = vst [vmem:[#allocation21 + $0x28] sm:$0xff] %v4129
    %4148 = vst [vmem:[#allocation21 + $0x30] sm:$0xff] %v4134
    %4149 = vst [vmem:[#allocation21 + $0x38] sm:$0xff] %v4139
    %v4150 = vld [vmem:[#allocation19] sm:$0xff]
    %v4151 = vld [vmem:[#allocation19 + $0x8] sm:$0xff]
    %v4152 = vld [vmem:[#allocation19 + $0x10] sm:$0xff]
    %v4153 = vld [vmem:[#allocation19 + $0x18] sm:$0xff]
    %v4154 = vld [vmem:[#allocation19 + $0x20] sm:$0xff]
    %v4155 = vld [vmem:[#allocation19 + $0x28] sm:$0xff]
    %v4156 = vld [vmem:[#allocation19 + $0x30] sm:$0xff]
    %v4157 = vld [vmem:[#allocation19 + $0x38] sm:$0xff]
    %v4158 = vld [vmem:[#allocation19 + $0x40] sm:$0xff]
    %v4159 = vld [vmem:[#allocation19 + $0x48] sm:$0xff]
    %v4160 = vld [vmem:[#allocation19 + $0x50] sm:$0xff]
    %v4161 = vld [vmem:[#allocation19 + $0x58] sm:$0xff]
    %v4162 = vld [vmem:[#allocation19 + $0x60] sm:$0xff]
    %v4163 = vld [vmem:[#allocation19 + $0x68] sm:$0xff]
    %v4164 = vld [vmem:[#allocation19 + $0x70] sm:$0xff]
    %v4165 = vld [vmem:[#allocation19 + $0x78] sm:$0xff]
    %v4166 = vld [vmem:[#allocation19 + $0x80] sm:$0xff]
    %v4167 = vld [vmem:[#allocation19 + $0x88] sm:$0xff]
    %v4168 = vld [vmem:[#allocation19 + $0x90] sm:$0xff]
    %v4169 = vld [vmem:[#allocation19 + $0x98] sm:$0xff]
    %v4170 = vld [vmem:[#allocation19 + $0xa0] sm:$0xff]
    %v4171 = vld [vmem:[#allocation19 + $0xa8] sm:$0xff]
    %v4172 = vld [vmem:[#allocation19 + $0xb0] sm:$0xff]
    %v4173 = vld [vmem:[#allocation19 + $0xb8] sm:$0xff]
    %v4174 = vld [vmem:[#allocation19 + $0xc0] sm:$0xff]
    %v4175 = vld [vmem:[#allocation19 + $0xc8] sm:$0xff]
    %v4176 = vld [vmem:[#allocation19 + $0xd0] sm:$0xff]
    %v4177 = vld [vmem:[#allocation19 + $0xd8] sm:$0xff]
    %v4178 = vld [vmem:[#allocation19 + $0xe0] sm:$0xff]
    %v4179 = vld [vmem:[#allocation19 + $0xe8] sm:$0xff]
    %v4180 = vld [vmem:[#allocation19 + $0xf0] sm:$0xff]
    %v4181 = vld [vmem:[#allocation19 + $0xf8] sm:$0xff]
    %v4182 = vld [vmem:[#allocation19 + $0x100] sm:$0xff]
    %v4183 = vld [vmem:[#allocation19 + $0x108] sm:$0xff]
    %v4184 = vld [vmem:[#allocation19 + $0x110] sm:$0xff]
    %v4185 = vld [vmem:[#allocation19 + $0x118] sm:$0xff]
    %v4186 = vld [vmem:[#allocation19 + $0x120] sm:$0xff]
    %v4187 = vld [vmem:[#allocation19 + $0x128] sm:$0xff]
    %v4188 = vld [vmem:[#allocation19 + $0x130] sm:$0xff]
    %v4189 = vld [vmem:[#allocation19 + $0x138] sm:$0xff]
    %v4190 = vld [vmem:[#allocation19 + $0x140] sm:$0xff]
    %v4191 = vld [vmem:[#allocation19 + $0x148] sm:$0xff]
    %v4192 = vld [vmem:[#allocation19 + $0x150] sm:$0xff]
    %v4193 = vld [vmem:[#allocation19 + $0x158] sm:$0xff]
    %v4194 = vld [vmem:[#allocation19 + $0x160] sm:$0xff]
    %v4195 = vld [vmem:[#allocation19 + $0x168] sm:$0xff]
    %v4196 = vld [vmem:[#allocation19 + $0x170] sm:$0xff]
    %v4197 = vld [vmem:[#allocation19 + $0x178] sm:$0xff]
    %v4198 = vld [vmem:[#allocation19 + $0x180] sm:$0xff]
    %v4199 = vld [vmem:[#allocation19 + $0x188] sm:$0xff]
    %v4200 = vld [vmem:[#allocation19 + $0x190] sm:$0xff]
    %v4201 = vld [vmem:[#allocation19 + $0x198] sm:$0xff]
    %v4202 = vld [vmem:[#allocation19 + $0x1a0] sm:$0xff]
    %v4203 = vld [vmem:[#allocation19 + $0x1a8] sm:$0xff]
    %v4204 = vld [vmem:[#allocation19 + $0x1b0] sm:$0xff]
    %v4205 = vld [vmem:[#allocation19 + $0x1b8] sm:$0xff]
    %v4206 = vld [vmem:[#allocation19 + $0x1c0] sm:$0xff]
    %v4207 = vld [vmem:[#allocation19 + $0x1c8] sm:$0xff]
    %v4208 = vld [vmem:[#allocation19 + $0x1d0] sm:$0xff]
    %v4209 = vld [vmem:[#allocation19 + $0x1d8] sm:$0xff]
    %v4210 = vld [vmem:[#allocation19 + $0x1e0] sm:$0xff]
    %v4211 = vld [vmem:[#allocation19 + $0x1e8] sm:$0xff]
    %v4212 = vld [vmem:[#allocation19 + $0x1f0] sm:$0xff]
    %v4213 = vld [vmem:[#allocation19 + $0x1f8] sm:$0xff]
    %v4214 = vld [vmem:[#allocation19 + $0x200] sm:$0xff]
    %v4215 = vld [vmem:[#allocation19 + $0x208] sm:$0xff]
    %v4216 = vld [vmem:[#allocation19 + $0x210] sm:$0xff]
    %v4217 = vld [vmem:[#allocation19 + $0x218] sm:$0xff]
    %v4218 = vld [vmem:[#allocation19 + $0x220] sm:$0xff]
    %v4219 = vld [vmem:[#allocation19 + $0x228] sm:$0xff]
    %v4220 = vld [vmem:[#allocation19 + $0x230] sm:$0xff]
    %v4221 = vld [vmem:[#allocation19 + $0x238] sm:$0xff]
    %v4222 = vld [vmem:[#allocation19 + $0x240] sm:$0xff]
    %v4223 = vld [vmem:[#allocation19 + $0x248] sm:$0xff]
    %v4224 = vld [vmem:[#allocation19 + $0x250] sm:$0xff]
    %v4225 = vld [vmem:[#allocation19 + $0x258] sm:$0xff]
    %v4226 = vld [vmem:[#allocation19 + $0x260] sm:$0xff]
    %v4227 = vld [vmem:[#allocation19 + $0x268] sm:$0xff]
    %v4228 = vld [vmem:[#allocation19 + $0x270] sm:$0xff]
    %v4229 = vld [vmem:[#allocation19 + $0x278] sm:$0xff]
    %v4230 = vld [vmem:[#allocation19 + $0x280] sm:$0xff]
    %v4231 = vld [vmem:[#allocation19 + $0x288] sm:$0xff]
    %v4232 = vld [vmem:[#allocation19 + $0x290] sm:$0xff]
    %v4233 = vld [vmem:[#allocation19 + $0x298] sm:$0xff]
    %v4234 = vld [vmem:[#allocation19 + $0x2a0] sm:$0xff]
    %v4235 = vld [vmem:[#allocation19 + $0x2a8] sm:$0xff]
    %v4236 = vld [vmem:[#allocation19 + $0x2b0] sm:$0xff]
    %v4237 = vld [vmem:[#allocation19 + $0x2b8] sm:$0xff]
    %v4238 = vld [vmem:[#allocation19 + $0x2c0] sm:$0xff]
    %v4239 = vld [vmem:[#allocation19 + $0x2c8] sm:$0xff]
    %v4240 = vld [vmem:[#allocation19 + $0x2d0] sm:$0xff]
    %v4241 = vld [vmem:[#allocation19 + $0x2d8] sm:$0xff]
    %v4242 = vld [vmem:[#allocation19 + $0x2e0] sm:$0xff]
    %v4243 = vld [vmem:[#allocation19 + $0x2e8] sm:$0xff]
    %v4244 = vld [vmem:[#allocation19 + $0x2f0] sm:$0xff]
    %v4245 = vld [vmem:[#allocation19 + $0x2f8] sm:$0xff]
    %v4246 = vld [vmem:[#allocation19 + $0x300] sm:$0xff]
    %v4247 = vld [vmem:[#allocation19 + $0x308] sm:$0xff]
    %v4248 = vld [vmem:[#allocation19 + $0x310] sm:$0xff]
    %v4249 = vld [vmem:[#allocation19 + $0x318] sm:$0xff]
    %v4250 = vld [vmem:[#allocation19 + $0x320] sm:$0xff]
    %v4251 = vld [vmem:[#allocation19 + $0x328] sm:$0xff]
    %v4252 = vld [vmem:[#allocation19 + $0x330] sm:$0xff]
    %v4253 = vld [vmem:[#allocation19 + $0x338] sm:$0xff]
    %v4254 = vld [vmem:[#allocation19 + $0x340] sm:$0xff]
    %v4255 = vld [vmem:[#allocation19 + $0x348] sm:$0xff]
    %v4256 = vld [vmem:[#allocation19 + $0x350] sm:$0xff]
    %v4257 = vld [vmem:[#allocation19 + $0x358] sm:$0xff]
    %v4258 = vld [vmem:[#allocation19 + $0x360] sm:$0xff]
    %v4259 = vld [vmem:[#allocation19 + $0x368] sm:$0xff]
    %v4260 = vld [vmem:[#allocation19 + $0x370] sm:$0xff]
    %v4261 = vld [vmem:[#allocation19 + $0x378] sm:$0xff]
    %v4262 = vld [vmem:[#allocation19 + $0x380] sm:$0xff]
    %v4263 = vld [vmem:[#allocation19 + $0x388] sm:$0xff]
    %v4264 = vld [vmem:[#allocation19 + $0x390] sm:$0xff]
    %v4265 = vld [vmem:[#allocation19 + $0x398] sm:$0xff]
    %v4266 = vld [vmem:[#allocation19 + $0x3a0] sm:$0xff]
    %v4267 = vld [vmem:[#allocation19 + $0x3a8] sm:$0xff]
    %v4268 = vld [vmem:[#allocation19 + $0x3b0] sm:$0xff]
    %v4269 = vld [vmem:[#allocation19 + $0x3b8] sm:$0xff]
    %v4270 = vld [vmem:[#allocation19 + $0x3c0] sm:$0xff]
    %v4271 = vld [vmem:[#allocation19 + $0x3c8] sm:$0xff]
    %v4272 = vld [vmem:[#allocation19 + $0x3d0] sm:$0xff]
    %v4273 = vld [vmem:[#allocation19 + $0x3d8] sm:$0xff]
    %v4274 = vld [vmem:[#allocation19 + $0x3e0] sm:$0xff]
    %v4275 = vld [vmem:[#allocation19 + $0x3e8] sm:$0xff]
    %v4276 = vld [vmem:[#allocation19 + $0x3f0] sm:$0xff]
    %v4277 = vld [vmem:[#allocation19 + $0x3f8] sm:$0xff]
    %v4278 = vld [vmem:[%s13] sm:$0x3]
    %v4280 = vlaneseq
    %v4281 = vshrl.u32 %v4280, 7
    %v4282 = vsub.s32 0, %v4281
    %v4283 = vrot.slane %v4278, %v4282
    %v4284 = vlaneseq
    %v4285 = vshrl.u32 %v4284, 7
    %v4286 = vsub.s32 1, %v4285
    %v4287 = vrot.slane %v4278, %v4286
    %4290 = vmatprep.subr.mxu0 %v4151
    %4291 = vmatpush1.msra.mxu0 %v4150
    %4292 = vmatprep.subr.mxu0 %v4153
    %4293 = vmatpush1.msra.mxu0 %v4152
    %4294 = vmatprep.subr.mxu0 %v4155
    %4295 = vmatpush1.msra.mxu0 %v4154
    %4296 = vmatprep.subr.mxu0 %v4157
    %4297 = vmatpush1.msra.mxu0 %v4156
    %4298 = vmatprep.subr.mxu0 %v4159
    %4299 = vmatpush1.msra.mxu0 %v4158
    %4300 = vmatprep.subr.mxu0 %v4161
    %4301 = vmatpush1.msra.mxu0 %v4160
    %4302 = vmatprep.subr.mxu0 %v4163
    %4303 = vmatpush1.msra.mxu0 %v4162
    %4304 = vmatprep.subr.mxu0 %v4165
    %4305 = vmatpush1.msra.mxu0 %v4164
    %4306 = vmatprep.subr.mxu0 %v4167
    %4307 = vmatpush1.msra.mxu0 %v4166
    %4308 = vmatprep.subr.mxu0 %v4169
    %4309 = vmatpush1.msra.mxu0 %v4168
    %4310 = vmatprep.subr.mxu0 %v4171
    %4311 = vmatpush1.msra.mxu0 %v4170
    %4312 = vmatprep.subr.mxu0 %v4173
    %4313 = vmatpush1.msra.mxu0 %v4172
    %4314 = vmatprep.subr.mxu0 %v4175
    %4315 = vmatpush1.msra.mxu0 %v4174
    %4316 = vmatprep.subr.mxu0 %v4177
    %4317 = vmatpush1.msra.mxu0 %v4176
    %4318 = vmatprep.subr.mxu0 %v4179
    %4319 = vmatpush1.msra.mxu0 %v4178
    %4320 = vmatprep.subr.mxu0 %v4181
    %4321 = vmatpush1.msra.mxu0 %v4180
    %4322 = vmatprep.subr.mxu0 %v4183
    %4323 = vmatpush1.msra.mxu0 %v4182
    %4324 = vmatprep.subr.mxu0 %v4185
    %4325 = vmatpush1.msra.mxu0 %v4184
    %4326 = vmatprep.subr.mxu0 %v4187
    %4327 = vmatpush1.msra.mxu0 %v4186
    %4328 = vmatprep.subr.mxu0 %v4189
    %4329 = vmatpush1.msra.mxu0 %v4188
    %4330 = vmatprep.subr.mxu0 %v4191
    %4331 = vmatpush1.msra.mxu0 %v4190
    %4332 = vmatprep.subr.mxu0 %v4193
    %4333 = vmatpush1.msra.mxu0 %v4192
    %4334 = vmatprep.subr.mxu0 %v4195
    %4335 = vmatpush1.msra.mxu0 %v4194
    %4336 = vmatprep.subr.mxu0 %v4197
    %4337 = vmatpush1.msra.mxu0 %v4196
    %4338 = vmatprep.subr.mxu0 %v4199
    %4339 = vmatpush1.msra.mxu0 %v4198
    %4340 = vmatprep.subr.mxu0 %v4201
    %4341 = vmatpush1.msra.mxu0 %v4200
    %4342 = vmatprep.subr.mxu0 %v4203
    %4343 = vmatpush1.msra.mxu0 %v4202
    %4344 = vmatprep.subr.mxu0 %v4205
    %4345 = vmatpush1.msra.mxu0 %v4204
    %4346 = vmatprep.subr.mxu0 %v4207
    %4347 = vmatpush1.msra.mxu0 %v4206
    %4348 = vmatprep.subr.mxu0 %v4209
    %4349 = vmatpush1.msra.mxu0 %v4208
    %4350 = vmatprep.subr.mxu0 %v4211
    %4351 = vmatpush1.msra.mxu0 %v4210
    %4352 = vmatprep.subr.mxu0 %v4213
    %4353 = vmatpush1.msra.mxu0 %v4212
    %4354 = vmatprep.mubr.f32.mxu0 %v3821
    %4355 = vmatmul.mubr.f32.gmra.mrb[0].mxu0 %v3820
    %v4356 = vpop.f32.mrb[0].mxu0
    %v4357 = vadd.f32 %v4283, %v4356
    %v4358 = vpop.f32.mrb[0].mxu0
    %v4359 = vadd.f32 %v4287, %v4358
    %4360 = vdwg.mxu0
    %4361 = vmatprep.subr.mxu0 %v4215
    %4362 = vmatpush1.msra.mxu0 %v4214
    %4363 = vmatprep.subr.mxu0 %v4217
    %4364 = vmatpush1.msra.mxu0 %v4216
    %4365 = vmatprep.subr.mxu0 %v4219
    %4366 = vmatpush1.msra.mxu0 %v4218
    %4367 = vmatprep.subr.mxu0 %v4221
    %4368 = vmatpush1.msra.mxu0 %v4220
    %4369 = vmatprep.subr.mxu0 %v4223
    %4370 = vmatpush1.msra.mxu0 %v4222
    %4371 = vmatprep.subr.mxu0 %v4225
    %4372 = vmatpush1.msra.mxu0 %v4224
    %4373 = vmatprep.subr.mxu0 %v4227
    %4374 = vmatpush1.msra.mxu0 %v4226
    %4375 = vmatprep.subr.mxu0 %v4229
    %4376 = vmatpush1.msra.mxu0 %v4228
    %4377 = vmatprep.subr.mxu0 %v4231
    %4378 = vmatpush1.msra.mxu0 %v4230
    %4379 = vmatprep.subr.mxu0 %v4233
    %4380 = vmatpush1.msra.mxu0 %v4232
    %4381 = vmatprep.subr.mxu0 %v4235
    %4382 = vmatpush1.msra.mxu0 %v4234
    %4383 = vmatprep.subr.mxu0 %v4237
    %4384 = vmatpush1.msra.mxu0 %v4236
    %4385 = vmatprep.subr.mxu0 %v4239
    %4386 = vmatpush1.msra.mxu0 %v4238
    %4387 = vmatprep.subr.mxu0 %v4241
    %4388 = vmatpush1.msra.mxu0 %v4240
    %4389 = vmatprep.subr.mxu0 %v4243
    %4390 = vmatpush1.msra.mxu0 %v4242
    %4391 = vmatprep.subr.mxu0 %v4245
    %4392 = vmatpush1.msra.mxu0 %v4244
    %4393 = vmatprep.subr.mxu0 %v4247
    %4394 = vmatpush1.msra.mxu0 %v4246
    %4395 = vmatprep.subr.mxu0 %v4249
    %4396 = vmatpush1.msra.mxu0 %v4248
    %4397 = vmatprep.subr.mxu0 %v4251
    %4398 = vmatpush1.msra.mxu0 %v4250
    %4399 = vmatprep.subr.mxu0 %v4253
    %4400 = vmatpush1.msra.mxu0 %v4252
    %4401 = vmatprep.subr.mxu0 %v4255
    %4402 = vmatpush1.msra.mxu0 %v4254
    %4403 = vmatprep.subr.mxu0 %v4257
    %4404 = vmatpush1.msra.mxu0 %v4256
    %4405 = vmatprep.subr.mxu0 %v4259
    %4406 = vmatpush1.msra.mxu0 %v4258
    %4407 = vmatprep.subr.mxu0 %v4261
    %4408 = vmatpush1.msra.mxu0 %v4260
    %4409 = vmatprep.subr.mxu0 %v4263
    %4410 = vmatpush1.msra.mxu0 %v4262
    %4411 = vmatprep.subr.mxu0 %v4265
    %4412 = vmatpush1.msra.mxu0 %v4264
    %4413 = vmatprep.subr.mxu0 %v4267
    %4414 = vmatpush1.msra.mxu0 %v4266
    %4415 = vmatprep.subr.mxu0 %v4269
    %4416 = vmatpush1.msra.mxu0 %v4268
    %4417 = vmatprep.subr.mxu0 %v4271
    %4418 = vmatpush1.msra.mxu0 %v4270
    %4419 = vmatprep.subr.mxu0 %v4273
    %4420 = vmatpush1.msra.mxu0 %v4272
    %4421 = vmatprep.subr.mxu0 %v4275
    %4422 = vmatpush1.msra.mxu0 %v4274
    %4423 = vmatprep.subr.mxu0 %v4277
    %4424 = vmatpush1.msra.mxu0 %v4276
    %4425 = vmatprep.mubr.f32.mxu0 %v3823
    %4426 = vmatmul.mubr.f32.gmra.mrb[0].mxu0 %v3822
    %v4427 = vpop.f32.mrb[0].mxu0
    %v4428 = vadd.f32 %v4357, %v4427
    %v4429 = vpop.f32.mrb[0].mxu0
    %v4430 = vadd.f32 %v4359, %v4429
    %4431 = vdwg.mxu0
    %v4432 = vmax.f32 %v4428, 0.0
    %v4433 = vmax.f32 %v4430, 0.0
    %4434 = vst [vmem:[#allocation22] sm:$0xff] %v4432
    %4435 = vst [vmem:[#allocation22 + $0x8] sm:$0xff] %v4433
    // Predicated region
    $region102: #{tpu_custom_call.1} parent=1 // pred_check
      _
    $region103: #{tpu_custom_call.1} parent=1 // pred_check_branch
      %4437 = sbr.rel (0) target = $region105
    $region104: #{tpu_custom_call.1} parent=1 // pred_region
      %s4439 = ssub.s32 1024, 1024
      %4440 = vsyncadd [#allocation9], %s4439
      %s4441 = sshll.u32 [#allocation21], 4
      %s4442 = int_to_ptr.vmem [resolvable:$true] %s4441
      %4447 = dma.vmem_to_hbm [thread:$0]  %s4442, 1024, %s17, [#allocation9], 128, 128, 8
    $region105: #{tpu_custom_call.1} parent=1 // pred_fallthru
      _
    // Predicated region
    $region106: #{tpu_custom_call.1} parent=1 // pred_check
      _
    $region107: #{tpu_custom_call.1} parent=1 // pred_check_branch
      %4449 = sbr.rel (0) target = $region109
    $region108: #{tpu_custom_call.1} parent=1 // pred_region
      %s4451 = ssub.s32 256, 256
      %4452 = vsyncadd [#allocation23], %s4451
      %s4454 = sshll.u32 [#allocation22], 4
      %s4455 = int_to_ptr.vmem [resolvable:$true] %s4454
      %4457 = dma.vmem_to_hbm [thread:$0]  %s4455, 256, %s18, [#allocation23]
    $region109: #{tpu_custom_call.1} parent=1 // pred_fallthru
      _
    // Predicated region
    $region110: #{tpu_custom_call.1} parent=1 // pred_check
      _
    $region111: #{tpu_custom_call.1} parent=1 // pred_check_branch
      %4459 = sbr.rel (0) target = $region113
    $region112: #{tpu_custom_call.1} parent=1 // pred_region
      %4460 = dma.done [#allocation9], 1024
    $region113: #{tpu_custom_call.1} parent=1 // pred_fallthru
      _
    // Predicated region
    $region114: #{tpu_custom_call.1} parent=1 // pred_check
      _
    $region115: #{tpu_custom_call.1} parent=1 // pred_check_branch
      %4462 = sbr.rel (0) target = $region117
    $region116: #{tpu_custom_call.1} parent=1 // pred_region
      %4463 = dma.done [#allocation23], 256
    $region117: #{tpu_custom_call.1} parent=1 // pred_fallthru
      _
    %4464 = vsyncpa [#allocation8], 1
    %4465 = vsyncpa [#allocation11], 1
    %4466 = vsyncpa [#allocation14], 1
    %4467 = vsyncpa [#allocation17], 1
    %4468 = vsyncpa [#allocation20], 1
    %4469 = vsyncpa [#allocation9], 1
    %4470 = vsyncpa [#allocation23], 1

</llo_original>
